<compile_context>
chip_gen: v7x
topology: tpu7x:2x2x1
jax: 0.10.0
libtpu: 0.0.40
codegen_flags: <defaults>
</compile_context>

<pallas_src>
import functools
import math

import jax
import jax.numpy as jnp
from jax import lax
from jax.experimental import pallas as pl
from jax.experimental.pallas import tpu as pltpu


def _silu(x):
    # x * sigmoid(x); reciprocal routed to the EUP slot (approx vrcp).
    return x * pl.reciprocal(1.0 + jnp.exp(-x), approx=True)


def _softplus(x):
    return jnp.where(x > 20.0, x, jnp.log1p(jnp.exp(jnp.minimum(x, 20.0))))


def mamba_layer_kernel(*refs, eps, first, e_tile, sub):
    if first:
        (hs_ref, normw_ref, inx_ref, inz_ref, convw_ref, convb_ref,
         xproj_ref, dtw_ref, dtb_ref, aneg_ref, d_ref, outw_ref,
         hs_out_ref, res_out_ref,
         h_scr, xprev_scr, delta_scr, du_scr, b_scr, c_scr, y_scr) = refs
        res_in_ref = None
    else:
        (hs_ref, res_in_ref, normw_ref, inx_ref, inz_ref, convw_ref, convb_ref,
         xproj_ref, dtw_ref, dtb_ref, aneg_ref, d_ref, outw_ref,
         hs_out_ref, res_out_ref,
         h_scr, xprev_scr, delta_scr, du_scr, b_scr, c_scr, y_scr) = refs

    TL, Dm = hs_ref.shape           # chunk length, d_model
    K, E = convw_ref.shape          # conv taps, d_inner
    N = aneg_ref.shape[0]           # d_state
    R = dtw_ref.shape[0]            # dt_rank

    l = pl.program_id(1)            # sequence-chunk index ("arbitrary", innermost)

    @pl.when(l == 0)
    def _():
        h_scr[...] = jnp.zeros_like(h_scr)          # SSM state carry
        xprev_scr[...] = jnp.zeros_like(xprev_scr)  # conv tail carry

    # ---- fused residual add (fp32) + RMSNorm ----
    hs = hs_ref[...].astype(jnp.float32)
    residual = hs if first else hs + res_in_ref[...]
    res_out_ref[...] = residual

    var = jnp.mean(residual * residual, axis=-1, keepdims=True)
    xn = residual * lax.rsqrt(var + eps) * normw_ref[...]
    xn_b = xn.astype(jnp.bfloat16)

    # ---- in_proj (x / z, pre-transposed bf16 weights, full-E wide each) ----
    x = jnp.dot(xn_b, inx_ref[...], preferred_element_type=jnp.float32)   # (TL, E)
    z = jnp.dot(xn_b, inz_ref[...], preferred_element_type=jnp.float32)   # (TL, E)

    # ---- causal depthwise conv1d (K taps); (8,E) tail carry across chunks ----
    cw = convw_ref[...]                               # (K, E)
    xx = jnp.concatenate([xprev_scr[...], x], axis=0)  # (8 + TL, E)
    xprev_scr[...] = x[TL - 8:, :]                    # keep last rows for next chunk
    xc = x * cw[K - 1:K, :] + convb_ref[...]          # tap j = 0
    for j in range(1, K):                             # static, K = 4
        xc = xc + xx[8 - j:8 - j + TL, :] * cw[K - 1 - j:K - j, :]
    xconv = _silu(xc)                                 # (TL, E) f32
    xconv_b = xconv.astype(jnp.bfloat16)

    # ---- fused x_proj -> [dt | B | C] (one wide matmul, sliced after) ----
    xdbc = jnp.dot(xconv_b, xproj_ref[...], preferred_element_type=jnp.float32)
    dt = xdbc[:, :R]                                  # (TL, R)
    Bm = xdbc[:, R:R + N]                             # (TL, N)
    Cm = xdbc[:, R + N:R + 2 * N]                     # (TL, N)

    # ---- dt_proj + softplus ----
    delta = _softplus(
        jnp.dot(dt.astype(jnp.bfloat16), dtw_ref[...],
                preferred_element_type=jnp.float32) + dtb_ref[...])       # (TL, E)

    # Stage the scan inputs in VMEM scratch so the recurrence can read small,
    # aligned sub-blocks instead of holding whole-chunk values live.
    delta_scr[...] = delta
    du_scr[...] = delta * xconv
    b_scr[...] = Bm
    c_scr[...] = Cm

    # ---- selective scan: E tiled, time in 8-step sub-blocks, y streamed ----
    n_tiles = E // e_tile
    nsub = TL // sub
    for ti in range(n_tiles):                         # static loop over E tiles
        e0 = ti * e_tile
        a_tile = aneg_ref[:, e0:e0 + e_tile]          # (N, ET) = -exp(A_log)^T tile

        def body(tb, h, e0=e0, a_tile=a_tile):
            t0 = pl.multiple_of(tb * sub, sub)
            d_sub = delta_scr[pl.ds(t0, sub), e0:e0 + e_tile]   # (sub, ET)
            du_sub = du_scr[pl.ds(t0, sub), e0:e0 + e_tile]     # (sub, ET)
            bS = b_scr[pl.ds(t0, sub), :][:, :, None]           # (sub, N, 1)
            cS = c_scr[pl.ds(t0, sub), :][:, :, None]           # (sub, N, 1)
            ys = []
            for k in range(sub):                      # 8-step static unroll
                dA_k = jnp.exp(d_sub[k:k + 1, :] * a_tile)      # (N, ET)
                h = dA_k * h + bS[k] * du_sub[k:k + 1, :]       # (N, ET)
                ys.append(jnp.sum(cS[k] * h, axis=0, keepdims=True))  # (1, ET)
            y_scr[pl.ds(t0, sub), e0:e0 + e_tile] = jnp.concatenate(ys, axis=0)
            return h

        h_fin = lax.fori_loop(0, nsub, body, h_scr[:, e0:e0 + e_tile])
        h_scr[:, e0:e0 + e_tile] = h_fin              # carry state to next chunk

    # ---- D skip + SiLU(z) gate + out_proj ----
    y = (y_scr[...] + xconv * d_ref[...]) * _silu(z)
    out = jnp.dot(y.astype(jnp.bfloat16), outw_ref[...],
                  preferred_element_type=jnp.float32)  # (TL, Dm)
    hs_out_ref[...] = out


def mamba_block(hs, residual, p, eps=1e-5, chunk=64):
    B, L, Dm = hs.shape
    assert chunk % 8 == 0 and L % chunk == 0
    E = p["in_x_w"].shape[1]
    N = p["A_log"].shape[1]
    TL = chunk
    NL = L // TL
    if E % 256 == 0:
        ET = 256
    elif E % 128 == 0:
        ET = 128
    else:
        ET = E

    # parameter-only transform (A = -exp(A_log)), hoisted out of the kernel
    A_neg_t = (-jnp.exp(p["A_log"])).T                 # (N, E) f32

    first = residual is None
    act_spec = pl.BlockSpec((None, TL, Dm), lambda b, l: (b, l, 0))

    def wspec(arr):
        return pl.BlockSpec(arr.shape, lambda b, l: (0, 0))

    weights = [p["norm_w"], p["in_x_w"], p["in_z_w"], p["conv_w"], p["conv_b"],
               p["xproj_w"], p["dt_w"], p["dt_b"], A_neg_t, p["D"], p["out_w"]]
    weight_specs = [wspec(w) for w in weights]

    if first:
        inputs = [hs] + weights
        in_specs = [act_spec] + weight_specs
        aliases = {0: 0}                     # hs buffer reused for hs_out
    else:
        inputs = [hs, residual] + weights
        in_specs = [act_spec, act_spec] + weight_specs
        aliases = {0: 0, 1: 1}               # hs->hs_out, residual->res_out

    kernel = functools.partial(mamba_layer_kernel, eps=eps, first=first,
                               e_tile=ET, sub=8)

    grid_spec = pltpu.PrefetchScalarGridSpec(
        num_scalar_prefetch=0,
        grid=(B, NL),                        # sequence axis must stay innermost
        in_specs=in_specs,
        out_specs=[act_spec, act_spec],
        scratch_shapes=[
            pltpu.VMEM((N, E), jnp.float32),    # SSM state carry
            pltpu.VMEM((8, E), jnp.float32),    # conv tail carry (last rows)
            pltpu.VMEM((TL, E), jnp.float32),   # delta
            pltpu.VMEM((TL, E), jnp.float32),   # delta * xconv
            pltpu.VMEM((TL, N), jnp.float32),   # B
            pltpu.VMEM((TL, N), jnp.float32),   # C
            pltpu.VMEM((TL, E), jnp.float32),   # y accumulator
        ])
    hs_out, res_out = pl.pallas_call(
        kernel,
        grid_spec=grid_spec,
        out_shape=(jax.ShapeDtypeStruct((B, L, Dm), jnp.float32),
                   jax.ShapeDtypeStruct((B, L, Dm), jnp.float32)),
        input_output_aliases=aliases,
        compiler_params=pltpu.CompilerParams(
            dimension_semantics=("parallel", "arbitrary"),
            vmem_limit_bytes=64 * 1024 * 1024),
    )(*inputs)
    return hs_out, res_out


def mamba_model_forward(hidden_states, layer_params, eps=1e-5, chunk=64):
    # Pad the sequence to a multiple of the chunk (scan is causal, so padding at
    # the end never contaminates real positions), run all layers, slice back.
    B, L, Dm = hidden_states.shape
    Lp = ((L + chunk - 1) // chunk) * chunk
    hs = hidden_states
    if Lp != L:
        hs = jnp.pad(hs, ((0, 0), (0, Lp - L), (0, 0)))
    residual = None                          # layer 0 skips the zero round trip
    for p in layer_params:
        hs, residual = mamba_block(hs, residual, p, eps=eps, chunk=chunk)
    out = hs + residual                      # given MambaModel applies no norm_f
    return out[:, :L, :] if Lp != L else out


def init_params(key, n_layer, d_model, d_state=16, d_conv=4, expand=2):
    E = expand * d_model
    R = math.ceil(d_model / 16)              # dt_rank = "auto"
    scale = 0.02
    layers = []
    for _ in range(n_layer):
        key, k0, k1, k2, k3, k4 = jax.random.split(key, 6)
        in_w = jax.random.normal(k0, (2 * E, d_model), jnp.float32) * scale
        xproj_w = jax.random.normal(k2, (R + 2 * d_state, E), jnp.float32) * scale
        dt_w = jax.random.normal(k3, (E, R), jnp.float32) * scale
        out_w = (jax.random.normal(k4, (d_model, E), jnp.float32)
                 * scale / math.sqrt(2.0 * n_layer))
        layers.append(dict(
            norm_w=jnp.ones((1, d_model), jnp.float32),
            # Linear weights pre-transposed to (in, out), bf16 for the MXU
            in_x_w=in_w[:E].T.astype(jnp.bfloat16),
            in_z_w=in_w[E:].T.astype(jnp.bfloat16),
            conv_w=jax.random.normal(k1, (d_conv, E), jnp.float32) * scale,  # (K,E)
            conv_b=jnp.zeros((1, E), jnp.float32),
            xproj_w=xproj_w.T.astype(jnp.bfloat16),   # fused (E, R+2N) = [dt|B|C]
            dt_w=dt_w.T.astype(jnp.bfloat16),         # (R, E)
            dt_b=jnp.log(jnp.expm1(jnp.full((1, E), 0.01, jnp.float32))),
            A_log=jnp.log(jnp.broadcast_to(
                jnp.arange(1, d_state + 1, dtype=jnp.float32), (E, d_state))),
            D=jnp.ones((1, E), jnp.float32),
            out_w=out_w.T.astype(jnp.bfloat16),
        ))
    return layers


if __name__ == "__main__":
    B, L, d_model, n_layer = 2, 96, 32, 2
    key = jax.random.PRNGKey(0)
    kx, kp = jax.random.split(key)
    hidden_states = jax.random.normal(kx, (B, L, d_model), jnp.float32)
    params = init_params(kp, n_layer, d_model)

    fwd = jax.jit(functools.partial(mamba_model_forward, chunk=64))
    out = jax.block_until_ready(fwd(hidden_states, params))

    assert out.shape == (B, L, d_model) and out.dtype == jnp.float32
    assert bool(jnp.all(jnp.isfinite(out)))
    print("KERNEL_OK")
</pallas_src>

<mosaic_0001>
module attributes {stable_mosaic.version = 11 : i64} {
  func.func @mamba_layer_kernel(%arg0: i32, %arg1: i32, %arg2: memref<1x64x32xf32, #tpu.memory_space<vmem>>, %arg3: memref<1x32xf32, #tpu.memory_space<vmem>>, %arg4: memref<32x64xbf16, #tpu.memory_space<vmem>>, %arg5: memref<32x64xbf16, #tpu.memory_space<vmem>>, %arg6: memref<4x64xf32, #tpu.memory_space<vmem>>, %arg7: memref<1x64xf32, #tpu.memory_space<vmem>>, %arg8: memref<64x34xbf16, #tpu.memory_space<vmem>>, %arg9: memref<2x64xbf16, #tpu.memory_space<vmem>>, %arg10: memref<1x64xf32, #tpu.memory_space<vmem>>, %arg11: memref<16x64xf32, #tpu.memory_space<vmem>>, %arg12: memref<1x64xf32, #tpu.memory_space<vmem>>, %arg13: memref<64x32xbf16, #tpu.memory_space<vmem>>, %arg14: memref<1x64x32xf32, #tpu.memory_space<vmem>>, %arg15: memref<1x64x32xf32, #tpu.memory_space<vmem>>, %arg16: memref<16x64xf32, #tpu.memory_space<vmem>>, %arg17: memref<8x64xf32, #tpu.memory_space<vmem>>, %arg18: memref<64x64xf32, #tpu.memory_space<vmem>>, %arg19: memref<64x64xf32, #tpu.memory_space<vmem>>, %arg20: memref<64x16xf32, #tpu.memory_space<vmem>>, %arg21: memref<64x16xf32, #tpu.memory_space<vmem>>, %arg22: memref<64x64xf32, #tpu.memory_space<vmem>>) attributes {dimension_semantics = [#tpu.dimension_semantics<parallel>, #tpu.dimension_semantics<arbitrary>], iteration_bounds = array<i64: 2, 2>, scalar_prefetch = 0 : i64, scratch_operands = 7 : i64, tpu.core_type = #tpu.core_type<tc>, window_params = [{transform_indices = @transform_0, window_bounds = array<i64: 1, 64, 32>}, {pipeline_mode = #tpu.pipeline_mode<synchronous>, transform_indices = @transform_1, window_bounds = array<i64: 1, 32>}, {pipeline_mode = #tpu.pipeline_mode<synchronous>, transform_indices = @transform_2, window_bounds = array<i64: 32, 64>}, {pipeline_mode = #tpu.pipeline_mode<synchronous>, transform_indices = @transform_3, window_bounds = array<i64: 32, 64>}, {pipeline_mode = #tpu.pipeline_mode<synchronous>, transform_indices = @transform_4, window_bounds = array<i64: 4, 64>}, {pipeline_mode = #tpu.pipeline_mode<synchronous>, transform_indices = @transform_5, window_bounds = array<i64: 1, 64>}, {pipeline_mode = #tpu.pipeline_mode<synchronous>, transform_indices = @transform_6, window_bounds = array<i64: 64, 34>}, {pipeline_mode = #tpu.pipeline_mode<synchronous>, transform_indices = @transform_7, window_bounds = array<i64: 2, 64>}, {pipeline_mode = #tpu.pipeline_mode<synchronous>, transform_indices = @transform_8, window_bounds = array<i64: 1, 64>}, {pipeline_mode = #tpu.pipeline_mode<synchronous>, transform_indices = @transform_9, window_bounds = array<i64: 16, 64>}, {pipeline_mode = #tpu.pipeline_mode<synchronous>, transform_indices = @transform_10, window_bounds = array<i64: 1, 64>}, {pipeline_mode = #tpu.pipeline_mode<synchronous>, transform_indices = @transform_11, window_bounds = array<i64: 64, 32>}, {transform_indices = @transform_12, window_bounds = array<i64: 1, 64, 32>}, {transform_indices = @transform_13, window_bounds = array<i64: 1, 64, 32>}]} {
    %c0_i32 = arith.constant 0 : i32
    %0 = arith.cmpi eq, %arg1, %c0_i32 : i32
    %1 = arith.extui %0 : i1 to i32
    %c0_i32_0 = arith.constant 0 : i32
    %2 = arith.cmpi ne, %1, %c0_i32_0 : i32
    scf.if %2 {
      %cst_64 = arith.constant 0.000000e+00 : f32
      %107 = vector.broadcast %cst_64 : f32 to vector<16x64xf32>
      %c0_65 = arith.constant 0 : index
      %c0_66 = arith.constant 0 : index
      %108 = vector.load %arg16[%c0_65, %c0_66] : memref<16x64xf32, #tpu.memory_space<vmem>>, vector<16x64xf32>
      tpu.vector_store %arg16[%c0_65, %c0_66], %107 {strides = array<i32>} : memref<16x64xf32, #tpu.memory_space<vmem>>, vector<16x64xf32>,
      %cst_67 = arith.constant 0.000000e+00 : f32
      %109 = vector.broadcast %cst_67 : f32 to vector<8x64xf32>
      %c0_68 = arith.constant 0 : index
      %c0_69 = arith.constant 0 : index
      %110 = vector.load %arg17[%c0_68, %c0_69] : memref<8x64xf32, #tpu.memory_space<vmem>>, vector<8x64xf32>
      tpu.vector_store %arg17[%c0_68, %c0_69], %109 {strides = array<i32>} : memref<8x64xf32, #tpu.memory_space<vmem>>, vector<8x64xf32>,
    } else {
    }
    %c0 = arith.constant 0 : index
    %c0_1 = arith.constant 0 : index
    %c0_2 = arith.constant 0 : index
    %3 = vector.load %arg2[%c0, %c0_1, %c0_2] : memref<1x64x32xf32, #tpu.memory_space<vmem>>, vector<1x64x32xf32>
    %4 = vector.shape_cast %3 : vector<1x64x32xf32> to vector<64x32xf32>
    %c0_3 = arith.constant 0 : index
    %c0_4 = arith.constant 0 : index
    %c0_5 = arith.constant 0 : index
    %5 = vector.load %arg15[%c0_3, %c0_4, %c0_5] : memref<1x64x32xf32, #tpu.memory_space<vmem>>, vector<1x64x32xf32>
    %6 = vector.shape_cast %5 : vector<1x64x32xf32> to vector<64x32xf32>
    %7 = vector.shape_cast %4 : vector<64x32xf32> to vector<1x64x32xf32>
    tpu.vector_store %arg15[%c0_3, %c0_4, %c0_5], %7 {strides = array<i32>} : memref<1x64x32xf32, #tpu.memory_space<vmem>>, vector<1x64x32xf32>,
    %8 = arith.mulf %4, %4 : vector<64x32xf32>
    %cst = arith.constant dense<0.000000e+00> : vector<64xf32>
    %9 = vector.multi_reduction <add>, %8, %cst [1] : vector<64x32xf32> to vector<64xf32>
    %10 = vector.shape_cast %9 : vector<64xf32> to vector<64x1xf32>
    %cst_6 = arith.constant 3.200000e+01 : f32
    %11 = vector.broadcast %cst_6 : f32 to vector<64x1xf32>
    %12 = arith.divf %10, %11 : vector<64x1xf32>
    %cst_7 = arith.constant 9.99999974E-6 : f32
    %13 = vector.broadcast %cst_7 : f32 to vector<64x1xf32>
    %14 = arith.addf %12, %13 : vector<64x1xf32>
    %15 = math.rsqrt %14 : vector<64x1xf32>
    %16 = vector.broadcast %15 : vector<64x1xf32> to vector<64x32xf32>
    %17 = arith.mulf %4, %16 : vector<64x32xf32>
    %c0_8 = arith.constant 0 : index
    %c0_9 = arith.constant 0 : index
    %18 = vector.load %arg3[%c0_8, %c0_9] : memref<1x32xf32, #tpu.memory_space<vmem>>, vector<1x32xf32>
    %19 = vector.broadcast %18 : vector<1x32xf32> to vector<64x32xf32>
    %20 = arith.mulf %17, %19 : vector<64x32xf32>
    %21 = arith.truncf %20 : vector<64x32xf32> to vector<64x32xbf16>
    %c0_10 = arith.constant 0 : index
    %c0_11 = arith.constant 0 : index
    %22 = vector.load %arg4[%c0_10, %c0_11] : memref<32x64xbf16, #tpu.memory_space<vmem>>, vector<32x64xbf16>
    %cst_12 = arith.constant dense<0.000000e+00> : vector<64x64xf32>
    %23 = tpu.matmul %21, %22, %cst_12 {dimension_numbers = #tpu.dot_dimension_numbers<[1], [0], [0], [1], [0, 0, 1, 1], [], []>} : vector<64x32xbf16>, vector<32x64xbf16>, vector<64x64xf32> -> vector<64x64xf32>
    %c0_13 = arith.constant 0 : index
    %c0_14 = arith.constant 0 : index
    %24 = vector.load %arg5[%c0_13, %c0_14] : memref<32x64xbf16, #tpu.memory_space<vmem>>, vector<32x64xbf16>
    %cst_15 = arith.constant dense<0.000000e+00> : vector<64x64xf32>
    %25 = tpu.matmul %21, %24, %cst_15 {dimension_numbers = #tpu.dot_dimension_numbers<[1], [0], [0], [1], [0, 0, 1, 1], [], []>} : vector<64x32xbf16>, vector<32x64xbf16>, vector<64x64xf32> -> vector<64x64xf32>
    %c0_16 = arith.constant 0 : index
    %c0_17 = arith.constant 0 : index
    %26 = vector.load %arg6[%c0_16, %c0_17] : memref<4x64xf32, #tpu.memory_space<vmem>>, vector<4x64xf32>
    %c0_18 = arith.constant 0 : index
    %c0_19 = arith.constant 0 : index
    %27 = vector.load %arg17[%c0_18, %c0_19] : memref<8x64xf32, #tpu.memory_space<vmem>>, vector<8x64xf32>
    %28 = tpu.concatenate %27, %23 in 0 : vector<8x64xf32>, vector<64x64xf32> -> vector<72x64xf32>
    %29 = vector.extract_strided_slice %23 {offsets = [56, 0], sizes = [8, 64], strides = [1, 1]} : vector<64x64xf32> to vector<8x64xf32>
    %c0_20 = arith.constant 0 : index
    %c0_21 = arith.constant 0 : index
    %30 = vector.load %arg17[%c0_20, %c0_21] : memref<8x64xf32, #tpu.memory_space<vmem>>, vector<8x64xf32>
    tpu.vector_store %arg17[%c0_20, %c0_21], %29 {strides = array<i32>} : memref<8x64xf32, #tpu.memory_space<vmem>>, vector<8x64xf32>,
    %31 = vector.extract_strided_slice %26 {offsets = [3, 0], sizes = [1, 64], strides = [1, 1]} : vector<4x64xf32> to vector<1x64xf32>
    %32 = vector.broadcast %31 : vector<1x64xf32> to vector<64x64xf32>
    %33 = arith.mulf %23, %32 : vector<64x64xf32>
    %c0_22 = arith.constant 0 : index
    %c0_23 = arith.constant 0 : index
    %34 = vector.load %arg7[%c0_22, %c0_23] : memref<1x64xf32, #tpu.memory_space<vmem>>, vector<1x64xf32>
    %35 = vector.broadcast %34 : vector<1x64xf32> to vector<64x64xf32>
    %36 = arith.addf %33, %35 : vector<64x64xf32>
    %37 = vector.extract_strided_slice %28 {offsets = [7, 0], sizes = [64, 64], strides = [1, 1]} : vector<72x64xf32> to vector<64x64xf32>
    %38 = vector.extract_strided_slice %26 {offsets = [2, 0], sizes = [1, 64], strides = [1, 1]} : vector<4x64xf32> to vector<1x64xf32>
    %39 = vector.broadcast %38 : vector<1x64xf32> to vector<64x64xf32>
    %40 = arith.mulf %37, %39 : vector<64x64xf32>
    %41 = arith.addf %36, %40 : vector<64x64xf32>
    %42 = vector.extract_strided_slice %28 {offsets = [6, 0], sizes = [64, 64], strides = [1, 1]} : vector<72x64xf32> to vector<64x64xf32>
    %43 = vector.extract_strided_slice %26 {offsets = [1, 0], sizes = [1, 64], strides = [1, 1]} : vector<4x64xf32> to vector<1x64xf32>
    %44 = vector.broadcast %43 : vector<1x64xf32> to vector<64x64xf32>
    %45 = arith.mulf %42, %44 : vector<64x64xf32>
    %46 = arith.addf %41, %45 : vector<64x64xf32>
    %47 = vector.extract_strided_slice %28 {offsets = [5, 0], sizes = [64, 64], strides = [1, 1]} : vector<72x64xf32> to vector<64x64xf32>
    %48 = vector.extract_strided_slice %26 {offsets = [0, 0], sizes = [1, 64], strides = [1, 1]} : vector<4x64xf32> to vector<1x64xf32>
    %49 = vector.broadcast %48 : vector<1x64xf32> to vector<64x64xf32>
    %50 = arith.mulf %47, %49 : vector<64x64xf32>
    %51 = arith.addf %46, %50 : vector<64x64xf32>
    %cst_24 = arith.constant 0.000000e+00 : f32
    %52 = vector.broadcast %cst_24 : f32 to vector<64x64xf32>
    %53 = arith.subf %52, %51 : vector<64x64xf32>
    %54 = math.exp %53 : vector<64x64xf32>
    %cst_25 = arith.constant 1.000000e+00 : f32
    %55 = vector.broadcast %cst_25 : f32 to vector<64x64xf32>
    %56 = arith.addf %55, %54 : vector<64x64xf32>
    %57 = tpu.reciprocal %56 {approx = true} : vector<64x64xf32> -> vector<64x64xf32>
    %58 = arith.mulf %51, %57 : vector<64x64xf32>
    %59 = arith.truncf %58 : vector<64x64xf32> to vector<64x64xbf16>
    %c0_26 = arith.constant 0 : index
    %c0_27 = arith.constant 0 : index
    %60 = vector.load %arg8[%c0_26, %c0_27] : memref<64x34xbf16, #tpu.memory_space<vmem>>, vector<64x34xbf16>
    %cst_28 = arith.constant dense<0.000000e+00> : vector<64x34xf32>
    %61 = tpu.matmul %59, %60, %cst_28 {dimension_numbers = #tpu.dot_dimension_numbers<[1], [0], [0], [1], [0, 0, 1, 1], [], []>} : vector<64x64xbf16>, vector<64x34xbf16>, vector<64x34xf32> -> vector<64x34xf32>
    %62 = vector.extract_strided_slice %61 {offsets = [0, 0], sizes = [64, 2], strides = [1, 1]} : vector<64x34xf32> to vector<64x2xf32>
    %63 = vector.extract_strided_slice %61 {offsets = [0, 2], sizes = [64, 16], strides = [1, 1]} : vector<64x34xf32> to vector<64x16xf32>
    %64 = vector.extract_strided_slice %61 {offsets = [0, 18], sizes = [64, 16], strides = [1, 1]} : vector<64x34xf32> to vector<64x16xf32>
    %65 = arith.truncf %62 : vector<64x2xf32> to vector<64x2xbf16>
    %c0_29 = arith.constant 0 : index
    %c0_30 = arith.constant 0 : index
    %66 = vector.load %arg9[%c0_29, %c0_30] : memref<2x64xbf16, #tpu.memory_space<vmem>>, vector<2x64xbf16>
    %cst_31 = arith.constant dense<0.000000e+00> : vector<64x64xf32>
    %67 = tpu.matmul %65, %66, %cst_31 {dimension_numbers = #tpu.dot_dimension_numbers<[1], [0], [0], [1], [0, 0, 1, 1], [], []>} : vector<64x2xbf16>, vector<2x64xbf16>, vector<64x64xf32> -> vector<64x64xf32>
    %c0_32 = arith.constant 0 : index
    %c0_33 = arith.constant 0 : index
    %68 = vector.load %arg10[%c0_32, %c0_33] : memref<1x64xf32, #tpu.memory_space<vmem>>, vector<1x64xf32>
    %69 = vector.broadcast %68 : vector<1x64xf32> to vector<64x64xf32>
    %70 = arith.addf %67, %69 : vector<64x64xf32>
    %cst_34 = arith.constant 2.000000e+01 : f32
    %71 = vector.broadcast %cst_34 : f32 to vector<64x64xf32>
    %72 = arith.cmpf ogt, %70, %71 : vector<64x64xf32>
    %cst_35 = arith.constant 2.000000e+01 : f32
    %73 = vector.broadcast %cst_35 : f32 to vector<64x64xf32>
    %74 = arith.minimumf %70, %73 : vector<64x64xf32>
    %75 = math.exp %74 : vector<64x64xf32>
    %76 = math.log1p %75 : vector<64x64xf32>
    %77 = arith.select %72, %70, %76 : vector<64x64xi1>, vector<64x64xf32>
    %c0_36 = arith.constant 0 : index
    %c0_37 = arith.constant 0 : index
    %78 = vector.load %arg18[%c0_36, %c0_37] : memref<64x64xf32, #tpu.memory_space<vmem>>, vector<64x64xf32>
    tpu.vector_store %arg18[%c0_36, %c0_37], %77 {strides = array<i32>} : memref<64x64xf32, #tpu.memory_space<vmem>>, vector<64x64xf32>,
    %79 = arith.mulf %77, %58 : vector<64x64xf32>
    %c0_38 = arith.constant 0 : index
    %c0_39 = arith.constant 0 : index
    %80 = vector.load %arg19[%c0_38, %c0_39] : memref<64x64xf32, #tpu.memory_space<vmem>>, vector<64x64xf32>
    tpu.vector_store %arg19[%c0_38, %c0_39], %79 {strides = array<i32>} : memref<64x64xf32, #tpu.memory_space<vmem>>, vector<64x64xf32>,
    %c0_40 = arith.constant 0 : index
    %c0_41 = arith.constant 0 : index
    %81 = vector.load %arg20[%c0_40, %c0_41] : memref<64x16xf32, #tpu.memory_space<vmem>>, vector<64x16xf32>
    tpu.vector_store %arg20[%c0_40, %c0_41], %63 {strides = array<i32>} : memref<64x16xf32, #tpu.memory_space<vmem>>, vector<64x16xf32>,
    %c0_42 = arith.constant 0 : index
    %c0_43 = arith.constant 0 : index
    %82 = vector.load %arg21[%c0_42, %c0_43] : memref<64x16xf32, #tpu.memory_space<vmem>>, vector<64x16xf32>
    tpu.vector_store %arg21[%c0_42, %c0_43], %64 {strides = array<i32>} : memref<64x16xf32, #tpu.memory_space<vmem>>, vector<64x16xf32>,
    %c0_44 = arith.constant 0 : index
    %c0_45 = arith.constant 0 : index
    %83 = vector.load %arg11[%c0_44, %c0_45] : memref<16x64xf32, #tpu.memory_space<vmem>>, vector<16x64xf32>
    %c0_46 = arith.constant 0 : index
    %c0_47 = arith.constant 0 : index
    %84 = vector.load %arg16[%c0_46, %c0_47] : memref<16x64xf32, #tpu.memory_space<vmem>>, vector<16x64xf32>
    %c0_i32_48 = arith.constant 0 : i32
    %c8_i32 = arith.constant 8 : i32
    %85 = arith.addi %c0_i32_48, %c8_i32 : i32
    %c1_i32 = arith.constant 1 : i32
    %86 = scf.for %arg23 = %c0_i32_48 to %85 step %c1_i32 iter_args(%arg24 = %84) -> (vector<16x64xf32>)  : i32 {
      %c8_i32_64 = arith.constant 8 : i32
      %107 = arith.muli %arg23, %c8_i32_64 : i32
      %108 = tpu.assume_multiple %107, 8 : i32
      %109 = arith.index_cast %108 : i32 to index
      %c0_65 = arith.constant 0 : index
      %110 = vector.load %arg18[%109, %c0_65] : memref<64x64xf32, #tpu.memory_space<vmem>>, vector<8x64xf32>
      %111 = arith.index_cast %108 : i32 to index
      %c0_66 = arith.constant 0 : index
      %112 = vector.load %arg19[%111, %c0_66] : memref<64x64xf32, #tpu.memory_space<vmem>>, vector<8x64xf32>
      %113 = arith.index_cast %108 : i32 to index
      %c0_67 = arith.constant 0 : index
      %114 = vector.load %arg20[%113, %c0_67] : memref<64x16xf32, #tpu.memory_space<vmem>>, vector<8x16xf32>
      %115 = vector.shape_cast %114 : vector<8x16xf32> to vector<8x16x1xf32>
      %116 = arith.index_cast %108 : i32 to index
      %c0_68 = arith.constant 0 : index
      %117 = vector.load %arg21[%116, %c0_68] : memref<64x16xf32, #tpu.memory_space<vmem>>, vector<8x16xf32>
      %118 = vector.shape_cast %117 : vector<8x16xf32> to vector<8x16x1xf32>
      %119 = vector.extract_strided_slice %110 {offsets = [0, 0], sizes = [1, 64], strides = [1, 1]} : vector<8x64xf32> to vector<1x64xf32>
      %120 = vector.broadcast %119 : vector<1x64xf32> to vector<16x64xf32>
      %121 = arith.mulf %120, %83 : vector<16x64xf32>
      %122 = math.exp %121 : vector<16x64xf32>
      %123 = arith.mulf %122, %arg24 : vector<16x64xf32>
      %124 = vector.extract_strided_slice %115 {offsets = [0, 0, 0], sizes = [1, 16, 1], strides = [1, 1, 1]} : vector<8x16x1xf32> to vector<1x16x1xf32>
      %125 = vector.shape_cast %124 : vector<1x16x1xf32> to vector<16x1xf32>
      %126 = vector.extract_strided_slice %112 {offsets = [0, 0], sizes = [1, 64], strides = [1, 1]} : vector<8x64xf32> to vector<1x64xf32>
      %127 = vector.broadcast %125 : vector<16x1xf32> to vector<16x64xf32>
      %128 = vector.broadcast %126 : vector<1x64xf32> to vector<16x64xf32>
      %129 = arith.mulf %127, %128 : vector<16x64xf32>
      %130 = arith.addf %123, %129 : vector<16x64xf32>
      %131 = vector.extract_strided_slice %118 {offsets = [0, 0, 0], sizes = [1, 16, 1], strides = [1, 1, 1]} : vector<8x16x1xf32> to vector<1x16x1xf32>
      %132 = vector.shape_cast %131 : vector<1x16x1xf32> to vector<16x1xf32>
      %133 = vector.broadcast %132 : vector<16x1xf32> to vector<16x64xf32>
      %134 = arith.mulf %133, %130 : vector<16x64xf32>
      %cst_69 = arith.constant dense<0.000000e+00> : vector<64xf32>
      %135 = vector.multi_reduction <add>, %134, %cst_69 [0] : vector<16x64xf32> to vector<64xf32>
      %136 = vector.shape_cast %135 : vector<64xf32> to vector<1x64xf32>
      %137 = vector.extract_strided_slice %110 {offsets = [1, 0], sizes = [1, 64], strides = [1, 1]} : vector<8x64xf32> to vector<1x64xf32>
      %138 = vector.broadcast %137 : vector<1x64xf32> to vector<16x64xf32>
      %139 = arith.mulf %138, %83 : vector<16x64xf32>
      %140 = math.exp %139 : vector<16x64xf32>
      %141 = arith.mulf %140, %130 : vector<16x64xf32>
      %142 = vector.extract_strided_slice %115 {offsets = [1, 0, 0], sizes = [1, 16, 1], strides = [1, 1, 1]} : vector<8x16x1xf32> to vector<1x16x1xf32>
      %143 = vector.shape_cast %142 : vector<1x16x1xf32> to vector<16x1xf32>
      %144 = vector.extract_strided_slice %112 {offsets = [1, 0], sizes = [1, 64], strides = [1, 1]} : vector<8x64xf32> to vector<1x64xf32>
      %145 = vector.broadcast %143 : vector<16x1xf32> to vector<16x64xf32>
      %146 = vector.broadcast %144 : vector<1x64xf32> to vector<16x64xf32>
      %147 = arith.mulf %145, %146 : vector<16x64xf32>
      %148 = arith.addf %141, %147 : vector<16x64xf32>
      %149 = vector.extract_strided_slice %118 {offsets = [1, 0, 0], sizes = [1, 16, 1], strides = [1, 1, 1]} : vector<8x16x1xf32> to vector<1x16x1xf32>
      %150 = vector.shape_cast %149 : vector<1x16x1xf32> to vector<16x1xf32>
      %151 = vector.broadcast %150 : vector<16x1xf32> to vector<16x64xf32>
      %152 = arith.mulf %151, %148 : vector<16x64xf32>
      %cst_70 = arith.constant dense<0.000000e+00> : vector<64xf32>
      %153 = vector.multi_reduction <add>, %152, %cst_70 [0] : vector<16x64xf32> to vector<64xf32>
      %154 = vector.shape_cast %153 : vector<64xf32> to vector<1x64xf32>
      %155 = vector.extract_strided_slice %110 {offsets = [2, 0], sizes = [1, 64], strides = [1, 1]} : vector<8x64xf32> to vector<1x64xf32>
      %156 = vector.broadcast %155 : vector<1x64xf32> to vector<16x64xf32>
      %157 = arith.mulf %156, %83 : vector<16x64xf32>
      %158 = math.exp %157 : vector<16x64xf32>
      %159 = arith.mulf %158, %148 : vector<16x64xf32>
      %160 = vector.extract_strided_slice %115 {offsets = [2, 0, 0], sizes = [1, 16, 1], strides = [1, 1, 1]} : vector<8x16x1xf32> to vector<1x16x1xf32>
      %161 = vector.shape_cast %160 : vector<1x16x1xf32> to vector<16x1xf32>
      %162 = vector.extract_strided_slice %112 {offsets = [2, 0], sizes = [1, 64], strides = [1, 1]} : vector<8x64xf32> to vector<1x64xf32>
      %163 = vector.broadcast %161 : vector<16x1xf32> to vector<16x64xf32>
      %164 = vector.broadcast %162 : vector<1x64xf32> to vector<16x64xf32>
      %165 = arith.mulf %163, %164 : vector<16x64xf32>
      %166 = arith.addf %159, %165 : vector<16x64xf32>
      %167 = vector.extract_strided_slice %118 {offsets = [2, 0, 0], sizes = [1, 16, 1], strides = [1, 1, 1]} : vector<8x16x1xf32> to vector<1x16x1xf32>
      %168 = vector.shape_cast %167 : vector<1x16x1xf32> to vector<16x1xf32>
      %169 = vector.broadcast %168 : vector<16x1xf32> to vector<16x64xf32>
      %170 = arith.mulf %169, %166 : vector<16x64xf32>
      %cst_71 = arith.constant dense<0.000000e+00> : vector<64xf32>
      %171 = vector.multi_reduction <add>, %170, %cst_71 [0] : vector<16x64xf32> to vector<64xf32>
      %172 = vector.shape_cast %171 : vector<64xf32> to vector<1x64xf32>
      %173 = vector.extract_strided_slice %110 {offsets = [3, 0], sizes = [1, 64], strides = [1, 1]} : vector<8x64xf32> to vector<1x64xf32>
      %174 = vector.broadcast %173 : vector<1x64xf32> to vector<16x64xf32>
      %175 = arith.mulf %174, %83 : vector<16x64xf32>
      %176 = math.exp %175 : vector<16x64xf32>
      %177 = arith.mulf %176, %166 : vector<16x64xf32>
      %178 = vector.extract_strided_slice %115 {offsets = [3, 0, 0], sizes = [1, 16, 1], strides = [1, 1, 1]} : vector<8x16x1xf32> to vector<1x16x1xf32>
      %179 = vector.shape_cast %178 : vector<1x16x1xf32> to vector<16x1xf32>
      %180 = vector.extract_strided_slice %112 {offsets = [3, 0], sizes = [1, 64], strides = [1, 1]} : vector<8x64xf32> to vector<1x64xf32>
      %181 = vector.broadcast %179 : vector<16x1xf32> to vector<16x64xf32>
      %182 = vector.broadcast %180 : vector<1x64xf32> to vector<16x64xf32>
      %183 = arith.mulf %181, %182 : vector<16x64xf32>
      %184 = arith.addf %177, %183 : vector<16x64xf32>
      %185 = vector.extract_strided_slice %118 {offsets = [3, 0, 0], sizes = [1, 16, 1], strides = [1, 1, 1]} : vector<8x16x1xf32> to vector<1x16x1xf32>
      %186 = vector.shape_cast %185 : vector<1x16x1xf32> to vector<16x1xf32>
      %187 = vector.broadcast %186 : vector<16x1xf32> to vector<16x64xf32>
      %188 = arith.mulf %187, %184 : vector<16x64xf32>
      %cst_72 = arith.constant dense<0.000000e+00> : vector<64xf32>
      %189 = vector.multi_reduction <add>, %188, %cst_72 [0] : vector<16x64xf32> to vector<64xf32>
      %190 = vector.shape_cast %189 : vector<64xf32> to vector<1x64xf32>
      %191 = vector.extract_strided_slice %110 {offsets = [4, 0], sizes = [1, 64], strides = [1, 1]} : vector<8x64xf32> to vector<1x64xf32>
      %192 = vector.broadcast %191 : vector<1x64xf32> to vector<16x64xf32>
      %193 = arith.mulf %192, %83 : vector<16x64xf32>
      %194 = math.exp %193 : vector<16x64xf32>
      %195 = arith.mulf %194, %184 : vector<16x64xf32>
      %196 = vector.extract_strided_slice %115 {offsets = [4, 0, 0], sizes = [1, 16, 1], strides = [1, 1, 1]} : vector<8x16x1xf32> to vector<1x16x1xf32>
      %197 = vector.shape_cast %196 : vector<1x16x1xf32> to vector<16x1xf32>
      %198 = vector.extract_strided_slice %112 {offsets = [4, 0], sizes = [1, 64], strides = [1, 1]} : vector<8x64xf32> to vector<1x64xf32>
      %199 = vector.broadcast %197 : vector<16x1xf32> to vector<16x64xf32>
      %200 = vector.broadcast %198 : vector<1x64xf32> to vector<16x64xf32>
      %201 = arith.mulf %199, %200 : vector<16x64xf32>
      %202 = arith.addf %195, %201 : vector<16x64xf32>
      %203 = vector.extract_strided_slice %118 {offsets = [4, 0, 0], sizes = [1, 16, 1], strides = [1, 1, 1]} : vector<8x16x1xf32> to vector<1x16x1xf32>
      %204 = vector.shape_cast %203 : vector<1x16x1xf32> to vector<16x1xf32>
      %205 = vector.broadcast %204 : vector<16x1xf32> to vector<16x64xf32>
      %206 = arith.mulf %205, %202 : vector<16x64xf32>
      %cst_73 = arith.constant dense<0.000000e+00> : vector<64xf32>
      %207 = vector.multi_reduction <add>, %206, %cst_73 [0] : vector<16x64xf32> to vector<64xf32>
      %208 = vector.shape_cast %207 : vector<64xf32> to vector<1x64xf32>
      %209 = vector.extract_strided_slice %110 {offsets = [5, 0], sizes = [1, 64], strides = [1, 1]} : vector<8x64xf32> to vector<1x64xf32>
      %210 = vector.broadcast %209 : vector<1x64xf32> to vector<16x64xf32>
      %211 = arith.mulf %210, %83 : vector<16x64xf32>
      %212 = math.exp %211 : vector<16x64xf32>
      %213 = arith.mulf %212, %202 : vector<16x64xf32>
      %214 = vector.extract_strided_slice %115 {offsets = [5, 0, 0], sizes = [1, 16, 1], strides = [1, 1, 1]} : vector<8x16x1xf32> to vector<1x16x1xf32>
      %215 = vector.shape_cast %214 : vector<1x16x1xf32> to vector<16x1xf32>
      %216 = vector.extract_strided_slice %112 {offsets = [5, 0], sizes = [1, 64], strides = [1, 1]} : vector<8x64xf32> to vector<1x64xf32>
      %217 = vector.broadcast %215 : vector<16x1xf32> to vector<16x64xf32>
      %218 = vector.broadcast %216 : vector<1x64xf32> to vector<16x64xf32>
      %219 = arith.mulf %217, %218 : vector<16x64xf32>
      %220 = arith.addf %213, %219 : vector<16x64xf32>
      %221 = vector.extract_strided_slice %118 {offsets = [5, 0, 0], sizes = [1, 16, 1], strides = [1, 1, 1]} : vector<8x16x1xf32> to vector<1x16x1xf32>
      %222 = vector.shape_cast %221 : vector<1x16x1xf32> to vector<16x1xf32>
      %223 = vector.broadcast %222 : vector<16x1xf32> to vector<16x64xf32>
      %224 = arith.mulf %223, %220 : vector<16x64xf32>
      %cst_74 = arith.constant dense<0.000000e+00> : vector<64xf32>
      %225 = vector.multi_reduction <add>, %224, %cst_74 [0] : vector<16x64xf32> to vector<64xf32>
      %226 = vector.shape_cast %225 : vector<64xf32> to vector<1x64xf32>
      %227 = vector.extract_strided_slice %110 {offsets = [6, 0], sizes = [1, 64], strides = [1, 1]} : vector<8x64xf32> to vector<1x64xf32>
      %228 = vector.broadcast %227 : vector<1x64xf32> to vector<16x64xf32>
      %229 = arith.mulf %228, %83 : vector<16x64xf32>
      %230 = math.exp %229 : vector<16x64xf32>
      %231 = arith.mulf %230, %220 : vector<16x64xf32>
      %232 = vector.extract_strided_slice %115 {offsets = [6, 0, 0], sizes = [1, 16, 1], strides = [1, 1, 1]} : vector<8x16x1xf32> to vector<1x16x1xf32>
      %233 = vector.shape_cast %232 : vector<1x16x1xf32> to vector<16x1xf32>
      %234 = vector.extract_strided_slice %112 {offsets = [6, 0], sizes = [1, 64], strides = [1, 1]} : vector<8x64xf32> to vector<1x64xf32>
      %235 = vector.broadcast %233 : vector<16x1xf32> to vector<16x64xf32>
      %236 = vector.broadcast %234 : vector<1x64xf32> to vector<16x64xf32>
      %237 = arith.mulf %235, %236 : vector<16x64xf32>
      %238 = arith.addf %231, %237 : vector<16x64xf32>
      %239 = vector.extract_strided_slice %118 {offsets = [6, 0, 0], sizes = [1, 16, 1], strides = [1, 1, 1]} : vector<8x16x1xf32> to vector<1x16x1xf32>
      %240 = vector.shape_cast %239 : vector<1x16x1xf32> to vector<16x1xf32>
      %241 = vector.broadcast %240 : vector<16x1xf32> to vector<16x64xf32>
      %242 = arith.mulf %241, %238 : vector<16x64xf32>
      %cst_75 = arith.constant dense<0.000000e+00> : vector<64xf32>
      %243 = vector.multi_reduction <add>, %242, %cst_75 [0] : vector<16x64xf32> to vector<64xf32>
      %244 = vector.shape_cast %243 : vector<64xf32> to vector<1x64xf32>
      %245 = vector.extract_strided_slice %110 {offsets = [7, 0], sizes = [1, 64], strides = [1, 1]} : vector<8x64xf32> to vector<1x64xf32>
      %246 = vector.broadcast %245 : vector<1x64xf32> to vector<16x64xf32>
      %247 = arith.mulf %246, %83 : vector<16x64xf32>
      %248 = math.exp %247 : vector<16x64xf32>
      %249 = arith.mulf %248, %238 : vector<16x64xf32>
      %250 = vector.extract_strided_slice %115 {offsets = [7, 0, 0], sizes = [1, 16, 1], strides = [1, 1, 1]} : vector<8x16x1xf32> to vector<1x16x1xf32>
      %251 = vector.shape_cast %250 : vector<1x16x1xf32> to vector<16x1xf32>
      %252 = vector.extract_strided_slice %112 {offsets = [7, 0], sizes = [1, 64], strides = [1, 1]} : vector<8x64xf32> to vector<1x64xf32>
      %253 = vector.broadcast %251 : vector<16x1xf32> to vector<16x64xf32>
      %254 = vector.broadcast %252 : vector<1x64xf32> to vector<16x64xf32>
      %255 = arith.mulf %253, %254 : vector<16x64xf32>
      %256 = arith.addf %249, %255 : vector<16x64xf32>
      %257 = vector.extract_strided_slice %118 {offsets = [7, 0, 0], sizes = [1, 16, 1], strides = [1, 1, 1]} : vector<8x16x1xf32> to vector<1x16x1xf32>
      %258 = vector.shape_cast %257 : vector<1x16x1xf32> to vector<16x1xf32>
      %259 = vector.broadcast %258 : vector<16x1xf32> to vector<16x64xf32>
      %260 = arith.mulf %259, %256 : vector<16x64xf32>
      %cst_76 = arith.constant dense<0.000000e+00> : vector<64xf32>
      %261 = vector.multi_reduction <add>, %260, %cst_76 [0] : vector<16x64xf32> to vector<64xf32>
      %262 = vector.shape_cast %261 : vector<64xf32> to vector<1x64xf32>
      %263 = tpu.concatenate %136, %154, %172, %190, %208, %226, %244, %262 in 0 : vector<1x64xf32>, vector<1x64xf32>, vector<1x64xf32>, vector<1x64xf32>, vector<1x64xf32>, vector<1x64xf32>, vector<1x64xf32>, vector<1x64xf32> -> vector<8x64xf32>
      %264 = arith.index_cast %108 : i32 to index
      %c0_77 = arith.constant 0 : index
      %265 = vector.load %arg22[%264, %c0_77] : memref<64x64xf32, #tpu.memory_space<vmem>>, vector<8x64xf32>
      tpu.vector_store %arg22[%264, %c0_77], %263 {strides = array<i32>} : memref<64x64xf32, #tpu.memory_space<vmem>>, vector<8x64xf32>,
      scf.yield %256 : vector<16x64xf32>
    }
    %c8_i32_49 = arith.constant 8 : i32
    %c0_50 = arith.constant 0 : index
    %c0_51 = arith.constant 0 : index
    %87 = vector.load %arg16[%c0_50, %c0_51] : memref<16x64xf32, #tpu.memory_space<vmem>>, vector<16x64xf32>
    tpu.vector_store %arg16[%c0_50, %c0_51], %86 {strides = array<i32>} : memref<16x64xf32, #tpu.memory_space<vmem>>, vector<16x64xf32>,
    %c0_52 = arith.constant 0 : index
    %c0_53 = arith.constant 0 : index
    %88 = vector.load %arg22[%c0_52, %c0_53] : memref<64x64xf32, #tpu.memory_space<vmem>>, vector<64x64xf32>
    %c0_54 = arith.constant 0 : index
    %c0_55 = arith.constant 0 : index
    %89 = vector.load %arg12[%c0_54, %c0_55] : memref<1x64xf32, #tpu.memory_space<vmem>>, vector<1x64xf32>
    %90 = vector.broadcast %89 : vector<1x64xf32> to vector<64x64xf32>
    %91 = arith.mulf %58, %90 : vector<64x64xf32>
    %92 = arith.addf %88, %91 : vector<64x64xf32>
    %cst_56 = arith.constant 0.000000e+00 : f32
    %93 = vector.broadcast %cst_56 : f32 to vector<64x64xf32>
    %94 = arith.subf %93, %25 : vector<64x64xf32>
    %95 = math.exp %94 : vector<64x64xf32>
    %cst_57 = arith.constant 1.000000e+00 : f32
    %96 = vector.broadcast %cst_57 : f32 to vector<64x64xf32>
    %97 = arith.addf %96, %95 : vector<64x64xf32>
    %98 = tpu.reciprocal %97 {approx = true} : vector<64x64xf32> -> vector<64x64xf32>
    %99 = arith.mulf %25, %98 : vector<64x64xf32>
    %100 = arith.mulf %92, %99 : vector<64x64xf32>
    %101 = arith.truncf %100 : vector<64x64xf32> to vector<64x64xbf16>
    %c0_58 = arith.constant 0 : index
    %c0_59 = arith.constant 0 : index
    %102 = vector.load %arg13[%c0_58, %c0_59] : memref<64x32xbf16, #tpu.memory_space<vmem>>, vector<64x32xbf16>
    %cst_60 = arith.constant dense<0.000000e+00> : vector<64x32xf32>
    %103 = tpu.matmul %101, %102, %cst_60 {dimension_numbers = #tpu.dot_dimension_numbers<[1], [0], [0], [1], [0, 0, 1, 1], [], []>} : vector<64x64xbf16>, vector<64x32xbf16>, vector<64x32xf32> -> vector<64x32xf32>
    %c0_61 = arith.constant 0 : index
    %c0_62 = arith.constant 0 : index
    %c0_63 = arith.constant 0 : index
    %104 = vector.load %arg14[%c0_61, %c0_62, %c0_63] : memref<1x64x32xf32, #tpu.memory_space<vmem>>, vector<1x64x32xf32>
    %105 = vector.shape_cast %104 : vector<1x64x32xf32> to vector<64x32xf32>
    %106 = vector.shape_cast %103 : vector<64x32xf32> to vector<1x64x32xf32>
    tpu.vector_store %arg14[%c0_61, %c0_62, %c0_63], %106 {strides = array<i32>} : memref<1x64x32xf32, #tpu.memory_space<vmem>>, vector<1x64x32xf32>,
    return
  }
  func.func @transform_0(%arg0: i32, %arg1: i32) -> (i32, i32, i32) {
    %c0_i32 = arith.constant 0 : i32
    %c0_i32_0 = arith.constant 0 : i32
    return %arg0, %arg1, %c0_i32 : i32, i32, i32
  }
  func.func @transform_1(%arg0: i32, %arg1: i32) -> (i32, i32) {
    %c0_i32 = arith.constant 0 : i32
    %c0_i32_0 = arith.constant 0 : i32
    %c0_i32_1 = arith.constant 0 : i32
    return %c0_i32, %c0_i32_0 : i32, i32
  }
  func.func @transform_2(%arg0: i32, %arg1: i32) -> (i32, i32) {
    %c0_i32 = arith.constant 0 : i32
    %c0_i32_0 = arith.constant 0 : i32
    %c0_i32_1 = arith.constant 0 : i32
    return %c0_i32, %c0_i32_0 : i32, i32
  }
  func.func @transform_3(%arg0: i32, %arg1: i32) -> (i32, i32) {
    %c0_i32 = arith.constant 0 : i32
    %c0_i32_0 = arith.constant 0 : i32
    %c0_i32_1 = arith.constant 0 : i32
    return %c0_i32, %c0_i32_0 : i32, i32
  }
  func.func @transform_4(%arg0: i32, %arg1: i32) -> (i32, i32) {
    %c0_i32 = arith.constant 0 : i32
    %c0_i32_0 = arith.constant 0 : i32
    %c0_i32_1 = arith.constant 0 : i32
    return %c0_i32, %c0_i32_0 : i32, i32
  }
  func.func @transform_5(%arg0: i32, %arg1: i32) -> (i32, i32) {
    %c0_i32 = arith.constant 0 : i32
    %c0_i32_0 = arith.constant 0 : i32
    %c0_i32_1 = arith.constant 0 : i32
    return %c0_i32, %c0_i32_0 : i32, i32
  }
  func.func @transform_6(%arg0: i32, %arg1: i32) -> (i32, i32) {
    %c0_i32 = arith.constant 0 : i32
    %c0_i32_0 = arith.constant 0 : i32
    %c0_i32_1 = arith.constant 0 : i32
    return %c0_i32, %c0_i32_0 : i32, i32
  }
  func.func @transform_7(%arg0: i32, %arg1: i32) -> (i32, i32) {
    %c0_i32 = arith.constant 0 : i32
    %c0_i32_0 = arith.constant 0 : i32
    %c0_i32_1 = arith.constant 0 : i32
    return %c0_i32, %c0_i32_0 : i32, i32
  }
  func.func @transform_8(%arg0: i32, %arg1: i32) -> (i32, i32) {
    %c0_i32 = arith.constant 0 : i32
    %c0_i32_0 = arith.constant 0 : i32
    %c0_i32_1 = arith.constant 0 : i32
    return %c0_i32, %c0_i32_0 : i32, i32
  }
  func.func @transform_9(%arg0: i32, %arg1: i32) -> (i32, i32) {
    %c0_i32 = arith.constant 0 : i32
    %c0_i32_0 = arith.constant 0 : i32
    %c0_i32_1 = arith.constant 0 : i32
    return %c0_i32, %c0_i32_0 : i32, i32
  }
  func.func @transform_10(%arg0: i32, %arg1: i32) -> (i32, i32) {
    %c0_i32 = arith.constant 0 : i32
    %c0_i32_0 = arith.constant 0 : i32
    %c0_i32_1 = arith.constant 0 : i32
    return %c0_i32, %c0_i32_0 : i32, i32
  }
  func.func @transform_11(%arg0: i32, %arg1: i32) -> (i32, i32) {
    %c0_i32 = arith.constant 0 : i32
    %c0_i32_0 = arith.constant 0 : i32
    %c0_i32_1 = arith.constant 0 : i32
    return %c0_i32, %c0_i32_0 : i32, i32
  }
  func.func @transform_12(%arg0: i32, %arg1: i32) -> (i32, i32, i32) {
    %c0_i32 = arith.constant 0 : i32
    %c0_i32_0 = arith.constant 0 : i32
    return %arg0, %arg1, %c0_i32 : i32, i32, i32
  }
  func.func @transform_13(%arg0: i32, %arg1: i32) -> (i32, i32, i32) {
    %c0_i32 = arith.constant 0 : i32
    %c0_i32_0 = arith.constant 0 : i32
    return %arg0, %arg1, %c0_i32 : i32, i32, i32
  }
}

module attributes {stable_mosaic.version = 11 : i64} {
  func.func @mamba_layer_kernel(%arg0: i32, %arg1: i32, %arg2: memref<1x64x32xf32, #tpu.memory_space<vmem>>, %arg3: memref<1x64x32xf32, #tpu.memory_space<vmem>>, %arg4: memref<1x32xf32, #tpu.memory_space<vmem>>, %arg5: memref<32x64xbf16, #tpu.memory_space<vmem>>, %arg6: memref<32x64xbf16, #tpu.memory_space<vmem>>, %arg7: memref<4x64xf32, #tpu.memory_space<vmem>>, %arg8: memref<1x64xf32, #tpu.memory_space<vmem>>, %arg9: memref<64x34xbf16, #tpu.memory_space<vmem>>, %arg10: memref<2x64xbf16, #tpu.memory_space<vmem>>, %arg11: memref<1x64xf32, #tpu.memory_space<vmem>>, %arg12: memref<16x64xf32, #tpu.memory_space<vmem>>, %arg13: memref<1x64xf32, #tpu.memory_space<vmem>>, %arg14: memref<64x32xbf16, #tpu.memory_space<vmem>>, %arg15: memref<1x64x32xf32, #tpu.memory_space<vmem>>, %arg16: memref<1x64x32xf32, #tpu.memory_space<vmem>>, %arg17: memref<16x64xf32, #tpu.memory_space<vmem>>, %arg18: memref<8x64xf32, #tpu.memory_space<vmem>>, %arg19: memref<64x64xf32, #tpu.memory_space<vmem>>, %arg20: memref<64x64xf32, #tpu.memory_space<vmem>>, %arg21: memref<64x16xf32, #tpu.memory_space<vmem>>, %arg22: memref<64x16xf32, #tpu.memory_space<vmem>>, %arg23: memref<64x64xf32, #tpu.memory_space<vmem>>) attributes {dimension_semantics = [#tpu.dimension_semantics<parallel>, #tpu.dimension_semantics<arbitrary>], iteration_bounds = array<i64: 2, 2>, scalar_prefetch = 0 : i64, scratch_operands = 7 : i64, tpu.core_type = #tpu.core_type<tc>, window_params = [{transform_indices = @transform_0, window_bounds = array<i64: 1, 64, 32>}, {transform_indices = @transform_1, window_bounds = array<i64: 1, 64, 32>}, {pipeline_mode = #tpu.pipeline_mode<synchronous>, transform_indices = @transform_2, window_bounds = array<i64: 1, 32>}, {pipeline_mode = #tpu.pipeline_mode<synchronous>, transform_indices = @transform_3, window_bounds = array<i64: 32, 64>}, {pipeline_mode = #tpu.pipeline_mode<synchronous>, transform_indices = @transform_4, window_bounds = array<i64: 32, 64>}, {pipeline_mode = #tpu.pipeline_mode<synchronous>, transform_indices = @transform_5, window_bounds = array<i64: 4, 64>}, {pipeline_mode = #tpu.pipeline_mode<synchronous>, transform_indices = @transform_6, window_bounds = array<i64: 1, 64>}, {pipeline_mode = #tpu.pipeline_mode<synchronous>, transform_indices = @transform_7, window_bounds = array<i64: 64, 34>}, {pipeline_mode = #tpu.pipeline_mode<synchronous>, transform_indices = @transform_8, window_bounds = array<i64: 2, 64>}, {pipeline_mode = #tpu.pipeline_mode<synchronous>, transform_indices = @transform_9, window_bounds = array<i64: 1, 64>}, {pipeline_mode = #tpu.pipeline_mode<synchronous>, transform_indices = @transform_10, window_bounds = array<i64: 16, 64>}, {pipeline_mode = #tpu.pipeline_mode<synchronous>, transform_indices = @transform_11, window_bounds = array<i64: 1, 64>}, {pipeline_mode = #tpu.pipeline_mode<synchronous>, transform_indices = @transform_12, window_bounds = array<i64: 64, 32>}, {transform_indices = @transform_13, window_bounds = array<i64: 1, 64, 32>}, {transform_indices = @transform_14, window_bounds = array<i64: 1, 64, 32>}]} {
    %c0_i32 = arith.constant 0 : i32
    %0 = arith.cmpi eq, %arg1, %c0_i32 : i32
    %1 = arith.extui %0 : i1 to i32
    %c0_i32_0 = arith.constant 0 : i32
    %2 = arith.cmpi ne, %1, %c0_i32_0 : i32
    scf.if %2 {
      %cst_67 = arith.constant 0.000000e+00 : f32
      %110 = vector.broadcast %cst_67 : f32 to vector<16x64xf32>
      %c0_68 = arith.constant 0 : index
      %c0_69 = arith.constant 0 : index
      %111 = vector.load %arg17[%c0_68, %c0_69] : memref<16x64xf32, #tpu.memory_space<vmem>>, vector<16x64xf32>
      tpu.vector_store %arg17[%c0_68, %c0_69], %110 {strides = array<i32>} : memref<16x64xf32, #tpu.memory_space<vmem>>, vector<16x64xf32>,
      %cst_70 = arith.constant 0.000000e+00 : f32
      %112 = vector.broadcast %cst_70 : f32 to vector<8x64xf32>
      %c0_71 = arith.constant 0 : index
      %c0_72 = arith.constant 0 : index
      %113 = vector.load %arg18[%c0_71, %c0_72] : memref<8x64xf32, #tpu.memory_space<vmem>>, vector<8x64xf32>
      tpu.vector_store %arg18[%c0_71, %c0_72], %112 {strides = array<i32>} : memref<8x64xf32, #tpu.memory_space<vmem>>, vector<8x64xf32>,
    } else {
    }
    %c0 = arith.constant 0 : index
    %c0_1 = arith.constant 0 : index
    %c0_2 = arith.constant 0 : index
    %3 = vector.load %arg2[%c0, %c0_1, %c0_2] : memref<1x64x32xf32, #tpu.memory_space<vmem>>, vector<1x64x32xf32>
    %4 = vector.shape_cast %3 : vector<1x64x32xf32> to vector<64x32xf32>
    %c0_3 = arith.constant 0 : index
    %c0_4 = arith.constant 0 : index
    %c0_5 = arith.constant 0 : index
    %5 = vector.load %arg3[%c0_3, %c0_4, %c0_5] : memref<1x64x32xf32, #tpu.memory_space<vmem>>, vector<1x64x32xf32>
    %6 = vector.shape_cast %5 : vector<1x64x32xf32> to vector<64x32xf32>
    %7 = arith.addf %4, %6 : vector<64x32xf32>
    %c0_6 = arith.constant 0 : index
    %c0_7 = arith.constant 0 : index
    %c0_8 = arith.constant 0 : index
    %8 = vector.load %arg16[%c0_6, %c0_7, %c0_8] : memref<1x64x32xf32, #tpu.memory_space<vmem>>, vector<1x64x32xf32>
    %9 = vector.shape_cast %8 : vector<1x64x32xf32> to vector<64x32xf32>
    %10 = vector.shape_cast %7 : vector<64x32xf32> to vector<1x64x32xf32>
    tpu.vector_store %arg16[%c0_6, %c0_7, %c0_8], %10 {strides = array<i32>} : memref<1x64x32xf32, #tpu.memory_space<vmem>>, vector<1x64x32xf32>,
    %11 = arith.mulf %7, %7 : vector<64x32xf32>
    %cst = arith.constant dense<0.000000e+00> : vector<64xf32>
    %12 = vector.multi_reduction <add>, %11, %cst [1] : vector<64x32xf32> to vector<64xf32>
    %13 = vector.shape_cast %12 : vector<64xf32> to vector<64x1xf32>
    %cst_9 = arith.constant 3.200000e+01 : f32
    %14 = vector.broadcast %cst_9 : f32 to vector<64x1xf32>
    %15 = arith.divf %13, %14 : vector<64x1xf32>
    %cst_10 = arith.constant 9.99999974E-6 : f32
    %16 = vector.broadcast %cst_10 : f32 to vector<64x1xf32>
    %17 = arith.addf %15, %16 : vector<64x1xf32>
    %18 = math.rsqrt %17 : vector<64x1xf32>
    %19 = vector.broadcast %18 : vector<64x1xf32> to vector<64x32xf32>
    %20 = arith.mulf %7, %19 : vector<64x32xf32>
    %c0_11 = arith.constant 0 : index
    %c0_12 = arith.constant 0 : index
    %21 = vector.load %arg4[%c0_11, %c0_12] : memref<1x32xf32, #tpu.memory_space<vmem>>, vector<1x32xf32>
    %22 = vector.broadcast %21 : vector<1x32xf32> to vector<64x32xf32>
    %23 = arith.mulf %20, %22 : vector<64x32xf32>
    %24 = arith.truncf %23 : vector<64x32xf32> to vector<64x32xbf16>
    %c0_13 = arith.constant 0 : index
    %c0_14 = arith.constant 0 : index
    %25 = vector.load %arg5[%c0_13, %c0_14] : memref<32x64xbf16, #tpu.memory_space<vmem>>, vector<32x64xbf16>
    %cst_15 = arith.constant dense<0.000000e+00> : vector<64x64xf32>
    %26 = tpu.matmul %24, %25, %cst_15 {dimension_numbers = #tpu.dot_dimension_numbers<[1], [0], [0], [1], [0, 0, 1, 1], [], []>} : vector<64x32xbf16>, vector<32x64xbf16>, vector<64x64xf32> -> vector<64x64xf32>
    %c0_16 = arith.constant 0 : index
    %c0_17 = arith.constant 0 : index
    %27 = vector.load %arg6[%c0_16, %c0_17] : memref<32x64xbf16, #tpu.memory_space<vmem>>, vector<32x64xbf16>
    %cst_18 = arith.constant dense<0.000000e+00> : vector<64x64xf32>
    %28 = tpu.matmul %24, %27, %cst_18 {dimension_numbers = #tpu.dot_dimension_numbers<[1], [0], [0], [1], [0, 0, 1, 1], [], []>} : vector<64x32xbf16>, vector<32x64xbf16>, vector<64x64xf32> -> vector<64x64xf32>
    %c0_19 = arith.constant 0 : index
    %c0_20 = arith.constant 0 : index
    %29 = vector.load %arg7[%c0_19, %c0_20] : memref<4x64xf32, #tpu.memory_space<vmem>>, vector<4x64xf32>
    %c0_21 = arith.constant 0 : index
    %c0_22 = arith.constant 0 : index
    %30 = vector.load %arg18[%c0_21, %c0_22] : memref<8x64xf32, #tpu.memory_space<vmem>>, vector<8x64xf32>
    %31 = tpu.concatenate %30, %26 in 0 : vector<8x64xf32>, vector<64x64xf32> -> vector<72x64xf32>
    %32 = vector.extract_strided_slice %26 {offsets = [56, 0], sizes = [8, 64], strides = [1, 1]} : vector<64x64xf32> to vector<8x64xf32>
    %c0_23 = arith.constant 0 : index
    %c0_24 = arith.constant 0 : index
    %33 = vector.load %arg18[%c0_23, %c0_24] : memref<8x64xf32, #tpu.memory_space<vmem>>, vector<8x64xf32>
    tpu.vector_store %arg18[%c0_23, %c0_24], %32 {strides = array<i32>} : memref<8x64xf32, #tpu.memory_space<vmem>>, vector<8x64xf32>,
    %34 = vector.extract_strided_slice %29 {offsets = [3, 0], sizes = [1, 64], strides = [1, 1]} : vector<4x64xf32> to vector<1x64xf32>
    %35 = vector.broadcast %34 : vector<1x64xf32> to vector<64x64xf32>
    %36 = arith.mulf %26, %35 : vector<64x64xf32>
    %c0_25 = arith.constant 0 : index
    %c0_26 = arith.constant 0 : index
    %37 = vector.load %arg8[%c0_25, %c0_26] : memref<1x64xf32, #tpu.memory_space<vmem>>, vector<1x64xf32>
    %38 = vector.broadcast %37 : vector<1x64xf32> to vector<64x64xf32>
    %39 = arith.addf %36, %38 : vector<64x64xf32>
    %40 = vector.extract_strided_slice %31 {offsets = [7, 0], sizes = [64, 64], strides = [1, 1]} : vector<72x64xf32> to vector<64x64xf32>
    %41 = vector.extract_strided_slice %29 {offsets = [2, 0], sizes = [1, 64], strides = [1, 1]} : vector<4x64xf32> to vector<1x64xf32>
    %42 = vector.broadcast %41 : vector<1x64xf32> to vector<64x64xf32>
    %43 = arith.mulf %40, %42 : vector<64x64xf32>
    %44 = arith.addf %39, %43 : vector<64x64xf32>
    %45 = vector.extract_strided_slice %31 {offsets = [6, 0], sizes = [64, 64], strides = [1, 1]} : vector<72x64xf32> to vector<64x64xf32>
    %46 = vector.extract_strided_slice %29 {offsets = [1, 0], sizes = [1, 64], strides = [1, 1]} : vector<4x64xf32> to vector<1x64xf32>
    %47 = vector.broadcast %46 : vector<1x64xf32> to vector<64x64xf32>
    %48 = arith.mulf %45, %47 : vector<64x64xf32>
    %49 = arith.addf %44, %48 : vector<64x64xf32>
    %50 = vector.extract_strided_slice %31 {offsets = [5, 0], sizes = [64, 64], strides = [1, 1]} : vector<72x64xf32> to vector<64x64xf32>
    %51 = vector.extract_strided_slice %29 {offsets = [0, 0], sizes = [1, 64], strides = [1, 1]} : vector<4x64xf32> to vector<1x64xf32>
    %52 = vector.broadcast %51 : vector<1x64xf32> to vector<64x64xf32>
    %53 = arith.mulf %50, %52 : vector<64x64xf32>
    %54 = arith.addf %49, %53 : vector<64x64xf32>
    %cst_27 = arith.constant 0.000000e+00 : f32
    %55 = vector.broadcast %cst_27 : f32 to vector<64x64xf32>
    %56 = arith.subf %55, %54 : vector<64x64xf32>
    %57 = math.exp %56 : vector<64x64xf32>
    %cst_28 = arith.constant 1.000000e+00 : f32
    %58 = vector.broadcast %cst_28 : f32 to vector<64x64xf32>
    %59 = arith.addf %58, %57 : vector<64x64xf32>
    %60 = tpu.reciprocal %59 {approx = true} : vector<64x64xf32> -> vector<64x64xf32>
    %61 = arith.mulf %54, %60 : vector<64x64xf32>
    %62 = arith.truncf %61 : vector<64x64xf32> to vector<64x64xbf16>
    %c0_29 = arith.constant 0 : index
    %c0_30 = arith.constant 0 : index
    %63 = vector.load %arg9[%c0_29, %c0_30] : memref<64x34xbf16, #tpu.memory_space<vmem>>, vector<64x34xbf16>
    %cst_31 = arith.constant dense<0.000000e+00> : vector<64x34xf32>
    %64 = tpu.matmul %62, %63, %cst_31 {dimension_numbers = #tpu.dot_dimension_numbers<[1], [0], [0], [1], [0, 0, 1, 1], [], []>} : vector<64x64xbf16>, vector<64x34xbf16>, vector<64x34xf32> -> vector<64x34xf32>
    %65 = vector.extract_strided_slice %64 {offsets = [0, 0], sizes = [64, 2], strides = [1, 1]} : vector<64x34xf32> to vector<64x2xf32>
    %66 = vector.extract_strided_slice %64 {offsets = [0, 2], sizes = [64, 16], strides = [1, 1]} : vector<64x34xf32> to vector<64x16xf32>
    %67 = vector.extract_strided_slice %64 {offsets = [0, 18], sizes = [64, 16], strides = [1, 1]} : vector<64x34xf32> to vector<64x16xf32>
    %68 = arith.truncf %65 : vector<64x2xf32> to vector<64x2xbf16>
    %c0_32 = arith.constant 0 : index
    %c0_33 = arith.constant 0 : index
    %69 = vector.load %arg10[%c0_32, %c0_33] : memref<2x64xbf16, #tpu.memory_space<vmem>>, vector<2x64xbf16>
    %cst_34 = arith.constant dense<0.000000e+00> : vector<64x64xf32>
    %70 = tpu.matmul %68, %69, %cst_34 {dimension_numbers = #tpu.dot_dimension_numbers<[1], [0], [0], [1], [0, 0, 1, 1], [], []>} : vector<64x2xbf16>, vector<2x64xbf16>, vector<64x64xf32> -> vector<64x64xf32>
    %c0_35 = arith.constant 0 : index
    %c0_36 = arith.constant 0 : index
    %71 = vector.load %arg11[%c0_35, %c0_36] : memref<1x64xf32, #tpu.memory_space<vmem>>, vector<1x64xf32>
    %72 = vector.broadcast %71 : vector<1x64xf32> to vector<64x64xf32>
    %73 = arith.addf %70, %72 : vector<64x64xf32>
    %cst_37 = arith.constant 2.000000e+01 : f32
    %74 = vector.broadcast %cst_37 : f32 to vector<64x64xf32>
    %75 = arith.cmpf ogt, %73, %74 : vector<64x64xf32>
    %cst_38 = arith.constant 2.000000e+01 : f32
    %76 = vector.broadcast %cst_38 : f32 to vector<64x64xf32>
    %77 = arith.minimumf %73, %76 : vector<64x64xf32>
    %78 = math.exp %77 : vector<64x64xf32>
    %79 = math.log1p %78 : vector<64x64xf32>
    %80 = arith.select %75, %73, %79 : vector<64x64xi1>, vector<64x64xf32>
    %c0_39 = arith.constant 0 : index
    %c0_40 = arith.constant 0 : index
    %81 = vector.load %arg19[%c0_39, %c0_40] : memref<64x64xf32, #tpu.memory_space<vmem>>, vector<64x64xf32>
    tpu.vector_store %arg19[%c0_39, %c0_40], %80 {strides = array<i32>} : memref<64x64xf32, #tpu.memory_space<vmem>>, vector<64x64xf32>,
    %82 = arith.mulf %80, %61 : vector<64x64xf32>
    %c0_41 = arith.constant 0 : index
    %c0_42 = arith.constant 0 : index
    %83 = vector.load %arg20[%c0_41, %c0_42] : memref<64x64xf32, #tpu.memory_space<vmem>>, vector<64x64xf32>
    tpu.vector_store %arg20[%c0_41, %c0_42], %82 {strides = array<i32>} : memref<64x64xf32, #tpu.memory_space<vmem>>, vector<64x64xf32>,
    %c0_43 = arith.constant 0 : index
    %c0_44 = arith.constant 0 : index
    %84 = vector.load %arg21[%c0_43, %c0_44] : memref<64x16xf32, #tpu.memory_space<vmem>>, vector<64x16xf32>
    tpu.vector_store %arg21[%c0_43, %c0_44], %66 {strides = array<i32>} : memref<64x16xf32, #tpu.memory_space<vmem>>, vector<64x16xf32>,
    %c0_45 = arith.constant 0 : index
    %c0_46 = arith.constant 0 : index
    %85 = vector.load %arg22[%c0_45, %c0_46] : memref<64x16xf32, #tpu.memory_space<vmem>>, vector<64x16xf32>
    tpu.vector_store %arg22[%c0_45, %c0_46], %67 {strides = array<i32>} : memref<64x16xf32, #tpu.memory_space<vmem>>, vector<64x16xf32>,
    %c0_47 = arith.constant 0 : index
    %c0_48 = arith.constant 0 : index
    %86 = vector.load %arg12[%c0_47, %c0_48] : memref<16x64xf32, #tpu.memory_space<vmem>>, vector<16x64xf32>
    %c0_49 = arith.constant 0 : index
    %c0_50 = arith.constant 0 : index
    %87 = vector.load %arg17[%c0_49, %c0_50] : memref<16x64xf32, #tpu.memory_space<vmem>>, vector<16x64xf32>
    %c0_i32_51 = arith.constant 0 : i32
    %c8_i32 = arith.constant 8 : i32
    %88 = arith.addi %c0_i32_51, %c8_i32 : i32
    %c1_i32 = arith.constant 1 : i32
    %89 = scf.for %arg24 = %c0_i32_51 to %88 step %c1_i32 iter_args(%arg25 = %87) -> (vector<16x64xf32>)  : i32 {
      %c8_i32_67 = arith.constant 8 : i32
      %110 = arith.muli %arg24, %c8_i32_67 : i32
      %111 = tpu.assume_multiple %110, 8 : i32
      %112 = arith.index_cast %111 : i32 to index
      %c0_68 = arith.constant 0 : index
      %113 = vector.load %arg19[%112, %c0_68] : memref<64x64xf32, #tpu.memory_space<vmem>>, vector<8x64xf32>
      %114 = arith.index_cast %111 : i32 to index
      %c0_69 = arith.constant 0 : index
      %115 = vector.load %arg20[%114, %c0_69] : memref<64x64xf32, #tpu.memory_space<vmem>>, vector<8x64xf32>
      %116 = arith.index_cast %111 : i32 to index
      %c0_70 = arith.constant 0 : index
      %117 = vector.load %arg21[%116, %c0_70] : memref<64x16xf32, #tpu.memory_space<vmem>>, vector<8x16xf32>
      %118 = vector.shape_cast %117 : vector<8x16xf32> to vector<8x16x1xf32>
      %119 = arith.index_cast %111 : i32 to index
      %c0_71 = arith.constant 0 : index
      %120 = vector.load %arg22[%119, %c0_71] : memref<64x16xf32, #tpu.memory_space<vmem>>, vector<8x16xf32>
      %121 = vector.shape_cast %120 : vector<8x16xf32> to vector<8x16x1xf32>
      %122 = vector.extract_strided_slice %113 {offsets = [0, 0], sizes = [1, 64], strides = [1, 1]} : vector<8x64xf32> to vector<1x64xf32>
      %123 = vector.broadcast %122 : vector<1x64xf32> to vector<16x64xf32>
      %124 = arith.mulf %123, %86 : vector<16x64xf32>
      %125 = math.exp %124 : vector<16x64xf32>
      %126 = arith.mulf %125, %arg25 : vector<16x64xf32>
      %127 = vector.extract_strided_slice %118 {offsets = [0, 0, 0], sizes = [1, 16, 1], strides = [1, 1, 1]} : vector<8x16x1xf32> to vector<1x16x1xf32>
      %128 = vector.shape_cast %127 : vector<1x16x1xf32> to vector<16x1xf32>
      %129 = vector.extract_strided_slice %115 {offsets = [0, 0], sizes = [1, 64], strides = [1, 1]} : vector<8x64xf32> to vector<1x64xf32>
      %130 = vector.broadcast %128 : vector<16x1xf32> to vector<16x64xf32>
      %131 = vector.broadcast %129 : vector<1x64xf32> to vector<16x64xf32>
      %132 = arith.mulf %130, %131 : vector<16x64xf32>
      %133 = arith.addf %126, %132 : vector<16x64xf32>
      %134 = vector.extract_strided_slice %121 {offsets = [0, 0, 0], sizes = [1, 16, 1], strides = [1, 1, 1]} : vector<8x16x1xf32> to vector<1x16x1xf32>
      %135 = vector.shape_cast %134 : vector<1x16x1xf32> to vector<16x1xf32>
      %136 = vector.broadcast %135 : vector<16x1xf32> to vector<16x64xf32>
      %137 = arith.mulf %136, %133 : vector<16x64xf32>
      %cst_72 = arith.constant dense<0.000000e+00> : vector<64xf32>
      %138 = vector.multi_reduction <add>, %137, %cst_72 [0] : vector<16x64xf32> to vector<64xf32>
      %139 = vector.shape_cast %138 : vector<64xf32> to vector<1x64xf32>
      %140 = vector.extract_strided_slice %113 {offsets = [1, 0], sizes = [1, 64], strides = [1, 1]} : vector<8x64xf32> to vector<1x64xf32>
      %141 = vector.broadcast %140 : vector<1x64xf32> to vector<16x64xf32>
      %142 = arith.mulf %141, %86 : vector<16x64xf32>
      %143 = math.exp %142 : vector<16x64xf32>
      %144 = arith.mulf %143, %133 : vector<16x64xf32>
      %145 = vector.extract_strided_slice %118 {offsets = [1, 0, 0], sizes = [1, 16, 1], strides = [1, 1, 1]} : vector<8x16x1xf32> to vector<1x16x1xf32>
      %146 = vector.shape_cast %145 : vector<1x16x1xf32> to vector<16x1xf32>
      %147 = vector.extract_strided_slice %115 {offsets = [1, 0], sizes = [1, 64], strides = [1, 1]} : vector<8x64xf32> to vector<1x64xf32>
      %148 = vector.broadcast %146 : vector<16x1xf32> to vector<16x64xf32>
      %149 = vector.broadcast %147 : vector<1x64xf32> to vector<16x64xf32>
      %150 = arith.mulf %148, %149 : vector<16x64xf32>
      %151 = arith.addf %144, %150 : vector<16x64xf32>
      %152 = vector.extract_strided_slice %121 {offsets = [1, 0, 0], sizes = [1, 16, 1], strides = [1, 1, 1]} : vector<8x16x1xf32> to vector<1x16x1xf32>
      %153 = vector.shape_cast %152 : vector<1x16x1xf32> to vector<16x1xf32>
      %154 = vector.broadcast %153 : vector<16x1xf32> to vector<16x64xf32>
      %155 = arith.mulf %154, %151 : vector<16x64xf32>
      %cst_73 = arith.constant dense<0.000000e+00> : vector<64xf32>
      %156 = vector.multi_reduction <add>, %155, %cst_73 [0] : vector<16x64xf32> to vector<64xf32>
      %157 = vector.shape_cast %156 : vector<64xf32> to vector<1x64xf32>
      %158 = vector.extract_strided_slice %113 {offsets = [2, 0], sizes = [1, 64], strides = [1, 1]} : vector<8x64xf32> to vector<1x64xf32>
      %159 = vector.broadcast %158 : vector<1x64xf32> to vector<16x64xf32>
      %160 = arith.mulf %159, %86 : vector<16x64xf32>
      %161 = math.exp %160 : vector<16x64xf32>
      %162 = arith.mulf %161, %151 : vector<16x64xf32>
      %163 = vector.extract_strided_slice %118 {offsets = [2, 0, 0], sizes = [1, 16, 1], strides = [1, 1, 1]} : vector<8x16x1xf32> to vector<1x16x1xf32>
      %164 = vector.shape_cast %163 : vector<1x16x1xf32> to vector<16x1xf32>
      %165 = vector.extract_strided_slice %115 {offsets = [2, 0], sizes = [1, 64], strides = [1, 1]} : vector<8x64xf32> to vector<1x64xf32>
      %166 = vector.broadcast %164 : vector<16x1xf32> to vector<16x64xf32>
      %167 = vector.broadcast %165 : vector<1x64xf32> to vector<16x64xf32>
      %168 = arith.mulf %166, %167 : vector<16x64xf32>
      %169 = arith.addf %162, %168 : vector<16x64xf32>
      %170 = vector.extract_strided_slice %121 {offsets = [2, 0, 0], sizes = [1, 16, 1], strides = [1, 1, 1]} : vector<8x16x1xf32> to vector<1x16x1xf32>
      %171 = vector.shape_cast %170 : vector<1x16x1xf32> to vector<16x1xf32>
      %172 = vector.broadcast %171 : vector<16x1xf32> to vector<16x64xf32>
      %173 = arith.mulf %172, %169 : vector<16x64xf32>
      %cst_74 = arith.constant dense<0.000000e+00> : vector<64xf32>
      %174 = vector.multi_reduction <add>, %173, %cst_74 [0] : vector<16x64xf32> to vector<64xf32>
      %175 = vector.shape_cast %174 : vector<64xf32> to vector<1x64xf32>
      %176 = vector.extract_strided_slice %113 {offsets = [3, 0], sizes = [1, 64], strides = [1, 1]} : vector<8x64xf32> to vector<1x64xf32>
      %177 = vector.broadcast %176 : vector<1x64xf32> to vector<16x64xf32>
      %178 = arith.mulf %177, %86 : vector<16x64xf32>
      %179 = math.exp %178 : vector<16x64xf32>
      %180 = arith.mulf %179, %169 : vector<16x64xf32>
      %181 = vector.extract_strided_slice %118 {offsets = [3, 0, 0], sizes = [1, 16, 1], strides = [1, 1, 1]} : vector<8x16x1xf32> to vector<1x16x1xf32>
      %182 = vector.shape_cast %181 : vector<1x16x1xf32> to vector<16x1xf32>
      %183 = vector.extract_strided_slice %115 {offsets = [3, 0], sizes = [1, 64], strides = [1, 1]} : vector<8x64xf32> to vector<1x64xf32>
      %184 = vector.broadcast %182 : vector<16x1xf32> to vector<16x64xf32>
      %185 = vector.broadcast %183 : vector<1x64xf32> to vector<16x64xf32>
      %186 = arith.mulf %184, %185 : vector<16x64xf32>
      %187 = arith.addf %180, %186 : vector<16x64xf32>
      %188 = vector.extract_strided_slice %121 {offsets = [3, 0, 0], sizes = [1, 16, 1], strides = [1, 1, 1]} : vector<8x16x1xf32> to vector<1x16x1xf32>
      %189 = vector.shape_cast %188 : vector<1x16x1xf32> to vector<16x1xf32>
      %190 = vector.broadcast %189 : vector<16x1xf32> to vector<16x64xf32>
      %191 = arith.mulf %190, %187 : vector<16x64xf32>
      %cst_75 = arith.constant dense<0.000000e+00> : vector<64xf32>
      %192 = vector.multi_reduction <add>, %191, %cst_75 [0] : vector<16x64xf32> to vector<64xf32>
      %193 = vector.shape_cast %192 : vector<64xf32> to vector<1x64xf32>
      %194 = vector.extract_strided_slice %113 {offsets = [4, 0], sizes = [1, 64], strides = [1, 1]} : vector<8x64xf32> to vector<1x64xf32>
      %195 = vector.broadcast %194 : vector<1x64xf32> to vector<16x64xf32>
      %196 = arith.mulf %195, %86 : vector<16x64xf32>
      %197 = math.exp %196 : vector<16x64xf32>
      %198 = arith.mulf %197, %187 : vector<16x64xf32>
      %199 = vector.extract_strided_slice %118 {offsets = [4, 0, 0], sizes = [1, 16, 1], strides = [1, 1, 1]} : vector<8x16x1xf32> to vector<1x16x1xf32>
      %200 = vector.shape_cast %199 : vector<1x16x1xf32> to vector<16x1xf32>
      %201 = vector.extract_strided_slice %115 {offsets = [4, 0], sizes = [1, 64], strides = [1, 1]} : vector<8x64xf32> to vector<1x64xf32>
      %202 = vector.broadcast %200 : vector<16x1xf32> to vector<16x64xf32>
      %203 = vector.broadcast %201 : vector<1x64xf32> to vector<16x64xf32>
      %204 = arith.mulf %202, %203 : vector<16x64xf32>
      %205 = arith.addf %198, %204 : vector<16x64xf32>
      %206 = vector.extract_strided_slice %121 {offsets = [4, 0, 0], sizes = [1, 16, 1], strides = [1, 1, 1]} : vector<8x16x1xf32> to vector<1x16x1xf32>
      %207 = vector.shape_cast %206 : vector<1x16x1xf32> to vector<16x1xf32>
      %208 = vector.broadcast %207 : vector<16x1xf32> to vector<16x64xf32>
      %209 = arith.mulf %208, %205 : vector<16x64xf32>
      %cst_76 = arith.constant dense<0.000000e+00> : vector<64xf32>
      %210 = vector.multi_reduction <add>, %209, %cst_76 [0] : vector<16x64xf32> to vector<64xf32>
      %211 = vector.shape_cast %210 : vector<64xf32> to vector<1x64xf32>
      %212 = vector.extract_strided_slice %113 {offsets = [5, 0], sizes = [1, 64], strides = [1, 1]} : vector<8x64xf32> to vector<1x64xf32>
      %213 = vector.broadcast %212 : vector<1x64xf32> to vector<16x64xf32>
      %214 = arith.mulf %213, %86 : vector<16x64xf32>
      %215 = math.exp %214 : vector<16x64xf32>
      %216 = arith.mulf %215, %205 : vector<16x64xf32>
      %217 = vector.extract_strided_slice %118 {offsets = [5, 0, 0], sizes = [1, 16, 1], strides = [1, 1, 1]} : vector<8x16x1xf32> to vector<1x16x1xf32>
      %218 = vector.shape_cast %217 : vector<1x16x1xf32> to vector<16x1xf32>
      %219 = vector.extract_strided_slice %115 {offsets = [5, 0], sizes = [1, 64], strides = [1, 1]} : vector<8x64xf32> to vector<1x64xf32>
      %220 = vector.broadcast %218 : vector<16x1xf32> to vector<16x64xf32>
      %221 = vector.broadcast %219 : vector<1x64xf32> to vector<16x64xf32>
      %222 = arith.mulf %220, %221 : vector<16x64xf32>
      %223 = arith.addf %216, %222 : vector<16x64xf32>
      %224 = vector.extract_strided_slice %121 {offsets = [5, 0, 0], sizes = [1, 16, 1], strides = [1, 1, 1]} : vector<8x16x1xf32> to vector<1x16x1xf32>
      %225 = vector.shape_cast %224 : vector<1x16x1xf32> to vector<16x1xf32>
      %226 = vector.broadcast %225 : vector<16x1xf32> to vector<16x64xf32>
      %227 = arith.mulf %226, %223 : vector<16x64xf32>
      %cst_77 = arith.constant dense<0.000000e+00> : vector<64xf32>
      %228 = vector.multi_reduction <add>, %227, %cst_77 [0] : vector<16x64xf32> to vector<64xf32>
      %229 = vector.shape_cast %228 : vector<64xf32> to vector<1x64xf32>
      %230 = vector.extract_strided_slice %113 {offsets = [6, 0], sizes = [1, 64], strides = [1, 1]} : vector<8x64xf32> to vector<1x64xf32>
      %231 = vector.broadcast %230 : vector<1x64xf32> to vector<16x64xf32>
      %232 = arith.mulf %231, %86 : vector<16x64xf32>
      %233 = math.exp %232 : vector<16x64xf32>
      %234 = arith.mulf %233, %223 : vector<16x64xf32>
      %235 = vector.extract_strided_slice %118 {offsets = [6, 0, 0], sizes = [1, 16, 1], strides = [1, 1, 1]} : vector<8x16x1xf32> to vector<1x16x1xf32>
      %236 = vector.shape_cast %235 : vector<1x16x1xf32> to vector<16x1xf32>
      %237 = vector.extract_strided_slice %115 {offsets = [6, 0], sizes = [1, 64], strides = [1, 1]} : vector<8x64xf32> to vector<1x64xf32>
      %238 = vector.broadcast %236 : vector<16x1xf32> to vector<16x64xf32>
      %239 = vector.broadcast %237 : vector<1x64xf32> to vector<16x64xf32>
      %240 = arith.mulf %238, %239 : vector<16x64xf32>
      %241 = arith.addf %234, %240 : vector<16x64xf32>
      %242 = vector.extract_strided_slice %121 {offsets = [6, 0, 0], sizes = [1, 16, 1], strides = [1, 1, 1]} : vector<8x16x1xf32> to vector<1x16x1xf32>
      %243 = vector.shape_cast %242 : vector<1x16x1xf32> to vector<16x1xf32>
      %244 = vector.broadcast %243 : vector<16x1xf32> to vector<16x64xf32>
      %245 = arith.mulf %244, %241 : vector<16x64xf32>
      %cst_78 = arith.constant dense<0.000000e+00> : vector<64xf32>
      %246 = vector.multi_reduction <add>, %245, %cst_78 [0] : vector<16x64xf32> to vector<64xf32>
      %247 = vector.shape_cast %246 : vector<64xf32> to vector<1x64xf32>
      %248 = vector.extract_strided_slice %113 {offsets = [7, 0], sizes = [1, 64], strides = [1, 1]} : vector<8x64xf32> to vector<1x64xf32>
      %249 = vector.broadcast %248 : vector<1x64xf32> to vector<16x64xf32>
      %250 = arith.mulf %249, %86 : vector<16x64xf32>
      %251 = math.exp %250 : vector<16x64xf32>
      %252 = arith.mulf %251, %241 : vector<16x64xf32>
      %253 = vector.extract_strided_slice %118 {offsets = [7, 0, 0], sizes = [1, 16, 1], strides = [1, 1, 1]} : vector<8x16x1xf32> to vector<1x16x1xf32>
      %254 = vector.shape_cast %253 : vector<1x16x1xf32> to vector<16x1xf32>
      %255 = vector.extract_strided_slice %115 {offsets = [7, 0], sizes = [1, 64], strides = [1, 1]} : vector<8x64xf32> to vector<1x64xf32>
      %256 = vector.broadcast %254 : vector<16x1xf32> to vector<16x64xf32>
      %257 = vector.broadcast %255 : vector<1x64xf32> to vector<16x64xf32>
      %258 = arith.mulf %256, %257 : vector<16x64xf32>
      %259 = arith.addf %252, %258 : vector<16x64xf32>
      %260 = vector.extract_strided_slice %121 {offsets = [7, 0, 0], sizes = [1, 16, 1], strides = [1, 1, 1]} : vector<8x16x1xf32> to vector<1x16x1xf32>
      %261 = vector.shape_cast %260 : vector<1x16x1xf32> to vector<16x1xf32>
      %262 = vector.broadcast %261 : vector<16x1xf32> to vector<16x64xf32>
      %263 = arith.mulf %262, %259 : vector<16x64xf32>
      %cst_79 = arith.constant dense<0.000000e+00> : vector<64xf32>
      %264 = vector.multi_reduction <add>, %263, %cst_79 [0] : vector<16x64xf32> to vector<64xf32>
      %265 = vector.shape_cast %264 : vector<64xf32> to vector<1x64xf32>
      %266 = tpu.concatenate %139, %157, %175, %193, %211, %229, %247, %265 in 0 : vector<1x64xf32>, vector<1x64xf32>, vector<1x64xf32>, vector<1x64xf32>, vector<1x64xf32>, vector<1x64xf32>, vector<1x64xf32>, vector<1x64xf32> -> vector<8x64xf32>
      %267 = arith.index_cast %111 : i32 to index
      %c0_80 = arith.constant 0 : index
      %268 = vector.load %arg23[%267, %c0_80] : memref<64x64xf32, #tpu.memory_space<vmem>>, vector<8x64xf32>
      tpu.vector_store %arg23[%267, %c0_80], %266 {strides = array<i32>} : memref<64x64xf32, #tpu.memory_space<vmem>>, vector<8x64xf32>,
      scf.yield %259 : vector<16x64xf32>
    }
    %c8_i32_52 = arith.constant 8 : i32
    %c0_53 = arith.constant 0 : index
    %c0_54 = arith.constant 0 : index
    %90 = vector.load %arg17[%c0_53, %c0_54] : memref<16x64xf32, #tpu.memory_space<vmem>>, vector<16x64xf32>
    tpu.vector_store %arg17[%c0_53, %c0_54], %89 {strides = array<i32>} : memref<16x64xf32, #tpu.memory_space<vmem>>, vector<16x64xf32>,
    %c0_55 = arith.constant 0 : index
    %c0_56 = arith.constant 0 : index
    %91 = vector.load %arg23[%c0_55, %c0_56] : memref<64x64xf32, #tpu.memory_space<vmem>>, vector<64x64xf32>
    %c0_57 = arith.constant 0 : index
    %c0_58 = arith.constant 0 : index
    %92 = vector.load %arg13[%c0_57, %c0_58] : memref<1x64xf32, #tpu.memory_space<vmem>>, vector<1x64xf32>
    %93 = vector.broadcast %92 : vector<1x64xf32> to vector<64x64xf32>
    %94 = arith.mulf %61, %93 : vector<64x64xf32>
    %95 = arith.addf %91, %94 : vector<64x64xf32>
    %cst_59 = arith.constant 0.000000e+00 : f32
    %96 = vector.broadcast %cst_59 : f32 to vector<64x64xf32>
    %97 = arith.subf %96, %28 : vector<64x64xf32>
    %98 = math.exp %97 : vector<64x64xf32>
    %cst_60 = arith.constant 1.000000e+00 : f32
    %99 = vector.broadcast %cst_60 : f32 to vector<64x64xf32>
    %100 = arith.addf %99, %98 : vector<64x64xf32>
    %101 = tpu.reciprocal %100 {approx = true} : vector<64x64xf32> -> vector<64x64xf32>
    %102 = arith.mulf %28, %101 : vector<64x64xf32>
    %103 = arith.mulf %95, %102 : vector<64x64xf32>
    %104 = arith.truncf %103 : vector<64x64xf32> to vector<64x64xbf16>
    %c0_61 = arith.constant 0 : index
    %c0_62 = arith.constant 0 : index
    %105 = vector.load %arg14[%c0_61, %c0_62] : memref<64x32xbf16, #tpu.memory_space<vmem>>, vector<64x32xbf16>
    %cst_63 = arith.constant dense<0.000000e+00> : vector<64x32xf32>
    %106 = tpu.matmul %104, %105, %cst_63 {dimension_numbers = #tpu.dot_dimension_numbers<[1], [0], [0], [1], [0, 0, 1, 1], [], []>} : vector<64x64xbf16>, vector<64x32xbf16>, vector<64x32xf32> -> vector<64x32xf32>
    %c0_64 = arith.constant 0 : index
    %c0_65 = arith.constant 0 : index
    %c0_66 = arith.constant 0 : index
    %107 = vector.load %arg15[%c0_64, %c0_65, %c0_66] : memref<1x64x32xf32, #tpu.memory_space<vmem>>, vector<1x64x32xf32>
    %108 = vector.shape_cast %107 : vector<1x64x32xf32> to vector<64x32xf32>
    %109 = vector.shape_cast %106 : vector<64x32xf32> to vector<1x64x32xf32>
    tpu.vector_store %arg15[%c0_64, %c0_65, %c0_66], %109 {strides = array<i32>} : memref<1x64x32xf32, #tpu.memory_space<vmem>>, vector<1x64x32xf32>,
    return
  }
  func.func @transform_0(%arg0: i32, %arg1: i32) -> (i32, i32, i32) {
    %c0_i32 = arith.constant 0 : i32
    %c0_i32_0 = arith.constant 0 : i32
    return %arg0, %arg1, %c0_i32 : i32, i32, i32
  }
  func.func @transform_1(%arg0: i32, %arg1: i32) -> (i32, i32, i32) {
    %c0_i32 = arith.constant 0 : i32
    %c0_i32_0 = arith.constant 0 : i32
    return %arg0, %arg1, %c0_i32 : i32, i32, i32
  }
  func.func @transform_2(%arg0: i32, %arg1: i32) -> (i32, i32) {
    %c0_i32 = arith.constant 0 : i32
    %c0_i32_0 = arith.constant 0 : i32
    %c0_i32_1 = arith.constant 0 : i32
    return %c0_i32, %c0_i32_0 : i32, i32
  }
  func.func @transform_3(%arg0: i32, %arg1: i32) -> (i32, i32) {
    %c0_i32 = arith.constant 0 : i32
    %c0_i32_0 = arith.constant 0 : i32
    %c0_i32_1 = arith.constant 0 : i32
    return %c0_i32, %c0_i32_0 : i32, i32
  }
  func.func @transform_4(%arg0: i32, %arg1: i32) -> (i32, i32) {
    %c0_i32 = arith.constant 0 : i32
    %c0_i32_0 = arith.constant 0 : i32
    %c0_i32_1 = arith.constant 0 : i32
    return %c0_i32, %c0_i32_0 : i32, i32
  }
  func.func @transform_5(%arg0: i32, %arg1: i32) -> (i32, i32) {
    %c0_i32 = arith.constant 0 : i32
    %c0_i32_0 = arith.constant 0 : i32
    %c0_i32_1 = arith.constant 0 : i32
    return %c0_i32, %c0_i32_0 : i32, i32
  }
  func.func @transform_6(%arg0: i32, %arg1: i32) -> (i32, i32) {
    %c0_i32 = arith.constant 0 : i32
    %c0_i32_0 = arith.constant 0 : i32
    %c0_i32_1 = arith.constant 0 : i32
    return %c0_i32, %c0_i32_0 : i32, i32
  }
  func.func @transform_7(%arg0: i32, %arg1: i32) -> (i32, i32) {
    %c0_i32 = arith.constant 0 : i32
    %c0_i32_0 = arith.constant 0 : i32
    %c0_i32_1 = arith.constant 0 : i32
    return %c0_i32, %c0_i32_0 : i32, i32
  }
  func.func @transform_8(%arg0: i32, %arg1: i32) -> (i32, i32) {
    %c0_i32 = arith.constant 0 : i32
    %c0_i32_0 = arith.constant 0 : i32
    %c0_i32_1 = arith.constant 0 : i32
    return %c0_i32, %c0_i32_0 : i32, i32
  }
  func.func @transform_9(%arg0: i32, %arg1: i32) -> (i32, i32) {
    %c0_i32 = arith.constant 0 : i32
    %c0_i32_0 = arith.constant 0 : i32
    %c0_i32_1 = arith.constant 0 : i32
    return %c0_i32, %c0_i32_0 : i32, i32
  }
  func.func @transform_10(%arg0: i32, %arg1: i32) -> (i32, i32) {
    %c0_i32 = arith.constant 0 : i32
    %c0_i32_0 = arith.constant 0 : i32
    %c0_i32_1 = arith.constant 0 : i32
    return %c0_i32, %c0_i32_0 : i32, i32
  }
  func.func @transform_11(%arg0: i32, %arg1: i32) -> (i32, i32) {
    %c0_i32 = arith.constant 0 : i32
    %c0_i32_0 = arith.constant 0 : i32
    %c0_i32_1 = arith.constant 0 : i32
    return %c0_i32, %c0_i32_0 : i32, i32
  }
  func.func @transform_12(%arg0: i32, %arg1: i32) -> (i32, i32) {
    %c0_i32 = arith.constant 0 : i32
    %c0_i32_0 = arith.constant 0 : i32
    %c0_i32_1 = arith.constant 0 : i32
    return %c0_i32, %c0_i32_0 : i32, i32
  }
  func.func @transform_13(%arg0: i32, %arg1: i32) -> (i32, i32, i32) {
    %c0_i32 = arith.constant 0 : i32
    %c0_i32_0 = arith.constant 0 : i32
    return %arg0, %arg1, %c0_i32 : i32, i32, i32
  }
  func.func @transform_14(%arg0: i32, %arg1: i32) -> (i32, i32, i32) {
    %c0_i32 = arith.constant 0 : i32
    %c0_i32_0 = arith.constant 0 : i32
    return %arg0, %arg1, %c0_i32 : i32, i32, i32
  }
}

</mosaic_0001>

<llo_original>
// kernel: mamba_model_forward.2
$region0: #{mamba_model_forward.2}
  #allocation0 [shape = 'u32[]', space=smem, size = 0x4, offset = 0x4, fixed_abs, tag = 'smem constant byte address 0x4 - core index']
  #allocation1 [shape = 'u32[144,128]{1,0:T(1,128)}', space=vmem, size = 0x12000, scoped, tag = 'internal scratch']
  #allocation2 [shape = 'f32[16,64]{1,0:T(8,128)}', space=vmem, size = 0x2000, scoped, tag = 'scratch operand']
  #allocation3 [shape = 'f32[8,64]{1,0:T(8,128)}', space=vmem, size = 0x1000, scoped, tag = 'scratch operand']
  #allocation4 [shape = 'f32[64,64]{1,0:T(8,128)}', space=vmem, size = 0x8000, scoped, tag = 'scratch operand']
  #allocation5 [shape = 'f32[64,64]{1,0:T(8,128)}', space=vmem, size = 0x8000, scoped, tag = 'scratch operand']
  #allocation6 [shape = 'f32[64,16]{1,0:T(8,128)}', space=vmem, size = 0x8000, scoped, tag = 'scratch operand']
  #allocation7 [shape = 'f32[64,16]{1,0:T(8,128)}', space=vmem, size = 0x8000, scoped, tag = 'scratch operand']
  #allocation8 [shape = 'f32[64,64]{1,0:T(8,128)}', space=vmem, size = 0x8000, scoped, tag = 'scratch operand']
  %s0 = inlined_call_operand.hbm [shape: f32[2,128,32], index: 0, kind: input, shape index: {}, may-alias: {0,12}]
  %s1 = inlined_call_operand.hbm [shape: f32[1,32], index: 1, kind: input, shape index: {}]
  %s2 = inlined_call_operand.hbm [shape: bf16[32,64], index: 2, kind: input, shape index: {}]
  %s3 = inlined_call_operand.hbm [shape: bf16[32,64], index: 3, kind: input, shape index: {}]
  %s4 = inlined_call_operand.hbm [shape: f32[4,64], index: 4, kind: input, shape index: {}]
  %s5 = inlined_call_operand.hbm [shape: f32[1,64], index: 5, kind: input, shape index: {}]
  %s6 = inlined_call_operand.hbm [shape: bf16[64,34], index: 6, kind: input, shape index: {}]
  %s7 = inlined_call_operand.hbm [shape: bf16[2,64], index: 7, kind: input, shape index: {}]
  %s8 = inlined_call_operand.hbm [shape: f32[1,64], index: 8, kind: input, shape index: {}]
  %s9 = inlined_call_operand.hbm [shape: f32[16,64], index: 9, kind: input, shape index: {}]
  %s10 = inlined_call_operand.hbm [shape: f32[1,64], index: 10, kind: input, shape index: {}]
  %s11 = inlined_call_operand.hbm [shape: bf16[64,32], index: 11, kind: input, shape index: {}]
  %s12 = inlined_call_operand.hbm [shape: f32[2,128,32], index: 12, kind: output, shape index: {0}, may-alias: {0,12}]
  %s13 = inlined_call_operand.hbm [shape: f32[2,128,32], index: 13, kind: output, shape index: {1}]
  %14 = xla_tuple %s12, %s13
  %s15 = sld [smem:[#allocation0]]
  $region148: #{mamba_model_forward.2} parent=0
    _
  %s17 = ssub.s32 1, %s15
  %s18 = scalar_select 0, %s17, %s15
  $region1: #{mamba_model_forward.2} parent=0
    #allocation9 [shape = 'u8[65536]{0}', space=vmem, size = 0x10000, scoped, tag = 'input window, operand 0']
    #allocation10 [shape = 's32[2]{0}', space=sflag, size = 0x8, scoped, tag = 'scoped memory for mamba_model_forward.2']
    #allocation11 [shape = 's32[2]{0}', space=sflag, size = 0x8, scoped, tag = 'scoped memory for mamba_model_forward.2']
    #allocation12 [shape = 'u8[512]{0}', space=vmem, size = 0x400, scoped, tag = 'input window, operand 1, single buffered']
    #allocation13 [shape = 's32[1]{0}', space=sflag, size = 0x4, scoped, tag = 'scoped memory for mamba_model_forward.2']
    #allocation14 [shape = 'u8[8192]{0}', space=vmem, size = 0x2000, scoped, tag = 'input window, operand 2, single buffered']
    #allocation15 [shape = 'u8[8192]{0}', space=vmem, size = 0x2000, scoped, tag = 'input window, operand 3, single buffered']
    #allocation16 [shape = 's32[1]{0}', space=sflag, size = 0x4, scoped, tag = 'scoped memory for mamba_model_forward.2']
    #allocation17 [shape = 'u8[2048]{0}', space=vmem, size = 0x800, scoped, tag = 'input window, operand 4, single buffered']
    #allocation18 [shape = 'u8[512]{0}', space=vmem, size = 0x400, scoped, tag = 'input window, operand 5, single buffered']
    #allocation19 [shape = 's32[1]{0}', space=sflag, size = 0x4, scoped, tag = 'scoped memory for mamba_model_forward.2']
    #allocation20 [shape = 'u8[16384]{0}', space=vmem, size = 0x4000, scoped, tag = 'input window, operand 6, single buffered']
    #allocation21 [shape = 'u8[512]{0}', space=vmem, size = 0x400, scoped, tag = 'input window, operand 7, single buffered']
    #allocation22 [shape = 's32[1]{0}', space=sflag, size = 0x4, scoped, tag = 'scoped memory for mamba_model_forward.2']
    #allocation23 [shape = 'u8[512]{0}', space=vmem, size = 0x400, scoped, tag = 'input window, operand 8, single buffered']
    #allocation24 [shape = 'u8[8192]{0}', space=vmem, size = 0x2000, scoped, tag = 'input window, operand 9, single buffered']
    #allocation25 [shape = 's32[1]{0}', space=sflag, size = 0x4, scoped, tag = 'scoped memory for mamba_model_forward.2']
    #allocation26 [shape = 'u8[512]{0}', space=vmem, size = 0x400, scoped, tag = 'input window, operand 10, single buffered']
    #allocation27 [shape = 'u8[16384]{0}', space=vmem, size = 0x4000, scoped, tag = 'input window, operand 11, single buffered']
    #allocation28 [shape = 's32[1]{0}', space=sflag, size = 0x4, scoped, tag = 'scoped memory for mamba_model_forward.2']
    #allocation29 [shape = 'u8[65536]{0}', space=vmem, size = 0x10000, scoped, tag = 'output window, operand 0']
    #allocation30 [shape = 'u8[65536]{0}', space=vmem, size = 0x10000, scoped, tag = 'output window, operand 1']
    #allocation31 [shape = 's32[2]{0}', space=sflag, size = 0x8, scoped, tag = 'scoped memory for mamba_model_forward.2']
    %19 = vsyncpa [#allocation10], 0
    %s20 = scalar_lea.sflag [#allocation10], 1
    %21 = vsyncpa %s20, 0
    %22 = vsyncpa [#allocation13], 0
    %23 = vsyncpa [#allocation16], 0
    %24 = vsyncpa [#allocation19], 0
    %25 = vsyncpa [#allocation22], 0
    %26 = vsyncpa [#allocation25], 0
    %27 = vsyncpa [#allocation28], 0
    %28 = vsyncpa [#allocation11], 0
    %s29 = scalar_lea.sflag [#allocation11], 1
    %30 = vsyncpa %s29, 0
    %31 = vsyncpa [#allocation31], 0
    %s32 = scalar_lea.sflag [#allocation31], 1
    %33 = vsyncpa %s32, 0
    loop: start=0, step=1, limit=6
    $region2: #{mamba_model_forward.2} parent=1 // loop_pre_header
      _
    $region3: #{mamba_model_forward.2} parent=1 // loop_header
      %s35 = sphi 0, %s39
      %p36 = scmp.ge.s32.totalorder %s35, 6
      %s42 = sphi 0, %s54
      %s43 = sphi 0, %s50
      %s44 = sphi 0, %s42
      %s45 = sphi 0, %s43
      %s46 = sphi 0, %s44
      %s47 = sphi 0, %s45
      %s59 = sphi 0, %s61
      %s62 = sphi 0, %s59
      %s63 = sphi 0, %s62
      %s79 = sphi 0, %s63
      %s83 = sphi 0, %s83
      %s85 = sphi 0, %s83
      %s86 = sphi 0, %s85
      %s100 = sphi 0, %s86
      %s104 = sphi 0, %s104
      %s106 = sphi 0, %s104
      %s107 = sphi 0, %s106
      %s121 = sphi 0, %s107
      %s125 = sphi 0, %s125
      %s127 = sphi 0, %s125
      %s128 = sphi 0, %s127
      %s142 = sphi 0, %s128
      %s146 = sphi 0, %s146
      %s148 = sphi 0, %s146
      %s149 = sphi 0, %s148
      %s163 = sphi 0, %s149
      %s167 = sphi 0, %s167
      %s169 = sphi 0, %s167
      %s170 = sphi 0, %s169
      %s184 = sphi 0, %s170
      %s188 = sphi 0, %s188
      %s190 = sphi 0, %s188
      %s191 = sphi 0, %s190
      %s205 = sphi 0, %s191
      %s209 = sphi 0, %s209
      %s211 = sphi 0, %s209
      %s212 = sphi 0, %s211
      %s226 = sphi 0, %s212
      %s230 = sphi 0, %s230
      %s232 = sphi 0, %s230
      %s233 = sphi 0, %s232
      %s247 = sphi 0, %s233
      %s251 = sphi 0, %s251
      %s253 = sphi 0, %s251
      %s254 = sphi 0, %s253
      %s268 = sphi 0, %s254
      %s272 = sphi 0, %s272
      %s274 = sphi 0, %s272
      %s275 = sphi 0, %s274
      %s289 = sphi 0, %s275
      %s293 = sphi 0, %s293
      %s295 = sphi 0, %s293
      %s296 = sphi 0, %s295
      %s310 = sphi 0, %s296
      %s318 = sphi 0, %s320
      %s321 = sphi 0, %s318
      %s322 = sphi 0, %s321
      %s338 = sphi 0, %s322
      %s346 = sphi 0, %s348
      %s349 = sphi 0, %s346
      %s350 = sphi 0, %s349
      %s366 = sphi 0, %s350
    $region4: #{mamba_model_forward.2} parent=1 // loop_header_branch
      %38 = sbr.rel (%p36) target = $region8
    $region5: #{mamba_model_forward.2} parent=1 // loop_body
      %s40 = ssub.s32 %s35, 1
      %s41 = ssub.s32 %s35, 2
      %s48 = sadd.s32 1, %s43
      %p49 = scmp.ge.s32.totalorder %s48, 2
      %s50 = scalar_select %p49, 0, %s48
      %s51 = sadd.s32 1, %s42
      %s52 = scalar_select %p49, %s51, %s42
      %p53 = scmp.ge.s32.totalorder %s52, 2
      %s54 = scalar_select %p53, 0, %s52
      %s55 = ssub.s32 %s42, %s54
      %s56 = ssub.s32 %s43, %s50
      %s57 = sor.u32 %s55, %s56
      %p58 = scmp.eq.s32.totalorder %s57, 0
      %s60 = sadd.s32 %s59, 1
      %s61 = scalar_select %p58, %s59, %s60
      %p64 = pneg %p58
      %p65 = scmp.eq.s32.totalorder %s35, 3
      %p66 = por %p64, %p65
      %p67 = scmp.ne.s32.totalorder %s59, %s62
      %p68 = scmp.eq.s32.totalorder %s35, 0
      %p69 = por %p67, %p68
      %p70 = scmp.ne.s32.totalorder %s59, %s62
      %p71 = scmp.eq.s32.totalorder %s40, 3
      %p72 = por %p70, %p71
      %p73 = scmp.ne.s32.totalorder %s62, %s63
      %p74 = scmp.eq.s32.totalorder %s40, 0
      %p75 = por %p73, %p74
      %p76 = scmp.ne.s32.totalorder %s62, %s63
      %p77 = scmp.eq.s32.totalorder %s41, 3
      %p78 = por %p76, %p77
      %p80 = scmp.ne.s32.totalorder %s63, %s79
      %p81 = scmp.eq.s32.totalorder %s41, 0
      %p82 = por %p80, %p81
      %s84 = sadd.s32 %s83, 1
      %p87 = scmp.eq.s32.totalorder %s35, 3
      %p88 = scmp.ne.s32.totalorder %s83, %s85
      %p89 = scmp.eq.s32.totalorder %s35, 0
      %p90 = por %p88, %p89
      %p91 = scmp.ne.s32.totalorder %s83, %s85
      %p92 = scmp.eq.s32.totalorder %s40, 3
      %p93 = por %p91, %p92
      %p94 = scmp.ne.s32.totalorder %s85, %s86
      %p95 = scmp.eq.s32.totalorder %s40, 0
      %p96 = por %p94, %p95
      %p97 = scmp.ne.s32.totalorder %s85, %s86
      %p98 = scmp.eq.s32.totalorder %s41, 3
      %p99 = por %p97, %p98
      %p101 = scmp.ne.s32.totalorder %s86, %s100
      %p102 = scmp.eq.s32.totalorder %s41, 0
      %p103 = por %p101, %p102
      %s105 = sadd.s32 %s104, 1
      %p108 = scmp.eq.s32.totalorder %s35, 3
      %p109 = scmp.ne.s32.totalorder %s104, %s106
      %p110 = scmp.eq.s32.totalorder %s35, 0
      %p111 = por %p109, %p110
      %p112 = scmp.ne.s32.totalorder %s104, %s106
      %p113 = scmp.eq.s32.totalorder %s40, 3
      %p114 = por %p112, %p113
      %p115 = scmp.ne.s32.totalorder %s106, %s107
      %p116 = scmp.eq.s32.totalorder %s40, 0
      %p117 = por %p115, %p116
      %p118 = scmp.ne.s32.totalorder %s106, %s107
      %p119 = scmp.eq.s32.totalorder %s41, 3
      %p120 = por %p118, %p119
      %p122 = scmp.ne.s32.totalorder %s107, %s121
      %p123 = scmp.eq.s32.totalorder %s41, 0
      %p124 = por %p122, %p123
      %s126 = sadd.s32 %s125, 1
      %p129 = scmp.eq.s32.totalorder %s35, 3
      %p130 = scmp.ne.s32.totalorder %s125, %s127
      %p131 = scmp.eq.s32.totalorder %s35, 0
      %p132 = por %p130, %p131
      %p133 = scmp.ne.s32.totalorder %s125, %s127
      %p134 = scmp.eq.s32.totalorder %s40, 3
      %p135 = por %p133, %p134
      %p136 = scmp.ne.s32.totalorder %s127, %s128
      %p137 = scmp.eq.s32.totalorder %s40, 0
      %p138 = por %p136, %p137
      %p139 = scmp.ne.s32.totalorder %s127, %s128
      %p140 = scmp.eq.s32.totalorder %s41, 3
      %p141 = por %p139, %p140
      %p143 = scmp.ne.s32.totalorder %s128, %s142
      %p144 = scmp.eq.s32.totalorder %s41, 0
      %p145 = por %p143, %p144
      %s147 = sadd.s32 %s146, 1
      %p150 = scmp.eq.s32.totalorder %s35, 3
      %p151 = scmp.ne.s32.totalorder %s146, %s148
      %p152 = scmp.eq.s32.totalorder %s35, 0
      %p153 = por %p151, %p152
      %p154 = scmp.ne.s32.totalorder %s146, %s148
      %p155 = scmp.eq.s32.totalorder %s40, 3
      %p156 = por %p154, %p155
      %p157 = scmp.ne.s32.totalorder %s148, %s149
      %p158 = scmp.eq.s32.totalorder %s40, 0
      %p159 = por %p157, %p158
      %p160 = scmp.ne.s32.totalorder %s148, %s149
      %p161 = scmp.eq.s32.totalorder %s41, 3
      %p162 = por %p160, %p161
      %p164 = scmp.ne.s32.totalorder %s149, %s163
      %p165 = scmp.eq.s32.totalorder %s41, 0
      %p166 = por %p164, %p165
      %s168 = sadd.s32 %s167, 1
      %p171 = scmp.eq.s32.totalorder %s35, 3
      %p172 = scmp.ne.s32.totalorder %s167, %s169
      %p173 = scmp.eq.s32.totalorder %s35, 0
      %p174 = por %p172, %p173
      %p175 = scmp.ne.s32.totalorder %s167, %s169
      %p176 = scmp.eq.s32.totalorder %s40, 3
      %p177 = por %p175, %p176
      %p178 = scmp.ne.s32.totalorder %s169, %s170
      %p179 = scmp.eq.s32.totalorder %s40, 0
      %p180 = por %p178, %p179
      %p181 = scmp.ne.s32.totalorder %s169, %s170
      %p182 = scmp.eq.s32.totalorder %s41, 3
      %p183 = por %p181, %p182
      %p185 = scmp.ne.s32.totalorder %s170, %s184
      %p186 = scmp.eq.s32.totalorder %s41, 0
      %p187 = por %p185, %p186
      %s189 = sadd.s32 %s188, 1
      %p192 = scmp.eq.s32.totalorder %s35, 3
      %p193 = scmp.ne.s32.totalorder %s188, %s190
      %p194 = scmp.eq.s32.totalorder %s35, 0
      %p195 = por %p193, %p194
      %p196 = scmp.ne.s32.totalorder %s188, %s190
      %p197 = scmp.eq.s32.totalorder %s40, 3
      %p198 = por %p196, %p197
      %p199 = scmp.ne.s32.totalorder %s190, %s191
      %p200 = scmp.eq.s32.totalorder %s40, 0
      %p201 = por %p199, %p200
      %p202 = scmp.ne.s32.totalorder %s190, %s191
      %p203 = scmp.eq.s32.totalorder %s41, 3
      %p204 = por %p202, %p203
      %p206 = scmp.ne.s32.totalorder %s191, %s205
      %p207 = scmp.eq.s32.totalorder %s41, 0
      %p208 = por %p206, %p207
      %s210 = sadd.s32 %s209, 1
      %p213 = scmp.eq.s32.totalorder %s35, 3
      %p214 = scmp.ne.s32.totalorder %s209, %s211
      %p215 = scmp.eq.s32.totalorder %s35, 0
      %p216 = por %p214, %p215
      %p217 = scmp.ne.s32.totalorder %s209, %s211
      %p218 = scmp.eq.s32.totalorder %s40, 3
      %p219 = por %p217, %p218
      %p220 = scmp.ne.s32.totalorder %s211, %s212
      %p221 = scmp.eq.s32.totalorder %s40, 0
      %p222 = por %p220, %p221
      %p223 = scmp.ne.s32.totalorder %s211, %s212
      %p224 = scmp.eq.s32.totalorder %s41, 3
      %p225 = por %p223, %p224
      %p227 = scmp.ne.s32.totalorder %s212, %s226
      %p228 = scmp.eq.s32.totalorder %s41, 0
      %p229 = por %p227, %p228
      %s231 = sadd.s32 %s230, 1
      %p234 = scmp.eq.s32.totalorder %s35, 3
      %p235 = scmp.ne.s32.totalorder %s230, %s232
      %p236 = scmp.eq.s32.totalorder %s35, 0
      %p237 = por %p235, %p236
      %p238 = scmp.ne.s32.totalorder %s230, %s232
      %p239 = scmp.eq.s32.totalorder %s40, 3
      %p240 = por %p238, %p239
      %p241 = scmp.ne.s32.totalorder %s232, %s233
      %p242 = scmp.eq.s32.totalorder %s40, 0
      %p243 = por %p241, %p242
      %p244 = scmp.ne.s32.totalorder %s232, %s233
      %p245 = scmp.eq.s32.totalorder %s41, 3
      %p246 = por %p244, %p245
      %p248 = scmp.ne.s32.totalorder %s233, %s247
      %p249 = scmp.eq.s32.totalorder %s41, 0
      %p250 = por %p248, %p249
      %s252 = sadd.s32 %s251, 1
      %p255 = scmp.eq.s32.totalorder %s35, 3
      %p256 = scmp.ne.s32.totalorder %s251, %s253
      %p257 = scmp.eq.s32.totalorder %s35, 0
      %p258 = por %p256, %p257
      %p259 = scmp.ne.s32.totalorder %s251, %s253
      %p260 = scmp.eq.s32.totalorder %s40, 3
      %p261 = por %p259, %p260
      %p262 = scmp.ne.s32.totalorder %s253, %s254
      %p263 = scmp.eq.s32.totalorder %s40, 0
      %p264 = por %p262, %p263
      %p265 = scmp.ne.s32.totalorder %s253, %s254
      %p266 = scmp.eq.s32.totalorder %s41, 3
      %p267 = por %p265, %p266
      %p269 = scmp.ne.s32.totalorder %s254, %s268
      %p270 = scmp.eq.s32.totalorder %s41, 0
      %p271 = por %p269, %p270
      %s273 = sadd.s32 %s272, 1
      %p276 = scmp.eq.s32.totalorder %s35, 3
      %p277 = scmp.ne.s32.totalorder %s272, %s274
      %p278 = scmp.eq.s32.totalorder %s35, 0
      %p279 = por %p277, %p278
      %p280 = scmp.ne.s32.totalorder %s272, %s274
      %p281 = scmp.eq.s32.totalorder %s40, 3
      %p282 = por %p280, %p281
      %p283 = scmp.ne.s32.totalorder %s274, %s275
      %p284 = scmp.eq.s32.totalorder %s40, 0
      %p285 = por %p283, %p284
      %p286 = scmp.ne.s32.totalorder %s274, %s275
      %p287 = scmp.eq.s32.totalorder %s41, 3
      %p288 = por %p286, %p287
      %p290 = scmp.ne.s32.totalorder %s275, %s289
      %p291 = scmp.eq.s32.totalorder %s41, 0
      %p292 = por %p290, %p291
      %s294 = sadd.s32 %s293, 1
      %p297 = scmp.eq.s32.totalorder %s35, 3
      %p298 = scmp.ne.s32.totalorder %s293, %s295
      %p299 = scmp.eq.s32.totalorder %s35, 0
      %p300 = por %p298, %p299
      %p301 = scmp.ne.s32.totalorder %s293, %s295
      %p302 = scmp.eq.s32.totalorder %s40, 3
      %p303 = por %p301, %p302
      %p304 = scmp.ne.s32.totalorder %s295, %s296
      %p305 = scmp.eq.s32.totalorder %s40, 0
      %p306 = por %p304, %p305
      %p307 = scmp.ne.s32.totalorder %s295, %s296
      %p308 = scmp.eq.s32.totalorder %s41, 3
      %p309 = por %p307, %p308
      %p311 = scmp.ne.s32.totalorder %s296, %s310
      %p312 = scmp.eq.s32.totalorder %s41, 0
      %p313 = por %p311, %p312
      %s314 = ssub.s32 %s42, %s54
      %s315 = ssub.s32 %s43, %s50
      %s316 = sor.u32 %s314, %s315
      %p317 = scmp.eq.s32.totalorder %s316, 0
      %s319 = sadd.s32 %s318, 1
      %s320 = scalar_select %p317, %s318, %s319
      %p323 = pneg %p317
      %p324 = scmp.eq.s32.totalorder %s35, 3
      %p325 = por %p323, %p324
      %p326 = scmp.ne.s32.totalorder %s318, %s321
      %p327 = scmp.eq.s32.totalorder %s35, 0
      %p328 = por %p326, %p327
      %p329 = scmp.ne.s32.totalorder %s318, %s321
      %p330 = scmp.eq.s32.totalorder %s40, 3
      %p331 = por %p329, %p330
      %p332 = scmp.ne.s32.totalorder %s321, %s322
      %p333 = scmp.eq.s32.totalorder %s40, 0
      %p334 = por %p332, %p333
      %p335 = scmp.ne.s32.totalorder %s321, %s322
      %p336 = scmp.eq.s32.totalorder %s41, 3
      %p337 = por %p335, %p336
      %p339 = scmp.ne.s32.totalorder %s322, %s338
      %p340 = scmp.eq.s32.totalorder %s41, 0
      %p341 = por %p339, %p340
      %s342 = ssub.s32 %s42, %s54
      %s343 = ssub.s32 %s43, %s50
      %s344 = sor.u32 %s342, %s343
      %p345 = scmp.eq.s32.totalorder %s344, 0
      %s347 = sadd.s32 %s346, 1
      %s348 = scalar_select %p345, %s346, %s347
      %p351 = pneg %p345
      %p352 = scmp.eq.s32.totalorder %s35, 3
      %p353 = por %p351, %p352
      %p354 = scmp.ne.s32.totalorder %s346, %s349
      %p355 = scmp.eq.s32.totalorder %s35, 0
      %p356 = por %p354, %p355
      %p357 = scmp.ne.s32.totalorder %s346, %s349
      %p358 = scmp.eq.s32.totalorder %s40, 3
      %p359 = por %p357, %p358
      %p360 = scmp.ne.s32.totalorder %s349, %s350
      %p361 = scmp.eq.s32.totalorder %s40, 0
      %p362 = por %p360, %p361
      %p363 = scmp.ne.s32.totalorder %s349, %s350
      %p364 = scmp.eq.s32.totalorder %s41, 3
      %p365 = por %p363, %p364
      %p367 = scmp.ne.s32.totalorder %s350, %s366
      %p368 = scmp.eq.s32.totalorder %s41, 0
      %p369 = por %p367, %p368
      %p370 = scmp.le.s32.totalorder 1, %s35
      %p371 = scmp.lt.s32.totalorder %s35, 5
      %p372 = pnand %p370, %p371
      %p373 = pneg %p372
      // Predicated region
      $region9: #{mamba_model_forward.2} parent=5 // pred_check
        _
      $region10: #{mamba_model_forward.2} parent=5 // pred_check_branch
        %375 = sbr.rel (%p372) target = $region12
      $region11: #{mamba_model_forward.2} parent=5 // pred_region
        %s376 = ssub.s32 %s35, 1
        // Predicated region
        $region13: #{mamba_model_forward.2} parent=11 // pred_check
          %p377 = pneg %p96
        $region14: #{mamba_model_forward.2} parent=11 // pred_check_branch
          %379 = sbr.rel (%p377) target = $region16
        $region15: #{mamba_model_forward.2} parent=11 // pred_region
          %s381 = ssub.s32 16, 16
          %382 = vsyncadd [#allocation13], %s381
          %s384 = sshll.u32 [#allocation12], 4
          %s385 = int_to_ptr.vmem [resolvable:$true] %s384
          %387 = dma.hbm_to_vmem [thread:$0]  %s1, 16, %s385, [#allocation13]
        $region16: #{mamba_model_forward.2} parent=11 // pred_fallthru
          _
        // Predicated region
        $region17: #{mamba_model_forward.2} parent=11 // pred_check
          %p388 = pneg %p117
        $region18: #{mamba_model_forward.2} parent=11 // pred_check_branch
          %390 = sbr.rel (%p388) target = $region20
        $region19: #{mamba_model_forward.2} parent=11 // pred_region
          %s392 = ssub.s32 256, 256
          %393 = vsyncadd [#allocation13], %s392
          %s394 = sshll.u32 [#allocation14], 4
          %s395 = int_to_ptr.vmem [resolvable:$true] %s394
          %400 = dma.hbm_to_vmem [thread:$0]  %s2, 256, %s395, [#allocation13], 64, 64, 4
        $region20: #{mamba_model_forward.2} parent=11 // pred_fallthru
          _
        // Predicated region
        $region21: #{mamba_model_forward.2} parent=11 // pred_check
          %p401 = pneg %p138
        $region22: #{mamba_model_forward.2} parent=11 // pred_check_branch
          %403 = sbr.rel (%p401) target = $region24
        $region23: #{mamba_model_forward.2} parent=11 // pred_region
          %s405 = ssub.s32 256, 256
          %406 = vsyncadd [#allocation16], %s405
          %s407 = sshll.u32 [#allocation15], 4
          %s408 = int_to_ptr.vmem [resolvable:$true] %s407
          %413 = dma.hbm_to_vmem [thread:$0]  %s3, 256, %s408, [#allocation16], 64, 64, 4
        $region24: #{mamba_model_forward.2} parent=11 // pred_fallthru
          _
        // Predicated region
        $region25: #{mamba_model_forward.2} parent=11 // pred_check
          %p414 = pneg %p159
        $region26: #{mamba_model_forward.2} parent=11 // pred_check_branch
          %416 = sbr.rel (%p414) target = $region28
        $region27: #{mamba_model_forward.2} parent=11 // pred_region
          %s418 = ssub.s32 64, 64
          %419 = vsyncadd [#allocation16], %s418
          %s421 = sshll.u32 [#allocation17], 4
          %s422 = int_to_ptr.vmem [resolvable:$true] %s421
          %424 = dma.hbm_to_vmem [thread:$0]  %s4, 64, %s422, [#allocation16]
        $region28: #{mamba_model_forward.2} parent=11 // pred_fallthru
          _
        // Predicated region
        $region29: #{mamba_model_forward.2} parent=11 // pred_check
          %p425 = pneg %p180
        $region30: #{mamba_model_forward.2} parent=11 // pred_check_branch
          %427 = sbr.rel (%p425) target = $region32
        $region31: #{mamba_model_forward.2} parent=11 // pred_region
          %s429 = ssub.s32 16, 16
          %430 = vsyncadd [#allocation19], %s429
          %s432 = sshll.u32 [#allocation18], 4
          %s433 = int_to_ptr.vmem [resolvable:$true] %s432
          %435 = dma.hbm_to_vmem [thread:$0]  %s5, 16, %s433, [#allocation19]
        $region32: #{mamba_model_forward.2} parent=11 // pred_fallthru
          _
        // Predicated region
        $region33: #{mamba_model_forward.2} parent=11 // pred_check
          %p436 = pneg %p201
        $region34: #{mamba_model_forward.2} parent=11 // pred_check_branch
          %438 = sbr.rel (%p436) target = $region36
        $region35: #{mamba_model_forward.2} parent=11 // pred_region
          %s440 = ssub.s32 512, 512
          %441 = vsyncadd [#allocation19], %s440
          %s442 = sshll.u32 [#allocation20], 4
          %s443 = int_to_ptr.vmem [resolvable:$true] %s442
          %448 = dma.hbm_to_vmem [thread:$0]  %s6, 512, %s443, [#allocation19], 64, 64, 4
        $region36: #{mamba_model_forward.2} parent=11 // pred_fallthru
          _
        // Predicated region
        $region37: #{mamba_model_forward.2} parent=11 // pred_check
          %p449 = pneg %p222
        $region38: #{mamba_model_forward.2} parent=11 // pred_check_branch
          %451 = sbr.rel (%p449) target = $region40
        $region39: #{mamba_model_forward.2} parent=11 // pred_region
          %s453 = ssub.s32 16, 16
          %454 = vsyncadd [#allocation22], %s453
          %s456 = sshll.u32 [#allocation21], 4
          %s457 = int_to_ptr.vmem [resolvable:$true] %s456
          %459 = dma.hbm_to_vmem [thread:$0]  %s7, 16, %s457, [#allocation22]
        $region40: #{mamba_model_forward.2} parent=11 // pred_fallthru
          _
        // Predicated region
        $region41: #{mamba_model_forward.2} parent=11 // pred_check
          %p460 = pneg %p243
        $region42: #{mamba_model_forward.2} parent=11 // pred_check_branch
          %462 = sbr.rel (%p460) target = $region44
        $region43: #{mamba_model_forward.2} parent=11 // pred_region
          %s464 = ssub.s32 16, 16
          %465 = vsyncadd [#allocation22], %s464
          %s467 = sshll.u32 [#allocation23], 4
          %s468 = int_to_ptr.vmem [resolvable:$true] %s467
          %470 = dma.hbm_to_vmem [thread:$0]  %s8, 16, %s468, [#allocation22]
        $region44: #{mamba_model_forward.2} parent=11 // pred_fallthru
          _
        // Predicated region
        $region45: #{mamba_model_forward.2} parent=11 // pred_check
          %p471 = pneg %p264
        $region46: #{mamba_model_forward.2} parent=11 // pred_check_branch
          %473 = sbr.rel (%p471) target = $region48
        $region47: #{mamba_model_forward.2} parent=11 // pred_region
          %s475 = ssub.s32 256, 256
          %476 = vsyncadd [#allocation25], %s475
          %s477 = sshll.u32 [#allocation24], 4
          %s478 = int_to_ptr.vmem [resolvable:$true] %s477
          %483 = dma.hbm_to_vmem [thread:$0]  %s9, 256, %s478, [#allocation25], 128, 128, 8
        $region48: #{mamba_model_forward.2} parent=11 // pred_fallthru
          _
        // Predicated region
        $region49: #{mamba_model_forward.2} parent=11 // pred_check
          %p484 = pneg %p285
        $region50: #{mamba_model_forward.2} parent=11 // pred_check_branch
          %486 = sbr.rel (%p484) target = $region52
        $region51: #{mamba_model_forward.2} parent=11 // pred_region
          %s488 = ssub.s32 16, 16
          %489 = vsyncadd [#allocation25], %s488
          %s491 = sshll.u32 [#allocation26], 4
          %s492 = int_to_ptr.vmem [resolvable:$true] %s491
          %494 = dma.hbm_to_vmem [thread:$0]  %s10, 16, %s492, [#allocation25]
        $region52: #{mamba_model_forward.2} parent=11 // pred_fallthru
          _
        // Predicated region
        $region53: #{mamba_model_forward.2} parent=11 // pred_check
          %p495 = pneg %p306
        $region54: #{mamba_model_forward.2} parent=11 // pred_check_branch
          %497 = sbr.rel (%p495) target = $region56
        $region55: #{mamba_model_forward.2} parent=11 // pred_region
          %s499 = ssub.s32 512, 512
          %500 = vsyncadd [#allocation28], %s499
          %s501 = sshll.u32 [#allocation27], 4
          %s502 = int_to_ptr.vmem [resolvable:$true] %s501
          %507 = dma.hbm_to_vmem [thread:$0]  %s11, 512, %s502, [#allocation28], 64, 64, 4
        $region56: #{mamba_model_forward.2} parent=11 // pred_fallthru
          _
      $region12: #{mamba_model_forward.2} parent=5 // pred_fallthru
        _
      %p508 = scmp.lt.s32.totalorder %s35, 4
      // Predicated region
      $region57: #{mamba_model_forward.2} parent=5 // pred_check
        %p509 = pneg %p508
      $region58: #{mamba_model_forward.2} parent=5 // pred_check_branch
        %511 = sbr.rel (%p509) target = $region60
      $region59: #{mamba_model_forward.2} parent=5 // pred_region
        // Predicated region
        $region61: #{mamba_model_forward.2} parent=59 // pred_check
          %p512 = pneg %p69
        $region62: #{mamba_model_forward.2} parent=59 // pred_check_branch
          %514 = sbr.rel (%p512) target = $region64
        $region63: #{mamba_model_forward.2} parent=59 // pred_region
          %s515 = sand.u32 %s59, 1
          %s516 = scalar_lea.sflag [#allocation10], %s515
          %s517 = sand.u32 %s59, 1
          %s518 = smul.addr %s517, 64
          %s519 = scalar_lea.vmem [#allocation9], %s518
          %s520 = smul.u32 8, %s43
          %s522 = ssub.s32 1024, 1024
          %523 = vsyncadd %s516, %s522
          %s524 = smul.addr %s42, 16
          %s525 = sadd.s32 %s520, %s524
          %s526 = smul.addr %s525, 128
          %s527 = scalar_lea.hbm %s0, %s526
          %s528 = sshll.u32 %s519, 4
          %s529 = int_to_ptr.vmem [resolvable:$true] %s528
          %534 = dma.hbm_to_vmem [thread:$0]  %s527, 1024, %s529, %s516, 128, 128, 8
        $region64: #{mamba_model_forward.2} parent=59 // pred_fallthru
          _
      $region60: #{mamba_model_forward.2} parent=5 // pred_fallthru
        _
      %p535 = scmp.le.s32.totalorder 1, %s35
      %p536 = scmp.lt.s32.totalorder %s35, 5
      %p537 = pnand %p535, %p536
      %p538 = pneg %p537
      // Predicated region
      $region65: #{mamba_model_forward.2} parent=5 // pred_check
        _
      $region66: #{mamba_model_forward.2} parent=5 // pred_check_branch
        %540 = sbr.rel (%p537) target = $region68
      $region67: #{mamba_model_forward.2} parent=5 // pred_region
        %s541 = ssub.s32 %s35, 1
        %s542 = sand.u32 %s62, 1
        %s543 = scalar_lea.sflag [#allocation10], %s542
        %s544 = sand.u32 %s62, 1
        %s545 = smul.addr %s544, 64
        %s546 = scalar_lea.vmem [#allocation9], %s545
        // Predicated region
        $region69: #{mamba_model_forward.2} parent=67 // pred_check
          %p547 = pneg %p75
        $region70: #{mamba_model_forward.2} parent=67 // pred_check_branch
          %549 = sbr.rel (%p547) target = $region72
        $region71: #{mamba_model_forward.2} parent=67 // pred_region
          %550 = dma.done %s543, 1024
        $region72: #{mamba_model_forward.2} parent=67 // pred_fallthru
          _
        // Predicated region
        $region73: #{mamba_model_forward.2} parent=67 // pred_check
          %p551 = pneg %p96
        $region74: #{mamba_model_forward.2} parent=67 // pred_check_branch
          %553 = sbr.rel (%p551) target = $region76
        $region75: #{mamba_model_forward.2} parent=67 // pred_region
          %554 = dma.done [#allocation13], 16
        $region76: #{mamba_model_forward.2} parent=67 // pred_fallthru
          _
        // Predicated region
        $region77: #{mamba_model_forward.2} parent=67 // pred_check
          %p555 = pneg %p117
        $region78: #{mamba_model_forward.2} parent=67 // pred_check_branch
          %557 = sbr.rel (%p555) target = $region80
        $region79: #{mamba_model_forward.2} parent=67 // pred_region
          %558 = dma.done [#allocation13], 256
        $region80: #{mamba_model_forward.2} parent=67 // pred_fallthru
          _
        // Predicated region
        $region81: #{mamba_model_forward.2} parent=67 // pred_check
          %p559 = pneg %p138
        $region82: #{mamba_model_forward.2} parent=67 // pred_check_branch
          %561 = sbr.rel (%p559) target = $region84
        $region83: #{mamba_model_forward.2} parent=67 // pred_region
          %562 = dma.done [#allocation16], 256
        $region84: #{mamba_model_forward.2} parent=67 // pred_fallthru
          _
        // Predicated region
        $region85: #{mamba_model_forward.2} parent=67 // pred_check
          %p563 = pneg %p159
        $region86: #{mamba_model_forward.2} parent=67 // pred_check_branch
          %565 = sbr.rel (%p563) target = $region88
        $region87: #{mamba_model_forward.2} parent=67 // pred_region
          %566 = dma.done [#allocation16], 64
        $region88: #{mamba_model_forward.2} parent=67 // pred_fallthru
          _
        // Predicated region
        $region89: #{mamba_model_forward.2} parent=67 // pred_check
          %p567 = pneg %p180
        $region90: #{mamba_model_forward.2} parent=67 // pred_check_branch
          %569 = sbr.rel (%p567) target = $region92
        $region91: #{mamba_model_forward.2} parent=67 // pred_region
          %570 = dma.done [#allocation19], 16
        $region92: #{mamba_model_forward.2} parent=67 // pred_fallthru
          _
        // Predicated region
        $region93: #{mamba_model_forward.2} parent=67 // pred_check
          %p571 = pneg %p201
        $region94: #{mamba_model_forward.2} parent=67 // pred_check_branch
          %573 = sbr.rel (%p571) target = $region96
        $region95: #{mamba_model_forward.2} parent=67 // pred_region
          %574 = dma.done [#allocation19], 512
        $region96: #{mamba_model_forward.2} parent=67 // pred_fallthru
          _
        // Predicated region
        $region97: #{mamba_model_forward.2} parent=67 // pred_check
          %p575 = pneg %p222
        $region98: #{mamba_model_forward.2} parent=67 // pred_check_branch
          %577 = sbr.rel (%p575) target = $region100
        $region99: #{mamba_model_forward.2} parent=67 // pred_region
          %578 = dma.done [#allocation22], 16
        $region100: #{mamba_model_forward.2} parent=67 // pred_fallthru
          _
        // Predicated region
        $region101: #{mamba_model_forward.2} parent=67 // pred_check
          %p579 = pneg %p243
        $region102: #{mamba_model_forward.2} parent=67 // pred_check_branch
          %581 = sbr.rel (%p579) target = $region104
        $region103: #{mamba_model_forward.2} parent=67 // pred_region
          %582 = dma.done [#allocation22], 16
        $region104: #{mamba_model_forward.2} parent=67 // pred_fallthru
          _
        // Predicated region
        $region105: #{mamba_model_forward.2} parent=67 // pred_check
          %p583 = pneg %p264
        $region106: #{mamba_model_forward.2} parent=67 // pred_check_branch
          %585 = sbr.rel (%p583) target = $region108
        $region107: #{mamba_model_forward.2} parent=67 // pred_region
          %586 = dma.done [#allocation25], 256
        $region108: #{mamba_model_forward.2} parent=67 // pred_fallthru
          _
        // Predicated region
        $region109: #{mamba_model_forward.2} parent=67 // pred_check
          %p587 = pneg %p285
        $region110: #{mamba_model_forward.2} parent=67 // pred_check_branch
          %589 = sbr.rel (%p587) target = $region112
        $region111: #{mamba_model_forward.2} parent=67 // pred_region
          %590 = dma.done [#allocation25], 16
        $region112: #{mamba_model_forward.2} parent=67 // pred_fallthru
          _
        // Predicated region
        $region113: #{mamba_model_forward.2} parent=67 // pred_check
          %p591 = pneg %p306
        $region114: #{mamba_model_forward.2} parent=67 // pred_check_branch
          %593 = sbr.rel (%p591) target = $region116
        $region115: #{mamba_model_forward.2} parent=67 // pred_region
          %594 = dma.done [#allocation28], 512
        $region116: #{mamba_model_forward.2} parent=67 // pred_fallthru
          _
        %s595 = sand.u32 %s62, 1
        %s596 = scalar_lea.sflag [#allocation10], %s595
        %s597 = sand.u32 %s62, 1
        %s598 = smul.addr %s597, 64
        %s599 = scalar_lea.vmem [#allocation9], %s598
        %p600 = pneg %p75
        %p601 = pneg %p72
        %p602 = pneg %p96
        %p603 = pneg %p93
        %p604 = pneg %p117
        %p605 = pneg %p114
        %p606 = pneg %p138
        %p607 = pneg %p135
        %p608 = pneg %p159
        %p609 = pneg %p156
        %p610 = pneg %p180
        %p611 = pneg %p177
        %p612 = pneg %p201
        %p613 = pneg %p198
        %p614 = pneg %p222
        %p615 = pneg %p219
        %p616 = pneg %p243
        %p617 = pneg %p240
        %p618 = pneg %p264
        %p619 = pneg %p261
        %p620 = pneg %p285
        %p621 = pneg %p282
        %p622 = pneg %p306
        %p623 = pneg %p303
        %p624 = pneg %p334
        %p625 = pneg %p331
        %s626 = sand.u32 %s321, 1
        %s627 = scalar_lea.sflag [#allocation11], %s626
        %s628 = sand.u32 %s321, 1
        %s629 = smul.addr %s628, 64
        %s630 = scalar_lea.vmem [#allocation29], %s629
        %p631 = pneg %p362
        %p632 = pneg %p359
        %s633 = sand.u32 %s349, 1
        %s634 = scalar_lea.sflag [#allocation31], %s633
        %s635 = sand.u32 %s349, 1
        %s636 = smul.addr %s635, 64
        %s637 = scalar_lea.vmem [#allocation30], %s636
        %s638 = smul.u32 8, %s45
        %s639 = smul.u32 8, %s45
        %s640 = smul.u32 8, %s45
        %p642 = scmp.eq.s32.totalorder %s45, 0
        // Predicated region
        $region117: #{mamba_model_forward.2} parent=67 // pred_check
          %p643 = pneg %p642
        $region118: #{mamba_model_forward.2} parent=67 // pred_check_branch
          %645 = sbr.rel (%p643) target = $region120
        $region119: #{mamba_model_forward.2} parent=67 // pred_region
          %vm646 = vcmask 523264
          %647 = vst.msk [vmem:[#allocation2] sm:$0xff] %vm646, 0.0
          %648 = vst.msk [vmem:[#allocation2 + $0x8] sm:$0xff] %vm646, 0.0
          %649 = vst.msk [vmem:[#allocation3] sm:$0xff] %vm646, 0.0
        $region120: #{mamba_model_forward.2} parent=67 // pred_fallthru
          _
        %v650 = vld [vmem:[%s546] sm:$0xff]
        %v651 = vld [vmem:[%s546 + $0x8] sm:$0xff]
        %v652 = vld [vmem:[%s546 + $0x10] sm:$0xff]
        %v653 = vld [vmem:[%s546 + $0x18] sm:$0xff]
        %v654 = vld [vmem:[%s546 + $0x20] sm:$0xff]
        %v655 = vld [vmem:[%s546 + $0x28] sm:$0xff]
        %v656 = vld [vmem:[%s546 + $0x30] sm:$0xff]
        %v657 = vld [vmem:[%s546 + $0x38] sm:$0xff]
        %vm658 = vcmask 261120
        %659 = vst.msk [vmem:[%s637] sm:$0xff] %vm658, %v650
        %660 = vst.msk [vmem:[%s637 + $0x8] sm:$0xff] %vm658, %v651
        %661 = vst.msk [vmem:[%s637 + $0x10] sm:$0xff] %vm658, %v652
        %662 = vst.msk [vmem:[%s637 + $0x18] sm:$0xff] %vm658, %v653
        %663 = vst.msk [vmem:[%s637 + $0x20] sm:$0xff] %vm658, %v654
        %664 = vst.msk [vmem:[%s637 + $0x28] sm:$0xff] %vm658, %v655
        %665 = vst.msk [vmem:[%s637 + $0x30] sm:$0xff] %vm658, %v656
        %666 = vst.msk [vmem:[%s637 + $0x38] sm:$0xff] %vm658, %v657
        %v667 = vmul.f32 %v650, %v650
        %v668 = vmul.f32 %v651, %v651
        %v669 = vmul.f32 %v652, %v652
        %v670 = vmul.f32 %v653, %v653
        %v671 = vmul.f32 %v654, %v654
        %v672 = vmul.f32 %v655, %v655
        %v673 = vmul.f32 %v656, %v656
        %v674 = vmul.f32 %v657, %v657
        %v675 = vsel %vm658, %v667, 0.0
        %676 = vadd.xlane.f32.xlu0 %v675
        %v677 = vpop.xlane.xlu0 %676
        %v678 = vsel %vm658, %v668, 0.0
        %679 = vadd.xlane.f32.xlu0 %v678
        %v680 = vpop.xlane.xlu0 %679
        %v681 = vsel %vm658, %v669, 0.0
        %682 = vadd.xlane.f32.xlu0 %v681
        %v683 = vpop.xlane.xlu0 %682
        %v684 = vsel %vm658, %v670, 0.0
        %685 = vadd.xlane.f32.xlu0 %v684
        %v686 = vpop.xlane.xlu0 %685
        %v687 = vsel %vm658, %v671, 0.0
        %688 = vadd.xlane.f32.xlu0 %v687
        %v689 = vpop.xlane.xlu0 %688
        %v690 = vsel %vm658, %v672, 0.0
        %691 = vadd.xlane.f32.xlu0 %v690
        %v692 = vpop.xlane.xlu0 %691
        %v693 = vsel %vm658, %v673, 0.0
        %694 = vadd.xlane.f32.xlu0 %v693
        %v695 = vpop.xlane.xlu0 %694
        %v696 = vsel %vm658, %v674, 0.0
        %697 = vadd.xlane.f32.xlu0 %v696
        %v698 = vpop.xlane.xlu0 %697
        %v699 = vrcp.pop 32.0
        %v700 = vmul.f32 %v677, %v699
        %v701 = vmul.f32 %v680, %v699
        %v702 = vmul.f32 %v683, %v699
        %v703 = vmul.f32 %v686, %v699
        %v704 = vmul.f32 %v689, %v699
        %v705 = vmul.f32 %v692, %v699
        %v706 = vmul.f32 %v695, %v699
        %v707 = vmul.f32 %v698, %v699
        %v708 = vadd.f32 %v700, 1e-05
        %v709 = vadd.f32 %v701, 1e-05
        %v710 = vadd.f32 %v702, 1e-05
        %v711 = vadd.f32 %v703, 1e-05
        %v712 = vadd.f32 %v704, 1e-05
        %v713 = vadd.f32 %v705, 1e-05
        %v714 = vadd.f32 %v706, 1e-05
        %v715 = vadd.f32 %v707, 1e-05
        %v716 = vrsqrt.pop %v708
        %v717 = vrsqrt.pop %v709
        %v718 = vrsqrt.pop %v710
        %v719 = vrsqrt.pop %v711
        %v720 = vrsqrt.pop %v712
        %v721 = vrsqrt.pop %v713
        %v722 = vrsqrt.pop %v714
        %v723 = vrsqrt.pop %v715
        %v724 = vmul.f32 %v650, %v716
        %v725 = vmul.f32 %v651, %v717
        %v726 = vmul.f32 %v652, %v718
        %v727 = vmul.f32 %v653, %v719
        %v728 = vmul.f32 %v654, %v720
        %v729 = vmul.f32 %v655, %v721
        %v730 = vmul.f32 %v656, %v722
        %v731 = vmul.f32 %v657, %v723
        %v732 = vld [vmem:[#allocation12] sm:$0x1]
        %v734 = vlaneseq
        %v735 = vshrl.u32 %v734, 7
        %v736 = vsub.s32 0, %v735
        %v737 = vrot.slane %v732, %v736
        %v739 = vmul.f32 %v724, %v737
        %v740 = vmul.f32 %v725, %v737
        %v741 = vmul.f32 %v726, %v737
        %v742 = vmul.f32 %v727, %v737
        %v743 = vmul.f32 %v728, %v737
        %v744 = vmul.f32 %v729, %v737
        %v745 = vmul.f32 %v730, %v737
        %v746 = vmul.f32 %v731, %v737
        %v747 = vpack.c.bf16 %v740, %v739
        %v748 = vpack.c.bf16 %v742, %v741
        %v749 = vpack.c.bf16 %v744, %v743
        %v750 = vpack.c.bf16 %v746, %v745
        %v751 = vld [vmem:[#allocation14] sm:$0xf]
        %v752 = vld [vmem:[#allocation14 + $0x4] sm:$0xf]
        %v753 = vld [vmem:[#allocation14 + $0x8] sm:$0xf]
        %v754 = vld [vmem:[#allocation14 + $0xc] sm:$0xf]
        %v759 = vunpack.c.l.b16 %v751
        %v760 = vunpack.c.l.b16 %v752
        %v761 = vunpack.c.l.b16 %v753
        %v762 = vunpack.c.l.b16 %v754
        %v763 = vpack.c.b16 %v760, %v759
        %v764 = vpack.c.b16 %v762, %v761
        %v768 = vsel %vm658, %v747, 0
        %v771 = vsel %vm658, %v748, 0
        %v774 = vsel %vm658, %v749, 0
        %v777 = vsel %vm658, %v750, 0
        %779 = vmatprep.subr.bf16.mxu0 0
        %780 = vmatpush1.bf16.msra.mxu0 %v763
        %781 = vmatprep.subr.bf16.mxu0 0
        %782 = vmatpush1.bf16.msra.mxu0 %v764
        %783 = vmatprep.subr.bf16.mxu0 0
        %784 = vmatpush1.bf16.msra.mxu0 0
        %785 = vmatprep.subr.bf16.mxu0 0
        %786 = vmatpush1.bf16.msra.mxu0 0
        %787 = vmatprep.subr.bf16.mxu0 0
        %788 = vmatpush1.bf16.msra.mxu0 0
        %789 = vmatprep.subr.bf16.mxu0 0
        %790 = vmatpush1.bf16.msra.mxu0 0
        %791 = vmatprep.subr.bf16.mxu0 0
        %792 = vmatpush1.bf16.msra.mxu0 0
        %793 = vmatprep.subr.bf16.mxu0 0
        %794 = vmatpush1.bf16.msra.mxu0 0
        %795 = vmatprep.subr.bf16.mxu0 0
        %796 = vmatpush1.bf16.msra.mxu0 0
        %797 = vmatprep.subr.bf16.mxu0 0
        %798 = vmatpush1.bf16.msra.mxu0 0
        %799 = vmatprep.subr.bf16.mxu0 0
        %800 = vmatpush1.bf16.msra.mxu0 0
        %801 = vmatprep.subr.bf16.mxu0 0
        %802 = vmatpush1.bf16.msra.mxu0 0
        %803 = vmatprep.subr.bf16.mxu0 0
        %804 = vmatpush1.bf16.msra.mxu0 0
        %805 = vmatprep.subr.bf16.mxu0 0
        %806 = vmatpush1.bf16.msra.mxu0 0
        %807 = vmatprep.subr.bf16.mxu0 0
        %808 = vmatpush1.bf16.msra.mxu0 0
        %809 = vmatprep.subr.bf16.mxu0 0
        %810 = vmatpush1.bf16.msra.mxu0 0
        %811 = vmatprep.mubr.bf16.mxu0 0
        %812 = vmatmul.mubr.bf16.gmra.mrb[0].mxu0 %v768
        %v813 = vpop.f32.mrb[0].mxu0
        %v814 = vadd.f32 0.0, %v813
        %v815 = vpop.f32.mrb[0].mxu0
        %v816 = vpop.f32.mrb[0].mxu0
        %v817 = vadd.f32 0.0, %v816
        %v818 = vpop.f32.mrb[0].mxu0
        %819 = vmatprep.mubr.bf16.mxu0 0
        %820 = vmatmul.mubr.bf16.gmra.mrb[0].mxu0 %v771
        %v821 = vpop.f32.mrb[0].mxu0
        %v822 = vadd.f32 0.0, %v821
        %v823 = vpop.f32.mrb[0].mxu0
        %v824 = vpop.f32.mrb[0].mxu0
        %v825 = vadd.f32 0.0, %v824
        %v826 = vpop.f32.mrb[0].mxu0
        %827 = vmatprep.mubr.bf16.mxu0 0
        %828 = vmatmul.mubr.bf16.gmra.mrb[0].mxu0 %v774
        %v829 = vpop.f32.mrb[0].mxu0
        %v830 = vadd.f32 0.0, %v829
        %v831 = vpop.f32.mrb[0].mxu0
        %v832 = vpop.f32.mrb[0].mxu0
        %v833 = vadd.f32 0.0, %v832
        %v834 = vpop.f32.mrb[0].mxu0
        %835 = vmatprep.mubr.bf16.mxu0 0
        %836 = vmatmul.mubr.bf16.gmra.mrb[0].mxu0 %v777
        %v837 = vpop.f32.mrb[0].mxu0
        %v838 = vadd.f32 0.0, %v837
        %v839 = vpop.f32.mrb[0].mxu0
        %v840 = vpop.f32.mrb[0].mxu0
        %v841 = vadd.f32 0.0, %v840
        %v842 = vpop.f32.mrb[0].mxu0
        %843 = vdwg.mxu0
        %v844 = vld [vmem:[#allocation15] sm:$0xf]
        %v845 = vld [vmem:[#allocation15 + $0x4] sm:$0xf]
        %v846 = vld [vmem:[#allocation15 + $0x8] sm:$0xf]
        %v847 = vld [vmem:[#allocation15 + $0xc] sm:$0xf]
        %v852 = vunpack.c.l.b16 %v844
        %v853 = vunpack.c.l.b16 %v845
        %v854 = vunpack.c.l.b16 %v846
        %v855 = vunpack.c.l.b16 %v847
        %v856 = vpack.c.b16 %v853, %v852
        %v857 = vpack.c.b16 %v855, %v854
        %860 = vmatprep.subr.bf16.mxu0 0
        %861 = vmatpush1.bf16.msra.mxu0 %v856
        %862 = vmatprep.subr.bf16.mxu0 0
        %863 = vmatpush1.bf16.msra.mxu0 %v857
        %864 = vmatprep.subr.bf16.mxu0 0
        %865 = vmatpush1.bf16.msra.mxu0 0
        %866 = vmatprep.subr.bf16.mxu0 0
        %867 = vmatpush1.bf16.msra.mxu0 0
        %868 = vmatprep.subr.bf16.mxu0 0
        %869 = vmatpush1.bf16.msra.mxu0 0
        %870 = vmatprep.subr.bf16.mxu0 0
        %871 = vmatpush1.bf16.msra.mxu0 0
        %872 = vmatprep.subr.bf16.mxu0 0
        %873 = vmatpush1.bf16.msra.mxu0 0
        %874 = vmatprep.subr.bf16.mxu0 0
        %875 = vmatpush1.bf16.msra.mxu0 0
        %876 = vmatprep.subr.bf16.mxu0 0
        %877 = vmatpush1.bf16.msra.mxu0 0
        %878 = vmatprep.subr.bf16.mxu0 0
        %879 = vmatpush1.bf16.msra.mxu0 0
        %880 = vmatprep.subr.bf16.mxu0 0
        %881 = vmatpush1.bf16.msra.mxu0 0
        %882 = vmatprep.subr.bf16.mxu0 0
        %883 = vmatpush1.bf16.msra.mxu0 0
        %884 = vmatprep.subr.bf16.mxu0 0
        %885 = vmatpush1.bf16.msra.mxu0 0
        %886 = vmatprep.subr.bf16.mxu0 0
        %887 = vmatpush1.bf16.msra.mxu0 0
        %888 = vmatprep.subr.bf16.mxu0 0
        %889 = vmatpush1.bf16.msra.mxu0 0
        %890 = vmatprep.subr.bf16.mxu0 0
        %891 = vmatpush1.bf16.msra.mxu0 0
        %892 = vmatprep.mubr.bf16.mxu0 0
        %893 = vmatmul.mubr.bf16.gmra.mrb[0].mxu0 %v768
        %v894 = vpop.f32.mrb[0].mxu0
        %v895 = vadd.f32 0.0, %v894
        %v896 = vpop.f32.mrb[0].mxu0
        %v897 = vpop.f32.mrb[0].mxu0
        %v898 = vadd.f32 0.0, %v897
        %v899 = vpop.f32.mrb[0].mxu0
        %900 = vmatprep.mubr.bf16.mxu0 0
        %901 = vmatmul.mubr.bf16.gmra.mrb[0].mxu0 %v771
        %v902 = vpop.f32.mrb[0].mxu0
        %v903 = vadd.f32 0.0, %v902
        %v904 = vpop.f32.mrb[0].mxu0
        %v905 = vpop.f32.mrb[0].mxu0
        %v906 = vadd.f32 0.0, %v905
        %v907 = vpop.f32.mrb[0].mxu0
        %908 = vmatprep.mubr.bf16.mxu0 0
        %909 = vmatmul.mubr.bf16.gmra.mrb[0].mxu0 %v774
        %v910 = vpop.f32.mrb[0].mxu0
        %v911 = vadd.f32 0.0, %v910
        %v912 = vpop.f32.mrb[0].mxu0
        %v913 = vpop.f32.mrb[0].mxu0
        %v914 = vadd.f32 0.0, %v913
        %v915 = vpop.f32.mrb[0].mxu0
        %916 = vmatprep.mubr.bf16.mxu0 0
        %917 = vmatmul.mubr.bf16.gmra.mrb[0].mxu0 %v777
        %v918 = vpop.f32.mrb[0].mxu0
        %v919 = vadd.f32 0.0, %v918
        %v920 = vpop.f32.mrb[0].mxu0
        %v921 = vpop.f32.mrb[0].mxu0
        %v922 = vadd.f32 0.0, %v921
        %v923 = vpop.f32.mrb[0].mxu0
        %924 = vdwg.mxu0
        %v925 = vld [vmem:[#allocation17] sm:$0xf]
        %v926 = vld [vmem:[#allocation3] sm:$0xff]
        %vm927 = vcmask 523264
        %928 = vst.msk [vmem:[#allocation3] sm:$0xff] %vm927, %v841
        %v929 = vlaneseq
        %v930 = vshrl.u32 %v929, 7
        %v931 = vsub.s32 3, %v930
        %v932 = vrot.slane %v925, %v931
        %v933 = vmul.f32 %v814, %v932
        %v934 = vmul.f32 %v817, %v932
        %v935 = vmul.f32 %v822, %v932
        %v936 = vmul.f32 %v825, %v932
        %v937 = vmul.f32 %v830, %v932
        %v938 = vmul.f32 %v833, %v932
        %v939 = vmul.f32 %v838, %v932
        %v940 = vmul.f32 %v841, %v932
        %v941 = vld [vmem:[#allocation18] sm:$0x1]
        %v943 = vlaneseq
        %v944 = vshrl.u32 %v943, 7
        %v945 = vsub.s32 0, %v944
        %v946 = vrot.slane %v941, %v945
        %v948 = vadd.f32 %v933, %v946
        %v949 = vadd.f32 %v934, %v946
        %v950 = vadd.f32 %v935, %v946
        %v951 = vadd.f32 %v936, %v946
        %v952 = vadd.f32 %v937, %v946
        %v953 = vadd.f32 %v938, %v946
        %v954 = vadd.f32 %v939, %v946
        %v955 = vadd.f32 %v940, %v946
        %v956 = vlaneseq
        %v957 = vshrl.u32 %v956, 7
        %v958 = vsub.s32 2, %v957
        %v959 = vrot.slane %v925, %v958
        %v960 = vmul.f32 %v926, %v959
        %v961 = vmul.f32 %v814, %v959
        %v962 = vmul.f32 %v817, %v959
        %v963 = vmul.f32 %v822, %v959
        %v964 = vmul.f32 %v825, %v959
        %v965 = vmul.f32 %v830, %v959
        %v966 = vmul.f32 %v833, %v959
        %v967 = vmul.f32 %v838, %v959
        %v968 = vmul.f32 %v841, %v959
        %vm978 = vcmask 1040384
        %v979 = vrot.slane %v960, 7
        %v980 = vrot.slane %v961, 7
        %v981 = vsel %vm978, %v979, %v980
        %v982 = vrot.slane %v962, 7
        %v983 = vsel %vm978, %v980, %v982
        %v984 = vrot.slane %v963, 7
        %v985 = vsel %vm978, %v982, %v984
        %v986 = vrot.slane %v964, 7
        %v987 = vsel %vm978, %v984, %v986
        %v988 = vrot.slane %v965, 7
        %v989 = vsel %vm978, %v986, %v988
        %v990 = vrot.slane %v966, 7
        %v991 = vsel %vm978, %v988, %v990
        %v992 = vrot.slane %v967, 7
        %v993 = vsel %vm978, %v990, %v992
        %v994 = vrot.slane %v968, 7
        %v995 = vsel %vm978, %v992, %v994
        %v1004 = vadd.f32 %v948, %v981
        %v1005 = vadd.f32 %v949, %v983
        %v1006 = vadd.f32 %v950, %v985
        %v1007 = vadd.f32 %v951, %v987
        %v1008 = vadd.f32 %v952, %v989
        %v1009 = vadd.f32 %v953, %v991
        %v1010 = vadd.f32 %v954, %v993
        %v1011 = vadd.f32 %v955, %v995
        %v1012 = vlaneseq
        %v1013 = vshrl.u32 %v1012, 7
        %v1014 = vsub.s32 1, %v1013
        %v1015 = vrot.slane %v925, %v1014
        %v1016 = vmul.f32 %v926, %v1015
        %v1017 = vmul.f32 %v814, %v1015
        %v1018 = vmul.f32 %v817, %v1015
        %v1019 = vmul.f32 %v822, %v1015
        %v1020 = vmul.f32 %v825, %v1015
        %v1021 = vmul.f32 %v830, %v1015
        %v1022 = vmul.f32 %v833, %v1015
        %v1023 = vmul.f32 %v838, %v1015
        %v1024 = vmul.f32 %v841, %v1015
        %vm1034 = vcmask 1041408
        %v1035 = vrot.slane %v1016, 6
        %v1036 = vrot.slane %v1017, 6
        %v1037 = vsel %vm1034, %v1035, %v1036
        %v1038 = vrot.slane %v1018, 6
        %v1039 = vsel %vm1034, %v1036, %v1038
        %v1040 = vrot.slane %v1019, 6
        %v1041 = vsel %vm1034, %v1038, %v1040
        %v1042 = vrot.slane %v1020, 6
        %v1043 = vsel %vm1034, %v1040, %v1042
        %v1044 = vrot.slane %v1021, 6
        %v1045 = vsel %vm1034, %v1042, %v1044
        %v1046 = vrot.slane %v1022, 6
        %v1047 = vsel %vm1034, %v1044, %v1046
        %v1048 = vrot.slane %v1023, 6
        %v1049 = vsel %vm1034, %v1046, %v1048
        %v1050 = vrot.slane %v1024, 6
        %v1051 = vsel %vm1034, %v1048, %v1050
        %v1060 = vadd.f32 %v1004, %v1037
        %v1061 = vadd.f32 %v1005, %v1039
        %v1062 = vadd.f32 %v1006, %v1041
        %v1063 = vadd.f32 %v1007, %v1043
        %v1064 = vadd.f32 %v1008, %v1045
        %v1065 = vadd.f32 %v1009, %v1047
        %v1066 = vadd.f32 %v1010, %v1049
        %v1067 = vadd.f32 %v1011, %v1051
        %v1068 = vlaneseq
        %v1069 = vshrl.u32 %v1068, 7
        %v1070 = vsub.s32 0, %v1069
        %v1071 = vrot.slane %v925, %v1070
        %v1072 = vmul.f32 %v926, %v1071
        %v1073 = vmul.f32 %v814, %v1071
        %v1074 = vmul.f32 %v817, %v1071
        %v1075 = vmul.f32 %v822, %v1071
        %v1076 = vmul.f32 %v825, %v1071
        %v1077 = vmul.f32 %v830, %v1071
        %v1078 = vmul.f32 %v833, %v1071
        %v1079 = vmul.f32 %v838, %v1071
        %v1080 = vmul.f32 %v841, %v1071
        %vm1090 = vcmask 1042432
        %v1091 = vrot.slane %v1072, 5
        %v1092 = vrot.slane %v1073, 5
        %v1093 = vsel %vm1090, %v1091, %v1092
        %v1094 = vrot.slane %v1074, 5
        %v1095 = vsel %vm1090, %v1092, %v1094
        %v1096 = vrot.slane %v1075, 5
        %v1097 = vsel %vm1090, %v1094, %v1096
        %v1098 = vrot.slane %v1076, 5
        %v1099 = vsel %vm1090, %v1096, %v1098
        %v1100 = vrot.slane %v1077, 5
        %v1101 = vsel %vm1090, %v1098, %v1100
        %v1102 = vrot.slane %v1078, 5
        %v1103 = vsel %vm1090, %v1100, %v1102
        %v1104 = vrot.slane %v1079, 5
        %v1105 = vsel %vm1090, %v1102, %v1104
        %v1106 = vrot.slane %v1080, 5
        %v1107 = vsel %vm1090, %v1104, %v1106
        %v1116 = vadd.f32 %v1060, %v1093
        %v1117 = vadd.f32 %v1061, %v1095
        %v1118 = vadd.f32 %v1062, %v1097
        %v1119 = vadd.f32 %v1063, %v1099
        %v1120 = vadd.f32 %v1064, %v1101
        %v1121 = vadd.f32 %v1065, %v1103
        %v1122 = vadd.f32 %v1066, %v1105
        %v1123 = vadd.f32 %v1067, %v1107
        %v1124 = vsub.f32 0.0, %v1116
        %v1125 = vsub.f32 0.0, %v1117
        %v1126 = vsub.f32 0.0, %v1118
        %v1127 = vsub.f32 0.0, %v1119
        %v1128 = vsub.f32 0.0, %v1120
        %v1129 = vsub.f32 0.0, %v1121
        %v1130 = vsub.f32 0.0, %v1122
        %v1131 = vsub.f32 0.0, %v1123
        %v1132 = vmul.f32 %v1124, 1.442695
        %v1133 = vpow.pop %v1132
        %v1134 = vmul.f32 %v1125, 1.442695
        %v1135 = vpow.pop %v1134
        %v1136 = vmul.f32 %v1126, 1.442695
        %v1137 = vpow.pop %v1136
        %v1138 = vmul.f32 %v1127, 1.442695
        %v1139 = vpow.pop %v1138
        %v1140 = vmul.f32 %v1128, 1.442695
        %v1141 = vpow.pop %v1140
        %v1142 = vmul.f32 %v1129, 1.442695
        %v1143 = vpow.pop %v1142
        %v1144 = vmul.f32 %v1130, 1.442695
        %v1145 = vpow.pop %v1144
        %v1146 = vmul.f32 %v1131, 1.442695
        %v1147 = vpow.pop %v1146
        %v1148 = vadd.f32 %v1133, 1.0
        %v1149 = vadd.f32 %v1135, 1.0
        %v1150 = vadd.f32 %v1137, 1.0
        %v1151 = vadd.f32 %v1139, 1.0
        %v1152 = vadd.f32 %v1141, 1.0
        %v1153 = vadd.f32 %v1143, 1.0
        %v1154 = vadd.f32 %v1145, 1.0
        %v1155 = vadd.f32 %v1147, 1.0
        %v1156 = vrcp.pop %v1148
        %v1157 = vrcp.pop %v1149
        %v1158 = vrcp.pop %v1150
        %v1159 = vrcp.pop %v1151
        %v1160 = vrcp.pop %v1152
        %v1161 = vrcp.pop %v1153
        %v1162 = vrcp.pop %v1154
        %v1163 = vrcp.pop %v1155
        %v1164 = vmul.f32 %v1116, %v1156
        %v1165 = vmul.f32 %v1117, %v1157
        %v1166 = vmul.f32 %v1118, %v1158
        %v1167 = vmul.f32 %v1119, %v1159
        %v1168 = vmul.f32 %v1120, %v1160
        %v1169 = vmul.f32 %v1121, %v1161
        %v1170 = vmul.f32 %v1122, %v1162
        %v1171 = vmul.f32 %v1123, %v1163
        %v1172 = vpack.c.bf16 %v1165, %v1164
        %v1173 = vpack.c.bf16 %v1167, %v1166
        %v1174 = vpack.c.bf16 %v1169, %v1168
        %v1175 = vpack.c.bf16 %v1171, %v1170
        %v1176 = vld [vmem:[#allocation20] sm:$0xf]
        %v1177 = vld [vmem:[#allocation20 + $0x4] sm:$0xf]
        %v1178 = vld [vmem:[#allocation20 + $0x8] sm:$0xf]
        %v1179 = vld [vmem:[#allocation20 + $0xc] sm:$0xf]
        %v1180 = vld [vmem:[#allocation20 + $0x10] sm:$0xf]
        %v1181 = vld [vmem:[#allocation20 + $0x14] sm:$0xf]
        %v1182 = vld [vmem:[#allocation20 + $0x18] sm:$0xf]
        %v1183 = vld [vmem:[#allocation20 + $0x1c] sm:$0xf]
        %v1192 = vunpack.c.l.b16 %v1176
        %v1193 = vunpack.c.l.b16 %v1177
        %v1194 = vunpack.c.l.b16 %v1178
        %v1195 = vunpack.c.l.b16 %v1179
        %v1196 = vunpack.c.l.b16 %v1180
        %v1197 = vunpack.c.l.b16 %v1181
        %v1198 = vunpack.c.l.b16 %v1182
        %v1199 = vunpack.c.l.b16 %v1183
        %v1200 = vpack.c.b16 %v1193, %v1192
        %v1201 = vpack.c.b16 %v1195, %v1194
        %v1202 = vpack.c.b16 %v1197, %v1196
        %v1203 = vpack.c.b16 %v1199, %v1198
        %v1209 = vsel %vm927, %v1172, 0
        %v1212 = vsel %vm927, %v1173, 0
        %v1215 = vsel %vm927, %v1174, 0
        %v1218 = vsel %vm927, %v1175, 0
        %1220 = vmatprep.subr.bf16.mxu0 0
        %1221 = vmatpush1.bf16.msra.mxu0 %v1200
        %1222 = vmatprep.subr.bf16.mxu0 0
        %1223 = vmatpush1.bf16.msra.mxu0 %v1201
        %1224 = vmatprep.subr.bf16.mxu0 0
        %1225 = vmatpush1.bf16.msra.mxu0 %v1202
        %1226 = vmatprep.subr.bf16.mxu0 0
        %1227 = vmatpush1.bf16.msra.mxu0 %v1203
        %1228 = vmatprep.subr.bf16.mxu0 0
        %1229 = vmatpush1.bf16.msra.mxu0 0
        %1230 = vmatprep.subr.bf16.mxu0 0
        %1231 = vmatpush1.bf16.msra.mxu0 0
        %1232 = vmatprep.subr.bf16.mxu0 0
        %1233 = vmatpush1.bf16.msra.mxu0 0
        %1234 = vmatprep.subr.bf16.mxu0 0
        %1235 = vmatpush1.bf16.msra.mxu0 0
        %1236 = vmatprep.subr.bf16.mxu0 0
        %1237 = vmatpush1.bf16.msra.mxu0 0
        %1238 = vmatprep.subr.bf16.mxu0 0
        %1239 = vmatpush1.bf16.msra.mxu0 0
        %1240 = vmatprep.subr.bf16.mxu0 0
        %1241 = vmatpush1.bf16.msra.mxu0 0
        %1242 = vmatprep.subr.bf16.mxu0 0
        %1243 = vmatpush1.bf16.msra.mxu0 0
        %1244 = vmatprep.subr.bf16.mxu0 0
        %1245 = vmatpush1.bf16.msra.mxu0 0
        %1246 = vmatprep.subr.bf16.mxu0 0
        %1247 = vmatpush1.bf16.msra.mxu0 0
        %1248 = vmatprep.subr.bf16.mxu0 0
        %1249 = vmatpush1.bf16.msra.mxu0 0
        %1250 = vmatprep.subr.bf16.mxu0 0
        %1251 = vmatpush1.bf16.msra.mxu0 0
        %1252 = vmatprep.mubr.bf16.mxu0 0
        %1253 = vmatmul.mubr.bf16.gmra.mrb[0].mxu0 %v1209
        %v1254 = vpop.f32.mrb[0].mxu0
        %v1255 = vadd.f32 0.0, %v1254
        %v1256 = vpop.f32.mrb[0].mxu0
        %v1257 = vpop.f32.mrb[0].mxu0
        %v1258 = vadd.f32 0.0, %v1257
        %v1259 = vpop.f32.mrb[0].mxu0
        %1260 = vmatprep.mubr.bf16.mxu0 0
        %1261 = vmatmul.mubr.bf16.gmra.mrb[0].mxu0 %v1212
        %v1262 = vpop.f32.mrb[0].mxu0
        %v1263 = vadd.f32 0.0, %v1262
        %v1264 = vpop.f32.mrb[0].mxu0
        %v1265 = vpop.f32.mrb[0].mxu0
        %v1266 = vadd.f32 0.0, %v1265
        %v1267 = vpop.f32.mrb[0].mxu0
        %1268 = vmatprep.mubr.bf16.mxu0 0
        %1269 = vmatmul.mubr.bf16.gmra.mrb[0].mxu0 %v1215
        %v1270 = vpop.f32.mrb[0].mxu0
        %v1271 = vadd.f32 0.0, %v1270
        %v1272 = vpop.f32.mrb[0].mxu0
        %v1273 = vpop.f32.mrb[0].mxu0
        %v1274 = vadd.f32 0.0, %v1273
        %v1275 = vpop.f32.mrb[0].mxu0
        %1276 = vmatprep.mubr.bf16.mxu0 0
        %1277 = vmatmul.mubr.bf16.gmra.mrb[0].mxu0 %v1218
        %v1278 = vpop.f32.mrb[0].mxu0
        %v1279 = vadd.f32 0.0, %v1278
        %v1280 = vpop.f32.mrb[0].mxu0
        %v1281 = vpop.f32.mrb[0].mxu0
        %v1282 = vadd.f32 0.0, %v1281
        %v1283 = vpop.f32.mrb[0].mxu0
        %1284 = vdwg.mxu0
        %v1285 = vpack.c.bf16 %v1258, %v1255
        %v1286 = vpack.c.bf16 %v1266, %v1263
        %v1287 = vpack.c.bf16 %v1274, %v1271
        %v1288 = vpack.c.bf16 %v1282, %v1279
        %v1289 = vld [vmem:[#allocation21] sm:$0x1]
        %v1290 = vld [vmem:[#allocation23] sm:$0x1]
        %v1292 = vlaneseq
        %v1293 = vshrl.u32 %v1292, 7
        %v1294 = vsub.s32 0, %v1293
        %v1295 = vrot.slane %v1290, %v1294
        %vm1297 = vcmask 15360
        %v1299 = vsel %vm1297, %v1285, 0
        %v1302 = vsel %vm1297, %v1286, 0
        %v1305 = vsel %vm1297, %v1287, 0
        %v1308 = vsel %vm1297, %v1288, 0
        %v1311 = vsel %vm978, %v1289, 0
        %1313 = vmatprep.subr.bf16.mxu0 0
        %1314 = vmatpush1.bf16.msra.mxu0 %v1311
        %1315 = vmatprep.subr.bf16.mxu0 0
        %1316 = vmatpush1.bf16.msra.mxu0 0
        %1317 = vmatprep.subr.bf16.mxu0 0
        %1318 = vmatpush1.bf16.msra.mxu0 0
        %1319 = vmatprep.subr.bf16.mxu0 0
        %1320 = vmatpush1.bf16.msra.mxu0 0
        %1321 = vmatprep.subr.bf16.mxu0 0
        %1322 = vmatpush1.bf16.msra.mxu0 0
        %1323 = vmatprep.subr.bf16.mxu0 0
        %1324 = vmatpush1.bf16.msra.mxu0 0
        %1325 = vmatprep.subr.bf16.mxu0 0
        %1326 = vmatpush1.bf16.msra.mxu0 0
        %1327 = vmatprep.subr.bf16.mxu0 0
        %1328 = vmatpush1.bf16.msra.mxu0 0
        %1329 = vmatprep.subr.bf16.mxu0 0
        %1330 = vmatpush1.bf16.msra.mxu0 0
        %1331 = vmatprep.subr.bf16.mxu0 0
        %1332 = vmatpush1.bf16.msra.mxu0 0
        %1333 = vmatprep.subr.bf16.mxu0 0
        %1334 = vmatpush1.bf16.msra.mxu0 0
        %1335 = vmatprep.subr.bf16.mxu0 0
        %1336 = vmatpush1.bf16.msra.mxu0 0
        %1337 = vmatprep.subr.bf16.mxu0 0
        %1338 = vmatpush1.bf16.msra.mxu0 0
        %1339 = vmatprep.subr.bf16.mxu0 0
        %1340 = vmatpush1.bf16.msra.mxu0 0
        %1341 = vmatprep.subr.bf16.mxu0 0
        %1342 = vmatpush1.bf16.msra.mxu0 0
        %1343 = vmatprep.subr.bf16.mxu0 0
        %1344 = vmatpush1.bf16.msra.mxu0 0
        %1345 = vmatprep.mubr.bf16.mxu0 0
        %1346 = vmatmul.mubr.bf16.gmra.mrb[0].mxu0 %v1299
        %v1347 = vpop.f32.mrb[0].mxu0
        %v1348 = vadd.f32 %v1295, %v1347
        %v1349 = vpop.f32.mrb[0].mxu0
        %v1350 = vpop.f32.mrb[0].mxu0
        %v1351 = vadd.f32 %v1295, %v1350
        %v1352 = vpop.f32.mrb[0].mxu0
        %1353 = vmatprep.mubr.bf16.mxu0 0
        %1354 = vmatmul.mubr.bf16.gmra.mrb[0].mxu0 %v1302
        %v1355 = vpop.f32.mrb[0].mxu0
        %v1356 = vadd.f32 %v1295, %v1355
        %v1357 = vpop.f32.mrb[0].mxu0
        %v1358 = vpop.f32.mrb[0].mxu0
        %v1359 = vadd.f32 %v1295, %v1358
        %v1360 = vpop.f32.mrb[0].mxu0
        %1361 = vmatprep.mubr.bf16.mxu0 0
        %1362 = vmatmul.mubr.bf16.gmra.mrb[0].mxu0 %v1305
        %v1363 = vpop.f32.mrb[0].mxu0
        %v1364 = vadd.f32 %v1295, %v1363
        %v1365 = vpop.f32.mrb[0].mxu0
        %v1366 = vpop.f32.mrb[0].mxu0
        %v1367 = vadd.f32 %v1295, %v1366
        %v1368 = vpop.f32.mrb[0].mxu0
        %1369 = vmatprep.mubr.bf16.mxu0 0
        %1370 = vmatmul.mubr.bf16.gmra.mrb[0].mxu0 %v1308
        %v1371 = vpop.f32.mrb[0].mxu0
        %v1372 = vadd.f32 %v1295, %v1371
        %v1373 = vpop.f32.mrb[0].mxu0
        %v1374 = vpop.f32.mrb[0].mxu0
        %v1375 = vadd.f32 %v1295, %v1374
        %v1376 = vpop.f32.mrb[0].mxu0
        %1377 = vdwg.mxu0
        %vm1378 = vcmp.gt.f32.partialorder %v1348, 20.0
        %vm1379 = vcmp.gt.f32.partialorder %v1351, 20.0
        %vm1380 = vcmp.gt.f32.partialorder %v1356, 20.0
        %vm1381 = vcmp.gt.f32.partialorder %v1359, 20.0
        %vm1382 = vcmp.gt.f32.partialorder %v1364, 20.0
        %vm1383 = vcmp.gt.f32.partialorder %v1367, 20.0
        %vm1384 = vcmp.gt.f32.partialorder %v1372, 20.0
        %vm1385 = vcmp.gt.f32.partialorder %v1375, 20.0
        %v1386 = vmin.f32 %v1348, 20.0
        %v1387 = vmin.f32 %v1351, 20.0
        %v1388 = vmin.f32 %v1356, 20.0
        %v1389 = vmin.f32 %v1359, 20.0
        %v1390 = vmin.f32 %v1364, 20.0
        %v1391 = vmin.f32 %v1367, 20.0
        %v1392 = vmin.f32 %v1372, 20.0
        %v1393 = vmin.f32 %v1375, 20.0
        %v1394 = vmul.f32 %v1386, 1.442695
        %v1395 = vpow.pop %v1394
        %v1396 = vmul.f32 %v1387, 1.442695
        %v1397 = vpow.pop %v1396
        %v1398 = vmul.f32 %v1388, 1.442695
        %v1399 = vpow.pop %v1398
        %v1400 = vmul.f32 %v1389, 1.442695
        %v1401 = vpow.pop %v1400
        %v1402 = vmul.f32 %v1390, 1.442695
        %v1403 = vpow.pop %v1402
        %v1404 = vmul.f32 %v1391, 1.442695
        %v1405 = vpow.pop %v1404
        %v1406 = vmul.f32 %v1392, 1.442695
        %v1407 = vpow.pop %v1406
        %v1408 = vmul.f32 %v1393, 1.442695
        %v1409 = vpow.pop %v1408
        %v1410 = vadd.f32 %v1395, 1.0
        %v1411 = vlog2.pop %v1410
        %v1412 = vmul.f32 %v1411, 0.6931472
        %v1413 = vmul.f32 -0.5, %v1395
        %v1414 = vadd.f32 %v1413, 1.0
        %v1415 = vmul.f32 %v1414, %v1395
        %v1416 = vand.u32 2147483647, %v1395
        %vm1417 = vcmp.lt.f32.partialorder %v1416, 0.0004427343
        %v1418 = vsel %vm1417, %v1415, %v1412
        %v1419 = vadd.f32 %v1397, 1.0
        %v1420 = vlog2.pop %v1419
        %v1421 = vmul.f32 %v1420, 0.6931472
        %v1422 = vmul.f32 -0.5, %v1397
        %v1423 = vadd.f32 %v1422, 1.0
        %v1424 = vmul.f32 %v1423, %v1397
        %v1425 = vand.u32 2147483647, %v1397
        %vm1426 = vcmp.lt.f32.partialorder %v1425, 0.0004427343
        %v1427 = vsel %vm1426, %v1424, %v1421
        %v1428 = vadd.f32 %v1399, 1.0
        %v1429 = vlog2.pop %v1428
        %v1430 = vmul.f32 %v1429, 0.6931472
        %v1431 = vmul.f32 -0.5, %v1399
        %v1432 = vadd.f32 %v1431, 1.0
        %v1433 = vmul.f32 %v1432, %v1399
        %v1434 = vand.u32 2147483647, %v1399
        %vm1435 = vcmp.lt.f32.partialorder %v1434, 0.0004427343
        %v1436 = vsel %vm1435, %v1433, %v1430
        %v1437 = vadd.f32 %v1401, 1.0
        %v1438 = vlog2.pop %v1437
        %v1439 = vmul.f32 %v1438, 0.6931472
        %v1440 = vmul.f32 -0.5, %v1401
        %v1441 = vadd.f32 %v1440, 1.0
        %v1442 = vmul.f32 %v1441, %v1401
        %v1443 = vand.u32 2147483647, %v1401
        %vm1444 = vcmp.lt.f32.partialorder %v1443, 0.0004427343
        %v1445 = vsel %vm1444, %v1442, %v1439
        %v1446 = vadd.f32 %v1403, 1.0
        %v1447 = vlog2.pop %v1446
        %v1448 = vmul.f32 %v1447, 0.6931472
        %v1449 = vmul.f32 -0.5, %v1403
        %v1450 = vadd.f32 %v1449, 1.0
        %v1451 = vmul.f32 %v1450, %v1403
        %v1452 = vand.u32 2147483647, %v1403
        %vm1453 = vcmp.lt.f32.partialorder %v1452, 0.0004427343
        %v1454 = vsel %vm1453, %v1451, %v1448
        %v1455 = vadd.f32 %v1405, 1.0
        %v1456 = vlog2.pop %v1455
        %v1457 = vmul.f32 %v1456, 0.6931472
        %v1458 = vmul.f32 -0.5, %v1405
        %v1459 = vadd.f32 %v1458, 1.0
        %v1460 = vmul.f32 %v1459, %v1405
        %v1461 = vand.u32 2147483647, %v1405
        %vm1462 = vcmp.lt.f32.partialorder %v1461, 0.0004427343
        %v1463 = vsel %vm1462, %v1460, %v1457
        %v1464 = vadd.f32 %v1407, 1.0
        %v1465 = vlog2.pop %v1464
        %v1466 = vmul.f32 %v1465, 0.6931472
        %v1467 = vmul.f32 -0.5, %v1407
        %v1468 = vadd.f32 %v1467, 1.0
        %v1469 = vmul.f32 %v1468, %v1407
        %v1470 = vand.u32 2147483647, %v1407
        %vm1471 = vcmp.lt.f32.partialorder %v1470, 0.0004427343
        %v1472 = vsel %vm1471, %v1469, %v1466
        %v1473 = vadd.f32 %v1409, 1.0
        %v1474 = vlog2.pop %v1473
        %v1475 = vmul.f32 %v1474, 0.6931472
        %v1476 = vmul.f32 -0.5, %v1409
        %v1477 = vadd.f32 %v1476, 1.0
        %v1478 = vmul.f32 %v1477, %v1409
        %v1479 = vand.u32 2147483647, %v1409
        %vm1480 = vcmp.lt.f32.partialorder %v1479, 0.0004427343
        %v1481 = vsel %vm1480, %v1478, %v1475
        %v1482 = vsel %vm1378, %v1348, %v1418
        %v1483 = vsel %vm1379, %v1351, %v1427
        %v1484 = vsel %vm1380, %v1356, %v1436
        %v1485 = vsel %vm1381, %v1359, %v1445
        %v1486 = vsel %vm1382, %v1364, %v1454
        %v1487 = vsel %vm1383, %v1367, %v1463
        %v1488 = vsel %vm1384, %v1372, %v1472
        %v1489 = vsel %vm1385, %v1375, %v1481
        %1490 = vst.msk [vmem:[#allocation4] sm:$0xff] %vm927, %v1482
        %1491 = vst.msk [vmem:[#allocation4 + $0x8] sm:$0xff] %vm927, %v1483
        %1492 = vst.msk [vmem:[#allocation4 + $0x10] sm:$0xff] %vm927, %v1484
        %1493 = vst.msk [vmem:[#allocation4 + $0x18] sm:$0xff] %vm927, %v1485
        %1494 = vst.msk [vmem:[#allocation4 + $0x20] sm:$0xff] %vm927, %v1486
        %1495 = vst.msk [vmem:[#allocation4 + $0x28] sm:$0xff] %vm927, %v1487
        %1496 = vst.msk [vmem:[#allocation4 + $0x30] sm:$0xff] %vm927, %v1488
        %1497 = vst.msk [vmem:[#allocation4 + $0x38] sm:$0xff] %vm927, %v1489
        %v1498 = vmul.f32 %v1482, %v1164
        %v1499 = vmul.f32 %v1483, %v1165
        %v1500 = vmul.f32 %v1484, %v1166
        %v1501 = vmul.f32 %v1485, %v1167
        %v1502 = vmul.f32 %v1486, %v1168
        %v1503 = vmul.f32 %v1487, %v1169
        %v1504 = vmul.f32 %v1488, %v1170
        %v1505 = vmul.f32 %v1489, %v1171
        %1506 = vst.msk [vmem:[#allocation5] sm:$0xff] %vm927, %v1498
        %1507 = vst.msk [vmem:[#allocation5 + $0x8] sm:$0xff] %vm927, %v1499
        %1508 = vst.msk [vmem:[#allocation5 + $0x10] sm:$0xff] %vm927, %v1500
        %1509 = vst.msk [vmem:[#allocation5 + $0x18] sm:$0xff] %vm927, %v1501
        %1510 = vst.msk [vmem:[#allocation5 + $0x20] sm:$0xff] %vm927, %v1502
        %1511 = vst.msk [vmem:[#allocation5 + $0x28] sm:$0xff] %vm927, %v1503
        %1512 = vst.msk [vmem:[#allocation5 + $0x30] sm:$0xff] %vm927, %v1504
        %1513 = vst.msk [vmem:[#allocation5 + $0x38] sm:$0xff] %vm927, %v1505
        %1522 = vrot.lane.b32.xlu0 %v1255, 126
        %v1523 = vpop.permute.xlu0 %1522
        %1524 = vrot.lane.b32.xlu0 %v1258, 126
        %v1525 = vpop.permute.xlu0 %1524
        %1526 = vrot.lane.b32.xlu0 %v1263, 126
        %v1527 = vpop.permute.xlu0 %1526
        %1528 = vrot.lane.b32.xlu0 %v1266, 126
        %v1529 = vpop.permute.xlu0 %1528
        %1530 = vrot.lane.b32.xlu0 %v1271, 126
        %v1531 = vpop.permute.xlu0 %1530
        %1532 = vrot.lane.b32.xlu0 %v1274, 126
        %v1533 = vpop.permute.xlu0 %1532
        %1534 = vrot.lane.b32.xlu0 %v1279, 126
        %v1535 = vpop.permute.xlu0 %1534
        %1536 = vrot.lane.b32.xlu0 %v1282, 126
        %v1537 = vpop.permute.xlu0 %1536
        %vm1546 = vcmask 130048
        %1547 = vst.msk [vmem:[#allocation6] sm:$0xff] %vm1546, %v1523
        %1548 = vst.msk [vmem:[#allocation6 + $0x8] sm:$0xff] %vm1546, %v1525
        %1549 = vst.msk [vmem:[#allocation6 + $0x10] sm:$0xff] %vm1546, %v1527
        %1550 = vst.msk [vmem:[#allocation6 + $0x18] sm:$0xff] %vm1546, %v1529
        %1551 = vst.msk [vmem:[#allocation6 + $0x20] sm:$0xff] %vm1546, %v1531
        %1552 = vst.msk [vmem:[#allocation6 + $0x28] sm:$0xff] %vm1546, %v1533
        %1553 = vst.msk [vmem:[#allocation6 + $0x30] sm:$0xff] %vm1546, %v1535
        %1554 = vst.msk [vmem:[#allocation6 + $0x38] sm:$0xff] %vm1546, %v1537
        %1555 = vrot.lane.b32.xlu0 %v1255, 110
        %v1556 = vpop.permute.xlu0 %1555
        %1557 = vrot.lane.b32.xlu0 %v1258, 110
        %v1558 = vpop.permute.xlu0 %1557
        %1559 = vrot.lane.b32.xlu0 %v1263, 110
        %v1560 = vpop.permute.xlu0 %1559
        %1561 = vrot.lane.b32.xlu0 %v1266, 110
        %v1562 = vpop.permute.xlu0 %1561
        %1563 = vrot.lane.b32.xlu0 %v1271, 110
        %v1564 = vpop.permute.xlu0 %1563
        %1565 = vrot.lane.b32.xlu0 %v1274, 110
        %v1566 = vpop.permute.xlu0 %1565
        %1567 = vrot.lane.b32.xlu0 %v1279, 110
        %v1568 = vpop.permute.xlu0 %1567
        %1569 = vrot.lane.b32.xlu0 %v1282, 110
        %v1570 = vpop.permute.xlu0 %1569
        %1579 = vst.msk [vmem:[#allocation7] sm:$0xff] %vm1546, %v1556
        %1580 = vst.msk [vmem:[#allocation7 + $0x8] sm:$0xff] %vm1546, %v1558
        %1581 = vst.msk [vmem:[#allocation7 + $0x10] sm:$0xff] %vm1546, %v1560
        %1582 = vst.msk [vmem:[#allocation7 + $0x18] sm:$0xff] %vm1546, %v1562
        %1583 = vst.msk [vmem:[#allocation7 + $0x20] sm:$0xff] %vm1546, %v1564
        %1584 = vst.msk [vmem:[#allocation7 + $0x28] sm:$0xff] %vm1546, %v1566
        %1585 = vst.msk [vmem:[#allocation7 + $0x30] sm:$0xff] %vm1546, %v1568
        %1586 = vst.msk [vmem:[#allocation7 + $0x38] sm:$0xff] %vm1546, %v1570
        %v1587 = vld [vmem:[#allocation24] sm:$0xff]
        %v1588 = vld [vmem:[#allocation24 + $0x8] sm:$0xff]
        %v1589 = vld [vmem:[#allocation2] sm:$0xff]
        %v1590 = vld [vmem:[#allocation2 + $0x8] sm:$0xff]
        loop: start=0, step=1, limit=8
        $region121: #{mamba_model_forward.2} parent=67 // loop_pre_header
          _
        $region122: #{mamba_model_forward.2} parent=67 // loop_header
          %s1592 = sphi 0, %s1596
          %p1593 = scmp.ge.s32.totalorder %s1592, 8
          %v1597 = vphi %v1589, %v2019
          %v1598 = vphi %v1590, %v2020
        $region123: #{mamba_model_forward.2} parent=67 // loop_header_branch
          %1595 = sbr.rel (%p1593) target = $region127
        $region124: #{mamba_model_forward.2} parent=67 // loop_body
          %s1599 = smul.u32 %s1592, 8
          %s1600 = scalar_lea.vmem [#allocation4], %s1599
          %v1601 = vld [vmem:[%s1600] sm:$0xff]
          %s1602 = scalar_lea.vmem [#allocation5], %s1599
          %v1603 = vld [vmem:[%s1602] sm:$0xff]
          %s1604 = scalar_lea.vmem [#allocation6], %s1599
          %v1605 = vld [vmem:[%s1604] sm:$0xff]
          %v1606 = vlaneseq
          %v1607 = vshrl.u32 %v1606, 7
          %v1608 = vsub.s32 0, %v1607
          %v1609 = vrot.slane %v1605, %v1608
          %1611 = vbcast.lane.b32.xlu0 %v1609, 256
          %v1612 = vpop.permute.xlu0 %1611
          %s1614 = sor.u32 256, 8
          %1615 = vbcast.lane.b32.xlu0 %v1609, %s1614
          %v1616 = vpop.permute.xlu0 %1615
          %v1617 = vlaneseq
          %v1618 = vshrl.u32 %v1617, 7
          %v1619 = vsub.s32 1, %v1618
          %v1620 = vrot.slane %v1605, %v1619
          %1622 = vbcast.lane.b32.xlu0 %v1620, 256
          %v1623 = vpop.permute.xlu0 %1622
          %s1625 = sor.u32 256, 8
          %1626 = vbcast.lane.b32.xlu0 %v1620, %s1625
          %v1627 = vpop.permute.xlu0 %1626
          %v1628 = vlaneseq
          %v1629 = vshrl.u32 %v1628, 7
          %v1630 = vsub.s32 2, %v1629
          %v1631 = vrot.slane %v1605, %v1630
          %1633 = vbcast.lane.b32.xlu0 %v1631, 256
          %v1634 = vpop.permute.xlu0 %1633
          %s1636 = sor.u32 256, 8
          %1637 = vbcast.lane.b32.xlu0 %v1631, %s1636
          %v1638 = vpop.permute.xlu0 %1637
          %v1639 = vlaneseq
          %v1640 = vshrl.u32 %v1639, 7
          %v1641 = vsub.s32 3, %v1640
          %v1642 = vrot.slane %v1605, %v1641
          %1644 = vbcast.lane.b32.xlu0 %v1642, 256
          %v1645 = vpop.permute.xlu0 %1644
          %s1647 = sor.u32 256, 8
          %1648 = vbcast.lane.b32.xlu0 %v1642, %s1647
          %v1649 = vpop.permute.xlu0 %1648
          %v1650 = vlaneseq
          %v1651 = vshrl.u32 %v1650, 7
          %v1652 = vsub.s32 4, %v1651
          %v1653 = vrot.slane %v1605, %v1652
          %1655 = vbcast.lane.b32.xlu0 %v1653, 256
          %v1656 = vpop.permute.xlu0 %1655
          %s1658 = sor.u32 256, 8
          %1659 = vbcast.lane.b32.xlu0 %v1653, %s1658
          %v1660 = vpop.permute.xlu0 %1659
          %v1661 = vlaneseq
          %v1662 = vshrl.u32 %v1661, 7
          %v1663 = vsub.s32 5, %v1662
          %v1664 = vrot.slane %v1605, %v1663
          %1666 = vbcast.lane.b32.xlu0 %v1664, 256
          %v1667 = vpop.permute.xlu0 %1666
          %s1669 = sor.u32 256, 8
          %1670 = vbcast.lane.b32.xlu0 %v1664, %s1669
          %v1671 = vpop.permute.xlu0 %1670
          %v1672 = vlaneseq
          %v1673 = vshrl.u32 %v1672, 7
          %v1674 = vsub.s32 6, %v1673
          %v1675 = vrot.slane %v1605, %v1674
          %1677 = vbcast.lane.b32.xlu0 %v1675, 256
          %v1678 = vpop.permute.xlu0 %1677
          %s1680 = sor.u32 256, 8
          %1681 = vbcast.lane.b32.xlu0 %v1675, %s1680
          %v1682 = vpop.permute.xlu0 %1681
          %v1683 = vlaneseq
          %v1684 = vshrl.u32 %v1683, 7
          %v1685 = vsub.s32 7, %v1684
          %v1686 = vrot.slane %v1605, %v1685
          %1688 = vbcast.lane.b32.xlu0 %v1686, 256
          %v1689 = vpop.permute.xlu0 %1688
          %s1691 = sor.u32 256, 8
          %1692 = vbcast.lane.b32.xlu0 %v1686, %s1691
          %v1693 = vpop.permute.xlu0 %1692
          %s1694 = scalar_lea.vmem [#allocation7], %s1599
          %v1695 = vld [vmem:[%s1694] sm:$0xff]
          %v1696 = vlaneseq
          %v1697 = vshrl.u32 %v1696, 7
          %v1698 = vsub.s32 0, %v1697
          %v1699 = vrot.slane %v1695, %v1698
          %1701 = vbcast.lane.b32.xlu0 %v1699, 256
          %v1702 = vpop.permute.xlu0 %1701
          %s1704 = sor.u32 256, 8
          %1705 = vbcast.lane.b32.xlu0 %v1699, %s1704
          %v1706 = vpop.permute.xlu0 %1705
          %v1707 = vlaneseq
          %v1708 = vshrl.u32 %v1707, 7
          %v1709 = vsub.s32 1, %v1708
          %v1710 = vrot.slane %v1695, %v1709
          %1712 = vbcast.lane.b32.xlu0 %v1710, 256
          %v1713 = vpop.permute.xlu0 %1712
          %s1715 = sor.u32 256, 8
          %1716 = vbcast.lane.b32.xlu0 %v1710, %s1715
          %v1717 = vpop.permute.xlu0 %1716
          %v1718 = vlaneseq
          %v1719 = vshrl.u32 %v1718, 7
          %v1720 = vsub.s32 2, %v1719
          %v1721 = vrot.slane %v1695, %v1720
          %1723 = vbcast.lane.b32.xlu0 %v1721, 256
          %v1724 = vpop.permute.xlu0 %1723
          %s1726 = sor.u32 256, 8
          %1727 = vbcast.lane.b32.xlu0 %v1721, %s1726
          %v1728 = vpop.permute.xlu0 %1727
          %v1729 = vlaneseq
          %v1730 = vshrl.u32 %v1729, 7
          %v1731 = vsub.s32 3, %v1730
          %v1732 = vrot.slane %v1695, %v1731
          %1734 = vbcast.lane.b32.xlu0 %v1732, 256
          %v1735 = vpop.permute.xlu0 %1734
          %s1737 = sor.u32 256, 8
          %1738 = vbcast.lane.b32.xlu0 %v1732, %s1737
          %v1739 = vpop.permute.xlu0 %1738
          %v1740 = vlaneseq
          %v1741 = vshrl.u32 %v1740, 7
          %v1742 = vsub.s32 4, %v1741
          %v1743 = vrot.slane %v1695, %v1742
          %1745 = vbcast.lane.b32.xlu0 %v1743, 256
          %v1746 = vpop.permute.xlu0 %1745
          %s1748 = sor.u32 256, 8
          %1749 = vbcast.lane.b32.xlu0 %v1743, %s1748
          %v1750 = vpop.permute.xlu0 %1749
          %v1751 = vlaneseq
          %v1752 = vshrl.u32 %v1751, 7
          %v1753 = vsub.s32 5, %v1752
          %v1754 = vrot.slane %v1695, %v1753
          %1756 = vbcast.lane.b32.xlu0 %v1754, 256
          %v1757 = vpop.permute.xlu0 %1756
          %s1759 = sor.u32 256, 8
          %1760 = vbcast.lane.b32.xlu0 %v1754, %s1759
          %v1761 = vpop.permute.xlu0 %1760
          %v1762 = vlaneseq
          %v1763 = vshrl.u32 %v1762, 7
          %v1764 = vsub.s32 6, %v1763
          %v1765 = vrot.slane %v1695, %v1764
          %1767 = vbcast.lane.b32.xlu0 %v1765, 256
          %v1768 = vpop.permute.xlu0 %1767
          %s1770 = sor.u32 256, 8
          %1771 = vbcast.lane.b32.xlu0 %v1765, %s1770
          %v1772 = vpop.permute.xlu0 %1771
          %v1773 = vlaneseq
          %v1774 = vshrl.u32 %v1773, 7
          %v1775 = vsub.s32 7, %v1774
          %v1776 = vrot.slane %v1695, %v1775
          %1778 = vbcast.lane.b32.xlu0 %v1776, 256
          %v1779 = vpop.permute.xlu0 %1778
          %s1781 = sor.u32 256, 8
          %1782 = vbcast.lane.b32.xlu0 %v1776, %s1781
          %v1783 = vpop.permute.xlu0 %1782
          %v1784 = vlaneseq
          %v1785 = vshrl.u32 %v1784, 7
          %v1786 = vsub.s32 0, %v1785
          %v1787 = vrot.slane %v1601, %v1786
          %v1788 = vmul.f32 %v1787, %v1587
          %v1789 = vmul.f32 %v1787, %v1588
          %v1790 = vmul.f32 %v1788, 1.442695
          %v1791 = vpow.pop %v1790
          %v1792 = vmul.f32 %v1789, 1.442695
          %v1793 = vpow.pop %v1792
          %v1794 = vmul.f32 %v1791, %v1597
          %v1795 = vmul.f32 %v1793, %v1598
          %v1796 = vlaneseq
          %v1797 = vshrl.u32 %v1796, 7
          %v1798 = vsub.s32 0, %v1797
          %v1799 = vrot.slane %v1603, %v1798
          %v1800 = vmul.f32 %v1612, %v1799
          %v1801 = vmul.f32 %v1616, %v1799
          %v1802 = vadd.f32 %v1794, %v1800
          %v1803 = vadd.f32 %v1795, %v1801
          %v1804 = vmul.f32 %v1702, %v1802
          %v1805 = vmul.f32 %v1706, %v1803
          %v1806 = vsel %vm927, %v1804, 0.0
          %v1807 = vsel %vm927, %v1805, 0.0
          %v1808 = vadd.f32 %v1806, %v1807
          %v1809 = vrot.slane %v1808, 4
          %v1810 = vadd.f32 %v1808, %v1809
          %v1811 = vrot.slane %v1810, 2
          %v1812 = vadd.f32 %v1810, %v1811
          %v1813 = vrot.slane %v1812, 1
          %v1814 = vadd.f32 %v1812, %v1813
          %v1815 = vlaneseq
          %v1816 = vshrl.u32 %v1815, 7
          %v1817 = vsub.s32 1, %v1816
          %v1818 = vrot.slane %v1601, %v1817
          %v1819 = vmul.f32 %v1818, %v1587
          %v1820 = vmul.f32 %v1818, %v1588
          %v1821 = vmul.f32 %v1819, 1.442695
          %v1822 = vpow.pop %v1821
          %v1823 = vmul.f32 %v1820, 1.442695
          %v1824 = vpow.pop %v1823
          %v1825 = vmul.f32 %v1822, %v1802
          %v1826 = vmul.f32 %v1824, %v1803
          %v1827 = vlaneseq
          %v1828 = vshrl.u32 %v1827, 7
          %v1829 = vsub.s32 1, %v1828
          %v1830 = vrot.slane %v1603, %v1829
          %v1831 = vmul.f32 %v1623, %v1830
          %v1832 = vmul.f32 %v1627, %v1830
          %v1833 = vadd.f32 %v1825, %v1831
          %v1834 = vadd.f32 %v1826, %v1832
          %v1835 = vmul.f32 %v1713, %v1833
          %v1836 = vmul.f32 %v1717, %v1834
          %v1837 = vsel %vm927, %v1835, 0.0
          %v1838 = vsel %vm927, %v1836, 0.0
          %v1839 = vadd.f32 %v1837, %v1838
          %v1840 = vrot.slane %v1839, 4
          %v1841 = vadd.f32 %v1839, %v1840
          %v1842 = vrot.slane %v1841, 2
          %v1843 = vadd.f32 %v1841, %v1842
          %v1844 = vrot.slane %v1843, 1
          %v1845 = vadd.f32 %v1843, %v1844
          %v1846 = vlaneseq
          %v1847 = vshrl.u32 %v1846, 7
          %v1848 = vsub.s32 2, %v1847
          %v1849 = vrot.slane %v1601, %v1848
          %v1850 = vmul.f32 %v1849, %v1587
          %v1851 = vmul.f32 %v1849, %v1588
          %v1852 = vmul.f32 %v1850, 1.442695
          %v1853 = vpow.pop %v1852
          %v1854 = vmul.f32 %v1851, 1.442695
          %v1855 = vpow.pop %v1854
          %v1856 = vmul.f32 %v1853, %v1833
          %v1857 = vmul.f32 %v1855, %v1834
          %v1858 = vlaneseq
          %v1859 = vshrl.u32 %v1858, 7
          %v1860 = vsub.s32 2, %v1859
          %v1861 = vrot.slane %v1603, %v1860
          %v1862 = vmul.f32 %v1634, %v1861
          %v1863 = vmul.f32 %v1638, %v1861
          %v1864 = vadd.f32 %v1856, %v1862
          %v1865 = vadd.f32 %v1857, %v1863
          %v1866 = vmul.f32 %v1724, %v1864
          %v1867 = vmul.f32 %v1728, %v1865
          %v1868 = vsel %vm927, %v1866, 0.0
          %v1869 = vsel %vm927, %v1867, 0.0
          %v1870 = vadd.f32 %v1868, %v1869
          %v1871 = vrot.slane %v1870, 4
          %v1872 = vadd.f32 %v1870, %v1871
          %v1873 = vrot.slane %v1872, 2
          %v1874 = vadd.f32 %v1872, %v1873
          %v1875 = vrot.slane %v1874, 1
          %v1876 = vadd.f32 %v1874, %v1875
          %v1877 = vlaneseq
          %v1878 = vshrl.u32 %v1877, 7
          %v1879 = vsub.s32 3, %v1878
          %v1880 = vrot.slane %v1601, %v1879
          %v1881 = vmul.f32 %v1880, %v1587
          %v1882 = vmul.f32 %v1880, %v1588
          %v1883 = vmul.f32 %v1881, 1.442695
          %v1884 = vpow.pop %v1883
          %v1885 = vmul.f32 %v1882, 1.442695
          %v1886 = vpow.pop %v1885
          %v1887 = vmul.f32 %v1884, %v1864
          %v1888 = vmul.f32 %v1886, %v1865
          %v1889 = vlaneseq
          %v1890 = vshrl.u32 %v1889, 7
          %v1891 = vsub.s32 3, %v1890
          %v1892 = vrot.slane %v1603, %v1891
          %v1893 = vmul.f32 %v1645, %v1892
          %v1894 = vmul.f32 %v1649, %v1892
          %v1895 = vadd.f32 %v1887, %v1893
          %v1896 = vadd.f32 %v1888, %v1894
          %v1897 = vmul.f32 %v1735, %v1895
          %v1898 = vmul.f32 %v1739, %v1896
          %v1899 = vsel %vm927, %v1897, 0.0
          %v1900 = vsel %vm927, %v1898, 0.0
          %v1901 = vadd.f32 %v1899, %v1900
          %v1902 = vrot.slane %v1901, 4
          %v1903 = vadd.f32 %v1901, %v1902
          %v1904 = vrot.slane %v1903, 2
          %v1905 = vadd.f32 %v1903, %v1904
          %v1906 = vrot.slane %v1905, 1
          %v1907 = vadd.f32 %v1905, %v1906
          %v1908 = vlaneseq
          %v1909 = vshrl.u32 %v1908, 7
          %v1910 = vsub.s32 4, %v1909
          %v1911 = vrot.slane %v1601, %v1910
          %v1912 = vmul.f32 %v1911, %v1587
          %v1913 = vmul.f32 %v1911, %v1588
          %v1914 = vmul.f32 %v1912, 1.442695
          %v1915 = vpow.pop %v1914
          %v1916 = vmul.f32 %v1913, 1.442695
          %v1917 = vpow.pop %v1916
          %v1918 = vmul.f32 %v1915, %v1895
          %v1919 = vmul.f32 %v1917, %v1896
          %v1920 = vlaneseq
          %v1921 = vshrl.u32 %v1920, 7
          %v1922 = vsub.s32 4, %v1921
          %v1923 = vrot.slane %v1603, %v1922
          %v1924 = vmul.f32 %v1656, %v1923
          %v1925 = vmul.f32 %v1660, %v1923
          %v1926 = vadd.f32 %v1918, %v1924
          %v1927 = vadd.f32 %v1919, %v1925
          %v1928 = vmul.f32 %v1746, %v1926
          %v1929 = vmul.f32 %v1750, %v1927
          %v1930 = vsel %vm927, %v1928, 0.0
          %v1931 = vsel %vm927, %v1929, 0.0
          %v1932 = vadd.f32 %v1930, %v1931
          %v1933 = vrot.slane %v1932, 4
          %v1934 = vadd.f32 %v1932, %v1933
          %v1935 = vrot.slane %v1934, 2
          %v1936 = vadd.f32 %v1934, %v1935
          %v1937 = vrot.slane %v1936, 1
          %v1938 = vadd.f32 %v1936, %v1937
          %v1939 = vlaneseq
          %v1940 = vshrl.u32 %v1939, 7
          %v1941 = vsub.s32 5, %v1940
          %v1942 = vrot.slane %v1601, %v1941
          %v1943 = vmul.f32 %v1942, %v1587
          %v1944 = vmul.f32 %v1942, %v1588
          %v1945 = vmul.f32 %v1943, 1.442695
          %v1946 = vpow.pop %v1945
          %v1947 = vmul.f32 %v1944, 1.442695
          %v1948 = vpow.pop %v1947
          %v1949 = vmul.f32 %v1946, %v1926
          %v1950 = vmul.f32 %v1948, %v1927
          %v1951 = vlaneseq
          %v1952 = vshrl.u32 %v1951, 7
          %v1953 = vsub.s32 5, %v1952
          %v1954 = vrot.slane %v1603, %v1953
          %v1955 = vmul.f32 %v1667, %v1954
          %v1956 = vmul.f32 %v1671, %v1954
          %v1957 = vadd.f32 %v1949, %v1955
          %v1958 = vadd.f32 %v1950, %v1956
          %v1959 = vmul.f32 %v1757, %v1957
          %v1960 = vmul.f32 %v1761, %v1958
          %v1961 = vsel %vm927, %v1959, 0.0
          %v1962 = vsel %vm927, %v1960, 0.0
          %v1963 = vadd.f32 %v1961, %v1962
          %v1964 = vrot.slane %v1963, 4
          %v1965 = vadd.f32 %v1963, %v1964
          %v1966 = vrot.slane %v1965, 2
          %v1967 = vadd.f32 %v1965, %v1966
          %v1968 = vrot.slane %v1967, 1
          %v1969 = vadd.f32 %v1967, %v1968
          %v1970 = vlaneseq
          %v1971 = vshrl.u32 %v1970, 7
          %v1972 = vsub.s32 6, %v1971
          %v1973 = vrot.slane %v1601, %v1972
          %v1974 = vmul.f32 %v1973, %v1587
          %v1975 = vmul.f32 %v1973, %v1588
          %v1976 = vmul.f32 %v1974, 1.442695
          %v1977 = vpow.pop %v1976
          %v1978 = vmul.f32 %v1975, 1.442695
          %v1979 = vpow.pop %v1978
          %v1980 = vmul.f32 %v1977, %v1957
          %v1981 = vmul.f32 %v1979, %v1958
          %v1982 = vlaneseq
          %v1983 = vshrl.u32 %v1982, 7
          %v1984 = vsub.s32 6, %v1983
          %v1985 = vrot.slane %v1603, %v1984
          %v1986 = vmul.f32 %v1678, %v1985
          %v1987 = vmul.f32 %v1682, %v1985
          %v1988 = vadd.f32 %v1980, %v1986
          %v1989 = vadd.f32 %v1981, %v1987
          %v1990 = vmul.f32 %v1768, %v1988
          %v1991 = vmul.f32 %v1772, %v1989
          %v1992 = vsel %vm927, %v1990, 0.0
          %v1993 = vsel %vm927, %v1991, 0.0
          %v1994 = vadd.f32 %v1992, %v1993
          %v1995 = vrot.slane %v1994, 4
          %v1996 = vadd.f32 %v1994, %v1995
          %v1997 = vrot.slane %v1996, 2
          %v1998 = vadd.f32 %v1996, %v1997
          %v1999 = vrot.slane %v1998, 1
          %v2000 = vadd.f32 %v1998, %v1999
          %v2001 = vlaneseq
          %v2002 = vshrl.u32 %v2001, 7
          %v2003 = vsub.s32 7, %v2002
          %v2004 = vrot.slane %v1601, %v2003
          %v2005 = vmul.f32 %v2004, %v1587
          %v2006 = vmul.f32 %v2004, %v1588
          %v2007 = vmul.f32 %v2005, 1.442695
          %v2008 = vpow.pop %v2007
          %v2009 = vmul.f32 %v2006, 1.442695
          %v2010 = vpow.pop %v2009
          %v2011 = vmul.f32 %v2008, %v1988
          %v2012 = vmul.f32 %v2010, %v1989
          %v2013 = vlaneseq
          %v2014 = vshrl.u32 %v2013, 7
          %v2015 = vsub.s32 7, %v2014
          %v2016 = vrot.slane %v1603, %v2015
          %v2017 = vmul.f32 %v1689, %v2016
          %v2018 = vmul.f32 %v1693, %v2016
          %v2019 = vadd.f32 %v2011, %v2017
          %v2020 = vadd.f32 %v2012, %v2018
          %v2021 = vmul.f32 %v1779, %v2019
          %v2022 = vmul.f32 %v1783, %v2020
          %v2023 = vsel %vm927, %v2021, 0.0
          %v2024 = vsel %vm927, %v2022, 0.0
          %v2025 = vadd.f32 %v2023, %v2024
          %v2026 = vrot.slane %v2025, 4
          %v2027 = vadd.f32 %v2025, %v2026
          %v2028 = vrot.slane %v2027, 2
          %v2029 = vadd.f32 %v2027, %v2028
          %v2030 = vrot.slane %v2029, 1
          %v2031 = vadd.f32 %v2029, %v2030
          %v2032 = vsel %vm978, %v1814, %v1845
          %v2033 = vsel %vm1034, %v2032, %v1876
          %v2034 = vsel %vm1090, %v2033, %v1907
          %vm2035 = vcmask 1043456
          %v2036 = vsel %vm2035, %v2034, %v1938
          %vm2037 = vcmask 1044480
          %v2038 = vsel %vm2037, %v2036, %v1969
          %vm2039 = vcmask 1045504
          %v2040 = vsel %vm2039, %v2038, %v2000
          %vm2041 = vcmask 1046528
          %v2042 = vsel %vm2041, %v2040, %v2031
          %s2043 = scalar_lea.vmem [#allocation8], %s1599
          %2044 = vst.msk [vmem:[%s2043] sm:$0xff] %vm927, %v2042
        $region125: #{mamba_model_forward.2} parent=67 // loop_footer
          %s1596 = sadd.s32 1, %s1592
        $region126: #{mamba_model_forward.2} parent=67 // loop_footer_branch
          %1591 = sbr.rel target = $region122
        $region127: #{mamba_model_forward.2} parent=67 // loop_exit
          _
        %2045 = vst.msk [vmem:[#allocation2] sm:$0xff] %vm927, %v1597
        %2046 = vst.msk [vmem:[#allocation2 + $0x8] sm:$0xff] %vm927, %v1598
        %v2047 = vld [vmem:[#allocation8] sm:$0xff]
        %v2048 = vld [vmem:[#allocation8 + $0x8] sm:$0xff]
        %v2049 = vld [vmem:[#allocation8 + $0x10] sm:$0xff]
        %v2050 = vld [vmem:[#allocation8 + $0x18] sm:$0xff]
        %v2051 = vld [vmem:[#allocation8 + $0x20] sm:$0xff]
        %v2052 = vld [vmem:[#allocation8 + $0x28] sm:$0xff]
        %v2053 = vld [vmem:[#allocation8 + $0x30] sm:$0xff]
        %v2054 = vld [vmem:[#allocation8 + $0x38] sm:$0xff]
        %v2055 = vld [vmem:[#allocation26] sm:$0x1]
        %v2057 = vlaneseq
        %v2058 = vshrl.u32 %v2057, 7
        %v2059 = vsub.s32 0, %v2058
        %v2060 = vrot.slane %v2055, %v2059
        %v2062 = vmul.f32 %v1164, %v2060
        %v2063 = vmul.f32 %v1165, %v2060
        %v2064 = vmul.f32 %v1166, %v2060
        %v2065 = vmul.f32 %v1167, %v2060
        %v2066 = vmul.f32 %v1168, %v2060
        %v2067 = vmul.f32 %v1169, %v2060
        %v2068 = vmul.f32 %v1170, %v2060
        %v2069 = vmul.f32 %v1171, %v2060
        %v2070 = vadd.f32 %v2047, %v2062
        %v2071 = vadd.f32 %v2048, %v2063
        %v2072 = vadd.f32 %v2049, %v2064
        %v2073 = vadd.f32 %v2050, %v2065
        %v2074 = vadd.f32 %v2051, %v2066
        %v2075 = vadd.f32 %v2052, %v2067
        %v2076 = vadd.f32 %v2053, %v2068
        %v2077 = vadd.f32 %v2054, %v2069
        %v2078 = vsub.f32 0.0, %v895
        %v2079 = vsub.f32 0.0, %v898
        %v2080 = vsub.f32 0.0, %v903
        %v2081 = vsub.f32 0.0, %v906
        %v2082 = vsub.f32 0.0, %v911
        %v2083 = vsub.f32 0.0, %v914
        %v2084 = vsub.f32 0.0, %v919
        %v2085 = vsub.f32 0.0, %v922
        %v2086 = vmul.f32 %v2078, 1.442695
        %v2087 = vpow.pop %v2086
        %v2088 = vmul.f32 %v2079, 1.442695
        %v2089 = vpow.pop %v2088
        %v2090 = vmul.f32 %v2080, 1.442695
        %v2091 = vpow.pop %v2090
        %v2092 = vmul.f32 %v2081, 1.442695
        %v2093 = vpow.pop %v2092
        %v2094 = vmul.f32 %v2082, 1.442695
        %v2095 = vpow.pop %v2094
        %v2096 = vmul.f32 %v2083, 1.442695
        %v2097 = vpow.pop %v2096
        %v2098 = vmul.f32 %v2084, 1.442695
        %v2099 = vpow.pop %v2098
        %v2100 = vmul.f32 %v2085, 1.442695
        %v2101 = vpow.pop %v2100
        %v2102 = vadd.f32 %v2087, 1.0
        %v2103 = vadd.f32 %v2089, 1.0
        %v2104 = vadd.f32 %v2091, 1.0
        %v2105 = vadd.f32 %v2093, 1.0
        %v2106 = vadd.f32 %v2095, 1.0
        %v2107 = vadd.f32 %v2097, 1.0
        %v2108 = vadd.f32 %v2099, 1.0
        %v2109 = vadd.f32 %v2101, 1.0
        %v2110 = vrcp.pop %v2102
        %v2111 = vrcp.pop %v2103
        %v2112 = vrcp.pop %v2104
        %v2113 = vrcp.pop %v2105
        %v2114 = vrcp.pop %v2106
        %v2115 = vrcp.pop %v2107
        %v2116 = vrcp.pop %v2108
        %v2117 = vrcp.pop %v2109
        %v2118 = vmul.f32 %v895, %v2110
        %v2119 = vmul.f32 %v898, %v2111
        %v2120 = vmul.f32 %v903, %v2112
        %v2121 = vmul.f32 %v906, %v2113
        %v2122 = vmul.f32 %v911, %v2114
        %v2123 = vmul.f32 %v914, %v2115
        %v2124 = vmul.f32 %v919, %v2116
        %v2125 = vmul.f32 %v922, %v2117
        %v2126 = vmul.f32 %v2070, %v2118
        %v2127 = vmul.f32 %v2071, %v2119
        %v2128 = vmul.f32 %v2072, %v2120
        %v2129 = vmul.f32 %v2073, %v2121
        %v2130 = vmul.f32 %v2074, %v2122
        %v2131 = vmul.f32 %v2075, %v2123
        %v2132 = vmul.f32 %v2076, %v2124
        %v2133 = vmul.f32 %v2077, %v2125
        %v2134 = vpack.c.bf16 %v2127, %v2126
        %v2135 = vpack.c.bf16 %v2129, %v2128
        %v2136 = vpack.c.bf16 %v2131, %v2130
        %v2137 = vpack.c.bf16 %v2133, %v2132
        %v2138 = vld [vmem:[#allocation27] sm:$0xf]
        %v2139 = vld [vmem:[#allocation27 + $0x4] sm:$0xf]
        %v2140 = vld [vmem:[#allocation27 + $0x8] sm:$0xf]
        %v2141 = vld [vmem:[#allocation27 + $0xc] sm:$0xf]
        %v2142 = vld [vmem:[#allocation27 + $0x10] sm:$0xf]
        %v2143 = vld [vmem:[#allocation27 + $0x14] sm:$0xf]
        %v2144 = vld [vmem:[#allocation27 + $0x18] sm:$0xf]
        %v2145 = vld [vmem:[#allocation27 + $0x1c] sm:$0xf]
        %v2154 = vunpack.c.l.b16 %v2138
        %v2155 = vunpack.c.l.b16 %v2139
        %v2156 = vunpack.c.l.b16 %v2140
        %v2157 = vunpack.c.l.b16 %v2141
        %v2158 = vunpack.c.l.b16 %v2142
        %v2159 = vunpack.c.l.b16 %v2143
        %v2160 = vunpack.c.l.b16 %v2144
        %v2161 = vunpack.c.l.b16 %v2145
        %v2162 = vpack.c.b16 %v2155, %v2154
        %v2163 = vpack.c.b16 %v2157, %v2156
        %v2164 = vpack.c.b16 %v2159, %v2158
        %v2165 = vpack.c.b16 %v2161, %v2160
        %v2171 = vsel %vm927, %v2134, 0
        %v2174 = vsel %vm927, %v2135, 0
        %v2177 = vsel %vm927, %v2136, 0
        %v2180 = vsel %vm927, %v2137, 0
        %2182 = vmatprep.subr.bf16.mxu0 0
        %2183 = vmatpush1.bf16.msra.mxu0 %v2162
        %2184 = vmatprep.subr.bf16.mxu0 0
        %2185 = vmatpush1.bf16.msra.mxu0 %v2163
        %2186 = vmatprep.subr.bf16.mxu0 0
        %2187 = vmatpush1.bf16.msra.mxu0 %v2164
        %2188 = vmatprep.subr.bf16.mxu0 0
        %2189 = vmatpush1.bf16.msra.mxu0 %v2165
        %2190 = vmatprep.subr.bf16.mxu0 0
        %2191 = vmatpush1.bf16.msra.mxu0 0
        %2192 = vmatprep.subr.bf16.mxu0 0
        %2193 = vmatpush1.bf16.msra.mxu0 0
        %2194 = vmatprep.subr.bf16.mxu0 0
        %2195 = vmatpush1.bf16.msra.mxu0 0
        %2196 = vmatprep.subr.bf16.mxu0 0
        %2197 = vmatpush1.bf16.msra.mxu0 0
        %2198 = vmatprep.subr.bf16.mxu0 0
        %2199 = vmatpush1.bf16.msra.mxu0 0
        %2200 = vmatprep.subr.bf16.mxu0 0
        %2201 = vmatpush1.bf16.msra.mxu0 0
        %2202 = vmatprep.subr.bf16.mxu0 0
        %2203 = vmatpush1.bf16.msra.mxu0 0
        %2204 = vmatprep.subr.bf16.mxu0 0
        %2205 = vmatpush1.bf16.msra.mxu0 0
        %2206 = vmatprep.subr.bf16.mxu0 0
        %2207 = vmatpush1.bf16.msra.mxu0 0
        %2208 = vmatprep.subr.bf16.mxu0 0
        %2209 = vmatpush1.bf16.msra.mxu0 0
        %2210 = vmatprep.subr.bf16.mxu0 0
        %2211 = vmatpush1.bf16.msra.mxu0 0
        %2212 = vmatprep.subr.bf16.mxu0 0
        %2213 = vmatpush1.bf16.msra.mxu0 0
        %2214 = vmatprep.mubr.bf16.mxu0 0
        %2215 = vmatmul.mubr.bf16.gmra.mrb[0].mxu0 %v2171
        %v2216 = vpop.f32.mrb[0].mxu0
        %v2217 = vadd.f32 0.0, %v2216
        %v2218 = vpop.f32.mrb[0].mxu0
        %v2219 = vpop.f32.mrb[0].mxu0
        %v2220 = vadd.f32 0.0, %v2219
        %v2221 = vpop.f32.mrb[0].mxu0
        %2222 = vmatprep.mubr.bf16.mxu0 0
        %2223 = vmatmul.mubr.bf16.gmra.mrb[0].mxu0 %v2174
        %v2224 = vpop.f32.mrb[0].mxu0
        %v2225 = vadd.f32 0.0, %v2224
        %v2226 = vpop.f32.mrb[0].mxu0
        %v2227 = vpop.f32.mrb[0].mxu0
        %v2228 = vadd.f32 0.0, %v2227
        %v2229 = vpop.f32.mrb[0].mxu0
        %2230 = vmatprep.mubr.bf16.mxu0 0
        %2231 = vmatmul.mubr.bf16.gmra.mrb[0].mxu0 %v2177
        %v2232 = vpop.f32.mrb[0].mxu0
        %v2233 = vadd.f32 0.0, %v2232
        %v2234 = vpop.f32.mrb[0].mxu0
        %v2235 = vpop.f32.mrb[0].mxu0
        %v2236 = vadd.f32 0.0, %v2235
        %v2237 = vpop.f32.mrb[0].mxu0
        %2238 = vmatprep.mubr.bf16.mxu0 0
        %2239 = vmatmul.mubr.bf16.gmra.mrb[0].mxu0 %v2180
        %v2240 = vpop.f32.mrb[0].mxu0
        %v2241 = vadd.f32 0.0, %v2240
        %v2242 = vpop.f32.mrb[0].mxu0
        %v2243 = vpop.f32.mrb[0].mxu0
        %v2244 = vadd.f32 0.0, %v2243
        %v2245 = vpop.f32.mrb[0].mxu0
        %2246 = vdwg.mxu0
        %2247 = vst.msk [vmem:[%s630] sm:$0xff] %vm658, %v2217
        %2248 = vst.msk [vmem:[%s630 + $0x8] sm:$0xff] %vm658, %v2220
        %2249 = vst.msk [vmem:[%s630 + $0x10] sm:$0xff] %vm658, %v2225
        %2250 = vst.msk [vmem:[%s630 + $0x18] sm:$0xff] %vm658, %v2228
        %2251 = vst.msk [vmem:[%s630 + $0x20] sm:$0xff] %vm658, %v2233
        %2252 = vst.msk [vmem:[%s630 + $0x28] sm:$0xff] %vm658, %v2236
        %2253 = vst.msk [vmem:[%s630 + $0x30] sm:$0xff] %vm658, %v2241
        %2254 = vst.msk [vmem:[%s630 + $0x38] sm:$0xff] %vm658, %v2244
        %s2255 = sand.u32 %s321, 1
        %s2256 = scalar_lea.sflag [#allocation11], %s2255
        %s2257 = sand.u32 %s321, 1
        %s2258 = smul.addr %s2257, 64
        %s2259 = scalar_lea.vmem [#allocation29], %s2258
        %s2260 = sand.u32 %s349, 1
        %s2261 = scalar_lea.sflag [#allocation31], %s2260
        %s2262 = sand.u32 %s349, 1
        %s2263 = smul.addr %s2262, 64
        %s2264 = scalar_lea.vmem [#allocation30], %s2263
        // Predicated region
        $region128: #{mamba_model_forward.2} parent=67 // pred_check
          %p2265 = pneg %p331
        $region129: #{mamba_model_forward.2} parent=67 // pred_check_branch
          %2267 = sbr.rel (%p2265) target = $region131
        $region130: #{mamba_model_forward.2} parent=67 // pred_region
          %s2268 = smul.u32 8, %s45
          %s2270 = ssub.s32 1024, 1024
          %2271 = vsyncadd %s2256, %s2270
          %s2272 = smul.addr %s44, 16
          %s2273 = sadd.s32 %s2268, %s2272
          %s2274 = smul.addr %s2273, 128
          %s2275 = scalar_lea.hbm %s12, %s2274
          %s2276 = sshll.u32 %s2259, 4
          %s2277 = int_to_ptr.vmem [resolvable:$true] %s2276
          %2282 = dma.vmem_to_hbm [thread:$0]  %s2277, 1024, %s2275, %s2256, 128, 128, 8
        $region131: #{mamba_model_forward.2} parent=67 // pred_fallthru
          _
        // Predicated region
        $region132: #{mamba_model_forward.2} parent=67 // pred_check
          %p2283 = pneg %p359
        $region133: #{mamba_model_forward.2} parent=67 // pred_check_branch
          %2285 = sbr.rel (%p2283) target = $region135
        $region134: #{mamba_model_forward.2} parent=67 // pred_region
          %s2286 = smul.u32 8, %s45
          %s2288 = ssub.s32 1024, 1024
          %2289 = vsyncadd %s2261, %s2288
          %s2290 = smul.addr %s44, 16
          %s2291 = sadd.s32 %s2286, %s2290
          %s2292 = smul.addr %s2291, 128
          %s2293 = scalar_lea.hbm %s13, %s2292
          %s2294 = sshll.u32 %s2264, 4
          %s2295 = int_to_ptr.vmem [resolvable:$true] %s2294
          %2300 = dma.vmem_to_hbm [thread:$0]  %s2295, 1024, %s2293, %s2261, 128, 128, 8
        $region135: #{mamba_model_forward.2} parent=67 // pred_fallthru
          _
      $region68: #{mamba_model_forward.2} parent=5 // pred_fallthru
        _
      %p2301 = scmp.le.s32.totalorder 2, %s35
      // Predicated region
      $region136: #{mamba_model_forward.2} parent=5 // pred_check
        %p2302 = pneg %p2301
      $region137: #{mamba_model_forward.2} parent=5 // pred_check_branch
        %2304 = sbr.rel (%p2302) target = $region139
      $region138: #{mamba_model_forward.2} parent=5 // pred_region
        %s2305 = ssub.s32 %s35, 2
        // Predicated region
        $region140: #{mamba_model_forward.2} parent=138 // pred_check
          %p2306 = pneg %p337
        $region141: #{mamba_model_forward.2} parent=138 // pred_check_branch
          %2308 = sbr.rel (%p2306) target = $region143
        $region142: #{mamba_model_forward.2} parent=138 // pred_region
          %s2309 = sand.u32 %s322, 1
          %s2310 = scalar_lea.sflag [#allocation11], %s2309
          %s2311 = sand.u32 %s322, 1
          %s2312 = smul.addr %s2311, 64
          %s2313 = scalar_lea.vmem [#allocation29], %s2312
          %2314 = dma.done %s2310, 1024
        $region143: #{mamba_model_forward.2} parent=138 // pred_fallthru
          _
        // Predicated region
        $region144: #{mamba_model_forward.2} parent=138 // pred_check
          %p2315 = pneg %p365
        $region145: #{mamba_model_forward.2} parent=138 // pred_check_branch
          %2317 = sbr.rel (%p2315) target = $region147
        $region146: #{mamba_model_forward.2} parent=138 // pred_region
          %s2318 = sand.u32 %s350, 1
          %s2319 = scalar_lea.sflag [#allocation31], %s2318
          %s2320 = sand.u32 %s350, 1
          %s2321 = smul.addr %s2320, 64
          %s2322 = scalar_lea.vmem [#allocation30], %s2321
          %2323 = dma.done %s2319, 1024
        $region147: #{mamba_model_forward.2} parent=138 // pred_fallthru
          _
      $region139: #{mamba_model_forward.2} parent=5 // pred_fallthru
        _
    $region6: #{mamba_model_forward.2} parent=1 // loop_footer
      %s39 = sadd.s32 1, %s35
    $region7: #{mamba_model_forward.2} parent=1 // loop_footer_branch
      %34 = sbr.rel target = $region3
    $region8: #{mamba_model_forward.2} parent=1 // loop_exit
      _
    %2324 = vsyncpa [#allocation10], 1
    %s2325 = scalar_lea.sflag [#allocation10], 1
    %2326 = vsyncpa %s2325, 1
    %2327 = vsyncpa [#allocation13], 1
    %2328 = vsyncpa [#allocation16], 1
    %2329 = vsyncpa [#allocation19], 1
    %2330 = vsyncpa [#allocation22], 1
    %2331 = vsyncpa [#allocation25], 1
    %2332 = vsyncpa [#allocation28], 1
    %2333 = vsyncpa [#allocation11], 1
    %s2334 = scalar_lea.sflag [#allocation11], 1
    %2335 = vsyncpa %s2334, 1
    %2336 = vsyncpa [#allocation31], 1
    %s2337 = scalar_lea.sflag [#allocation31], 1
    %2338 = vsyncpa %s2337, 1

// kernel: mamba_model_forward.3
$region0: #{mamba_model_forward.3}
  #allocation0 [shape = 'u32[]', space=smem, size = 0x4, offset = 0x4, fixed_abs, tag = 'smem constant byte address 0x4 - core index']
  #allocation1 [shape = 'u32[144,128]{1,0:T(1,128)}', space=vmem, size = 0x12000, scoped, tag = 'internal scratch']
  #allocation2 [shape = 'f32[16,64]{1,0:T(8,128)}', space=vmem, size = 0x2000, scoped, tag = 'scratch operand']
  #allocation3 [shape = 'f32[8,64]{1,0:T(8,128)}', space=vmem, size = 0x1000, scoped, tag = 'scratch operand']
  #allocation4 [shape = 'f32[64,64]{1,0:T(8,128)}', space=vmem, size = 0x8000, scoped, tag = 'scratch operand']
  #allocation5 [shape = 'f32[64,64]{1,0:T(8,128)}', space=vmem, size = 0x8000, scoped, tag = 'scratch operand']
  #allocation6 [shape = 'f32[64,16]{1,0:T(8,128)}', space=vmem, size = 0x8000, scoped, tag = 'scratch operand']
  #allocation7 [shape = 'f32[64,16]{1,0:T(8,128)}', space=vmem, size = 0x8000, scoped, tag = 'scratch operand']
  #allocation8 [shape = 'f32[64,64]{1,0:T(8,128)}', space=vmem, size = 0x8000, scoped, tag = 'scratch operand']
  %s0 = inlined_call_operand.hbm [shape: f32[2,128,32], index: 0, kind: input, shape index: {}, may-alias: {0,13}]
  %s1 = inlined_call_operand.hbm [shape: f32[2,128,32], index: 1, kind: input, shape index: {}, may-alias: {1,14}]
  %s2 = inlined_call_operand.hbm [shape: f32[1,32], index: 2, kind: input, shape index: {}]
  %s3 = inlined_call_operand.hbm [shape: bf16[32,64], index: 3, kind: input, shape index: {}]
  %s4 = inlined_call_operand.hbm [shape: bf16[32,64], index: 4, kind: input, shape index: {}]
  %s5 = inlined_call_operand.hbm [shape: f32[4,64], index: 5, kind: input, shape index: {}]
  %s6 = inlined_call_operand.hbm [shape: f32[1,64], index: 6, kind: input, shape index: {}]
  %s7 = inlined_call_operand.hbm [shape: bf16[64,34], index: 7, kind: input, shape index: {}]
  %s8 = inlined_call_operand.hbm [shape: bf16[2,64], index: 8, kind: input, shape index: {}]
  %s9 = inlined_call_operand.hbm [shape: f32[1,64], index: 9, kind: input, shape index: {}]
  %s10 = inlined_call_operand.hbm [shape: f32[16,64], index: 10, kind: input, shape index: {}]
  %s11 = inlined_call_operand.hbm [shape: f32[1,64], index: 11, kind: input, shape index: {}]
  %s12 = inlined_call_operand.hbm [shape: bf16[64,32], index: 12, kind: input, shape index: {}]
  %s13 = inlined_call_operand.hbm [shape: f32[2,128,32], index: 13, kind: output, shape index: {0}, may-alias: {0,13}]
  %s14 = inlined_call_operand.hbm [shape: f32[2,128,32], index: 14, kind: output, shape index: {1}, may-alias: {1,14}]
  %15 = xla_tuple %s13, %s14
  %s16 = sld [smem:[#allocation0]]
  $region156: #{mamba_model_forward.3} parent=0
    _
  %s18 = ssub.s32 1, %s16
  %s19 = scalar_select 0, %s18, %s16
  $region1: #{mamba_model_forward.3} parent=0
    #allocation9 [shape = 'u8[65536]{0}', space=vmem, size = 0x10000, scoped, tag = 'input window, operand 0']
    #allocation10 [shape = 's32[2]{0}', space=sflag, size = 0x8, scoped, tag = 'scoped memory for mamba_model_forward.3']
    #allocation11 [shape = 's32[2]{0}', space=sflag, size = 0x8, scoped, tag = 'scoped memory for mamba_model_forward.3']
    #allocation12 [shape = 'u8[65536]{0}', space=vmem, size = 0x10000, scoped, tag = 'input window, operand 1']
    #allocation13 [shape = 's32[2]{0}', space=sflag, size = 0x8, scoped, tag = 'scoped memory for mamba_model_forward.3']
    #allocation14 [shape = 'u8[512]{0}', space=vmem, size = 0x400, scoped, tag = 'input window, operand 2, single buffered']
    #allocation15 [shape = 'u8[8192]{0}', space=vmem, size = 0x2000, scoped, tag = 'input window, operand 3, single buffered']
    #allocation16 [shape = 's32[1]{0}', space=sflag, size = 0x4, scoped, tag = 'scoped memory for mamba_model_forward.3']
    #allocation17 [shape = 'u8[8192]{0}', space=vmem, size = 0x2000, scoped, tag = 'input window, operand 4, single buffered']
    #allocation18 [shape = 'u8[2048]{0}', space=vmem, size = 0x800, scoped, tag = 'input window, operand 5, single buffered']
    #allocation19 [shape = 's32[1]{0}', space=sflag, size = 0x4, scoped, tag = 'scoped memory for mamba_model_forward.3']
    #allocation20 [shape = 'u8[512]{0}', space=vmem, size = 0x400, scoped, tag = 'input window, operand 6, single buffered']
    #allocation21 [shape = 'u8[16384]{0}', space=vmem, size = 0x4000, scoped, tag = 'input window, operand 7, single buffered']
    #allocation22 [shape = 's32[1]{0}', space=sflag, size = 0x4, scoped, tag = 'scoped memory for mamba_model_forward.3']
    #allocation23 [shape = 'u8[512]{0}', space=vmem, size = 0x400, scoped, tag = 'input window, operand 8, single buffered']
    #allocation24 [shape = 'u8[512]{0}', space=vmem, size = 0x400, scoped, tag = 'input window, operand 9, single buffered']
    #allocation25 [shape = 's32[1]{0}', space=sflag, size = 0x4, scoped, tag = 'scoped memory for mamba_model_forward.3']
    #allocation26 [shape = 'u8[8192]{0}', space=vmem, size = 0x2000, scoped, tag = 'input window, operand 10, single buffered']
    #allocation27 [shape = 'u8[512]{0}', space=vmem, size = 0x400, scoped, tag = 'input window, operand 11, single buffered']
    #allocation28 [shape = 's32[1]{0}', space=sflag, size = 0x4, scoped, tag = 'scoped memory for mamba_model_forward.3']
    #allocation29 [shape = 'u8[16384]{0}', space=vmem, size = 0x4000, scoped, tag = 'input window, operand 12, single buffered']
    #allocation30 [shape = 'u8[65536]{0}', space=vmem, size = 0x10000, scoped, tag = 'output window, operand 0']
    #allocation31 [shape = 'u8[65536]{0}', space=vmem, size = 0x10000, scoped, tag = 'output window, operand 1']
    #allocation32 [shape = 's32[2]{0}', space=sflag, size = 0x8, scoped, tag = 'scoped memory for mamba_model_forward.3']
    %20 = vsyncpa [#allocation10], 0
    %s21 = scalar_lea.sflag [#allocation10], 1
    %22 = vsyncpa %s21, 0
    %23 = vsyncpa [#allocation13], 0
    %s24 = scalar_lea.sflag [#allocation13], 1
    %25 = vsyncpa %s24, 0
    %26 = vsyncpa [#allocation16], 0
    %27 = vsyncpa [#allocation19], 0
    %28 = vsyncpa [#allocation22], 0
    %29 = vsyncpa [#allocation25], 0
    %30 = vsyncpa [#allocation28], 0
    %31 = vsyncpa [#allocation11], 0
    %s32 = scalar_lea.sflag [#allocation11], 1
    %33 = vsyncpa %s32, 0
    %34 = vsyncpa [#allocation32], 0
    %s35 = scalar_lea.sflag [#allocation32], 1
    %36 = vsyncpa %s35, 0
    loop: start=0, step=1, limit=6
    $region2: #{mamba_model_forward.3} parent=1 // loop_pre_header
      _
    $region3: #{mamba_model_forward.3} parent=1 // loop_header
      %s38 = sphi 0, %s42
      %p39 = scmp.ge.s32.totalorder %s38, 6
      %s45 = sphi 0, %s57
      %s46 = sphi 0, %s53
      %s47 = sphi 0, %s45
      %s48 = sphi 0, %s46
      %s49 = sphi 0, %s47
      %s50 = sphi 0, %s48
      %s62 = sphi 0, %s64
      %s65 = sphi 0, %s62
      %s66 = sphi 0, %s65
      %s82 = sphi 0, %s66
      %s90 = sphi 0, %s92
      %s93 = sphi 0, %s90
      %s94 = sphi 0, %s93
      %s110 = sphi 0, %s94
      %s114 = sphi 0, %s114
      %s116 = sphi 0, %s114
      %s117 = sphi 0, %s116
      %s131 = sphi 0, %s117
      %s135 = sphi 0, %s135
      %s137 = sphi 0, %s135
      %s138 = sphi 0, %s137
      %s152 = sphi 0, %s138
      %s156 = sphi 0, %s156
      %s158 = sphi 0, %s156
      %s159 = sphi 0, %s158
      %s173 = sphi 0, %s159
      %s177 = sphi 0, %s177
      %s179 = sphi 0, %s177
      %s180 = sphi 0, %s179
      %s194 = sphi 0, %s180
      %s198 = sphi 0, %s198
      %s200 = sphi 0, %s198
      %s201 = sphi 0, %s200
      %s215 = sphi 0, %s201
      %s219 = sphi 0, %s219
      %s221 = sphi 0, %s219
      %s222 = sphi 0, %s221
      %s236 = sphi 0, %s222
      %s240 = sphi 0, %s240
      %s242 = sphi 0, %s240
      %s243 = sphi 0, %s242
      %s257 = sphi 0, %s243
      %s261 = sphi 0, %s261
      %s263 = sphi 0, %s261
      %s264 = sphi 0, %s263
      %s278 = sphi 0, %s264
      %s282 = sphi 0, %s282
      %s284 = sphi 0, %s282
      %s285 = sphi 0, %s284
      %s299 = sphi 0, %s285
      %s303 = sphi 0, %s303
      %s305 = sphi 0, %s303
      %s306 = sphi 0, %s305
      %s320 = sphi 0, %s306
      %s324 = sphi 0, %s324
      %s326 = sphi 0, %s324
      %s327 = sphi 0, %s326
      %s341 = sphi 0, %s327
      %s349 = sphi 0, %s351
      %s352 = sphi 0, %s349
      %s353 = sphi 0, %s352
      %s369 = sphi 0, %s353
      %s377 = sphi 0, %s379
      %s380 = sphi 0, %s377
      %s381 = sphi 0, %s380
      %s397 = sphi 0, %s381
    $region4: #{mamba_model_forward.3} parent=1 // loop_header_branch
      %41 = sbr.rel (%p39) target = $region8
    $region5: #{mamba_model_forward.3} parent=1 // loop_body
      %s43 = ssub.s32 %s38, 1
      %s44 = ssub.s32 %s38, 2
      %s51 = sadd.s32 1, %s46
      %p52 = scmp.ge.s32.totalorder %s51, 2
      %s53 = scalar_select %p52, 0, %s51
      %s54 = sadd.s32 1, %s45
      %s55 = scalar_select %p52, %s54, %s45
      %p56 = scmp.ge.s32.totalorder %s55, 2
      %s57 = scalar_select %p56, 0, %s55
      %s58 = ssub.s32 %s45, %s57
      %s59 = ssub.s32 %s46, %s53
      %s60 = sor.u32 %s58, %s59
      %p61 = scmp.eq.s32.totalorder %s60, 0
      %s63 = sadd.s32 %s62, 1
      %s64 = scalar_select %p61, %s62, %s63
      %p67 = pneg %p61
      %p68 = scmp.eq.s32.totalorder %s38, 3
      %p69 = por %p67, %p68
      %p70 = scmp.ne.s32.totalorder %s62, %s65
      %p71 = scmp.eq.s32.totalorder %s38, 0
      %p72 = por %p70, %p71
      %p73 = scmp.ne.s32.totalorder %s62, %s65
      %p74 = scmp.eq.s32.totalorder %s43, 3
      %p75 = por %p73, %p74
      %p76 = scmp.ne.s32.totalorder %s65, %s66
      %p77 = scmp.eq.s32.totalorder %s43, 0
      %p78 = por %p76, %p77
      %p79 = scmp.ne.s32.totalorder %s65, %s66
      %p80 = scmp.eq.s32.totalorder %s44, 3
      %p81 = por %p79, %p80
      %p83 = scmp.ne.s32.totalorder %s66, %s82
      %p84 = scmp.eq.s32.totalorder %s44, 0
      %p85 = por %p83, %p84
      %s86 = ssub.s32 %s45, %s57
      %s87 = ssub.s32 %s46, %s53
      %s88 = sor.u32 %s86, %s87
      %p89 = scmp.eq.s32.totalorder %s88, 0
      %s91 = sadd.s32 %s90, 1
      %s92 = scalar_select %p89, %s90, %s91
      %p95 = pneg %p89
      %p96 = scmp.eq.s32.totalorder %s38, 3
      %p97 = por %p95, %p96
      %p98 = scmp.ne.s32.totalorder %s90, %s93
      %p99 = scmp.eq.s32.totalorder %s38, 0
      %p100 = por %p98, %p99
      %p101 = scmp.ne.s32.totalorder %s90, %s93
      %p102 = scmp.eq.s32.totalorder %s43, 3
      %p103 = por %p101, %p102
      %p104 = scmp.ne.s32.totalorder %s93, %s94
      %p105 = scmp.eq.s32.totalorder %s43, 0
      %p106 = por %p104, %p105
      %p107 = scmp.ne.s32.totalorder %s93, %s94
      %p108 = scmp.eq.s32.totalorder %s44, 3
      %p109 = por %p107, %p108
      %p111 = scmp.ne.s32.totalorder %s94, %s110
      %p112 = scmp.eq.s32.totalorder %s44, 0
      %p113 = por %p111, %p112
      %s115 = sadd.s32 %s114, 1
      %p118 = scmp.eq.s32.totalorder %s38, 3
      %p119 = scmp.ne.s32.totalorder %s114, %s116
      %p120 = scmp.eq.s32.totalorder %s38, 0
      %p121 = por %p119, %p120
      %p122 = scmp.ne.s32.totalorder %s114, %s116
      %p123 = scmp.eq.s32.totalorder %s43, 3
      %p124 = por %p122, %p123
      %p125 = scmp.ne.s32.totalorder %s116, %s117
      %p126 = scmp.eq.s32.totalorder %s43, 0
      %p127 = por %p125, %p126
      %p128 = scmp.ne.s32.totalorder %s116, %s117
      %p129 = scmp.eq.s32.totalorder %s44, 3
      %p130 = por %p128, %p129
      %p132 = scmp.ne.s32.totalorder %s117, %s131
      %p133 = scmp.eq.s32.totalorder %s44, 0
      %p134 = por %p132, %p133
      %s136 = sadd.s32 %s135, 1
      %p139 = scmp.eq.s32.totalorder %s38, 3
      %p140 = scmp.ne.s32.totalorder %s135, %s137
      %p141 = scmp.eq.s32.totalorder %s38, 0
      %p142 = por %p140, %p141
      %p143 = scmp.ne.s32.totalorder %s135, %s137
      %p144 = scmp.eq.s32.totalorder %s43, 3
      %p145 = por %p143, %p144
      %p146 = scmp.ne.s32.totalorder %s137, %s138
      %p147 = scmp.eq.s32.totalorder %s43, 0
      %p148 = por %p146, %p147
      %p149 = scmp.ne.s32.totalorder %s137, %s138
      %p150 = scmp.eq.s32.totalorder %s44, 3
      %p151 = por %p149, %p150
      %p153 = scmp.ne.s32.totalorder %s138, %s152
      %p154 = scmp.eq.s32.totalorder %s44, 0
      %p155 = por %p153, %p154
      %s157 = sadd.s32 %s156, 1
      %p160 = scmp.eq.s32.totalorder %s38, 3
      %p161 = scmp.ne.s32.totalorder %s156, %s158
      %p162 = scmp.eq.s32.totalorder %s38, 0
      %p163 = por %p161, %p162
      %p164 = scmp.ne.s32.totalorder %s156, %s158
      %p165 = scmp.eq.s32.totalorder %s43, 3
      %p166 = por %p164, %p165
      %p167 = scmp.ne.s32.totalorder %s158, %s159
      %p168 = scmp.eq.s32.totalorder %s43, 0
      %p169 = por %p167, %p168
      %p170 = scmp.ne.s32.totalorder %s158, %s159
      %p171 = scmp.eq.s32.totalorder %s44, 3
      %p172 = por %p170, %p171
      %p174 = scmp.ne.s32.totalorder %s159, %s173
      %p175 = scmp.eq.s32.totalorder %s44, 0
      %p176 = por %p174, %p175
      %s178 = sadd.s32 %s177, 1
      %p181 = scmp.eq.s32.totalorder %s38, 3
      %p182 = scmp.ne.s32.totalorder %s177, %s179
      %p183 = scmp.eq.s32.totalorder %s38, 0
      %p184 = por %p182, %p183
      %p185 = scmp.ne.s32.totalorder %s177, %s179
      %p186 = scmp.eq.s32.totalorder %s43, 3
      %p187 = por %p185, %p186
      %p188 = scmp.ne.s32.totalorder %s179, %s180
      %p189 = scmp.eq.s32.totalorder %s43, 0
      %p190 = por %p188, %p189
      %p191 = scmp.ne.s32.totalorder %s179, %s180
      %p192 = scmp.eq.s32.totalorder %s44, 3
      %p193 = por %p191, %p192
      %p195 = scmp.ne.s32.totalorder %s180, %s194
      %p196 = scmp.eq.s32.totalorder %s44, 0
      %p197 = por %p195, %p196
      %s199 = sadd.s32 %s198, 1
      %p202 = scmp.eq.s32.totalorder %s38, 3
      %p203 = scmp.ne.s32.totalorder %s198, %s200
      %p204 = scmp.eq.s32.totalorder %s38, 0
      %p205 = por %p203, %p204
      %p206 = scmp.ne.s32.totalorder %s198, %s200
      %p207 = scmp.eq.s32.totalorder %s43, 3
      %p208 = por %p206, %p207
      %p209 = scmp.ne.s32.totalorder %s200, %s201
      %p210 = scmp.eq.s32.totalorder %s43, 0
      %p211 = por %p209, %p210
      %p212 = scmp.ne.s32.totalorder %s200, %s201
      %p213 = scmp.eq.s32.totalorder %s44, 3
      %p214 = por %p212, %p213
      %p216 = scmp.ne.s32.totalorder %s201, %s215
      %p217 = scmp.eq.s32.totalorder %s44, 0
      %p218 = por %p216, %p217
      %s220 = sadd.s32 %s219, 1
      %p223 = scmp.eq.s32.totalorder %s38, 3
      %p224 = scmp.ne.s32.totalorder %s219, %s221
      %p225 = scmp.eq.s32.totalorder %s38, 0
      %p226 = por %p224, %p225
      %p227 = scmp.ne.s32.totalorder %s219, %s221
      %p228 = scmp.eq.s32.totalorder %s43, 3
      %p229 = por %p227, %p228
      %p230 = scmp.ne.s32.totalorder %s221, %s222
      %p231 = scmp.eq.s32.totalorder %s43, 0
      %p232 = por %p230, %p231
      %p233 = scmp.ne.s32.totalorder %s221, %s222
      %p234 = scmp.eq.s32.totalorder %s44, 3
      %p235 = por %p233, %p234
      %p237 = scmp.ne.s32.totalorder %s222, %s236
      %p238 = scmp.eq.s32.totalorder %s44, 0
      %p239 = por %p237, %p238
      %s241 = sadd.s32 %s240, 1
      %p244 = scmp.eq.s32.totalorder %s38, 3
      %p245 = scmp.ne.s32.totalorder %s240, %s242
      %p246 = scmp.eq.s32.totalorder %s38, 0
      %p247 = por %p245, %p246
      %p248 = scmp.ne.s32.totalorder %s240, %s242
      %p249 = scmp.eq.s32.totalorder %s43, 3
      %p250 = por %p248, %p249
      %p251 = scmp.ne.s32.totalorder %s242, %s243
      %p252 = scmp.eq.s32.totalorder %s43, 0
      %p253 = por %p251, %p252
      %p254 = scmp.ne.s32.totalorder %s242, %s243
      %p255 = scmp.eq.s32.totalorder %s44, 3
      %p256 = por %p254, %p255
      %p258 = scmp.ne.s32.totalorder %s243, %s257
      %p259 = scmp.eq.s32.totalorder %s44, 0
      %p260 = por %p258, %p259
      %s262 = sadd.s32 %s261, 1
      %p265 = scmp.eq.s32.totalorder %s38, 3
      %p266 = scmp.ne.s32.totalorder %s261, %s263
      %p267 = scmp.eq.s32.totalorder %s38, 0
      %p268 = por %p266, %p267
      %p269 = scmp.ne.s32.totalorder %s261, %s263
      %p270 = scmp.eq.s32.totalorder %s43, 3
      %p271 = por %p269, %p270
      %p272 = scmp.ne.s32.totalorder %s263, %s264
      %p273 = scmp.eq.s32.totalorder %s43, 0
      %p274 = por %p272, %p273
      %p275 = scmp.ne.s32.totalorder %s263, %s264
      %p276 = scmp.eq.s32.totalorder %s44, 3
      %p277 = por %p275, %p276
      %p279 = scmp.ne.s32.totalorder %s264, %s278
      %p280 = scmp.eq.s32.totalorder %s44, 0
      %p281 = por %p279, %p280
      %s283 = sadd.s32 %s282, 1
      %p286 = scmp.eq.s32.totalorder %s38, 3
      %p287 = scmp.ne.s32.totalorder %s282, %s284
      %p288 = scmp.eq.s32.totalorder %s38, 0
      %p289 = por %p287, %p288
      %p290 = scmp.ne.s32.totalorder %s282, %s284
      %p291 = scmp.eq.s32.totalorder %s43, 3
      %p292 = por %p290, %p291
      %p293 = scmp.ne.s32.totalorder %s284, %s285
      %p294 = scmp.eq.s32.totalorder %s43, 0
      %p295 = por %p293, %p294
      %p296 = scmp.ne.s32.totalorder %s284, %s285
      %p297 = scmp.eq.s32.totalorder %s44, 3
      %p298 = por %p296, %p297
      %p300 = scmp.ne.s32.totalorder %s285, %s299
      %p301 = scmp.eq.s32.totalorder %s44, 0
      %p302 = por %p300, %p301
      %s304 = sadd.s32 %s303, 1
      %p307 = scmp.eq.s32.totalorder %s38, 3
      %p308 = scmp.ne.s32.totalorder %s303, %s305
      %p309 = scmp.eq.s32.totalorder %s38, 0
      %p310 = por %p308, %p309
      %p311 = scmp.ne.s32.totalorder %s303, %s305
      %p312 = scmp.eq.s32.totalorder %s43, 3
      %p313 = por %p311, %p312
      %p314 = scmp.ne.s32.totalorder %s305, %s306
      %p315 = scmp.eq.s32.totalorder %s43, 0
      %p316 = por %p314, %p315
      %p317 = scmp.ne.s32.totalorder %s305, %s306
      %p318 = scmp.eq.s32.totalorder %s44, 3
      %p319 = por %p317, %p318
      %p321 = scmp.ne.s32.totalorder %s306, %s320
      %p322 = scmp.eq.s32.totalorder %s44, 0
      %p323 = por %p321, %p322
      %s325 = sadd.s32 %s324, 1
      %p328 = scmp.eq.s32.totalorder %s38, 3
      %p329 = scmp.ne.s32.totalorder %s324, %s326
      %p330 = scmp.eq.s32.totalorder %s38, 0
      %p331 = por %p329, %p330
      %p332 = scmp.ne.s32.totalorder %s324, %s326
      %p333 = scmp.eq.s32.totalorder %s43, 3
      %p334 = por %p332, %p333
      %p335 = scmp.ne.s32.totalorder %s326, %s327
      %p336 = scmp.eq.s32.totalorder %s43, 0
      %p337 = por %p335, %p336
      %p338 = scmp.ne.s32.totalorder %s326, %s327
      %p339 = scmp.eq.s32.totalorder %s44, 3
      %p340 = por %p338, %p339
      %p342 = scmp.ne.s32.totalorder %s327, %s341
      %p343 = scmp.eq.s32.totalorder %s44, 0
      %p344 = por %p342, %p343
      %s345 = ssub.s32 %s45, %s57
      %s346 = ssub.s32 %s46, %s53
      %s347 = sor.u32 %s345, %s346
      %p348 = scmp.eq.s32.totalorder %s347, 0
      %s350 = sadd.s32 %s349, 1
      %s351 = scalar_select %p348, %s349, %s350
      %p354 = pneg %p348
      %p355 = scmp.eq.s32.totalorder %s38, 3
      %p356 = por %p354, %p355
      %p357 = scmp.ne.s32.totalorder %s349, %s352
      %p358 = scmp.eq.s32.totalorder %s38, 0
      %p359 = por %p357, %p358
      %p360 = scmp.ne.s32.totalorder %s349, %s352
      %p361 = scmp.eq.s32.totalorder %s43, 3
      %p362 = por %p360, %p361
      %p363 = scmp.ne.s32.totalorder %s352, %s353
      %p364 = scmp.eq.s32.totalorder %s43, 0
      %p365 = por %p363, %p364
      %p366 = scmp.ne.s32.totalorder %s352, %s353
      %p367 = scmp.eq.s32.totalorder %s44, 3
      %p368 = por %p366, %p367
      %p370 = scmp.ne.s32.totalorder %s353, %s369
      %p371 = scmp.eq.s32.totalorder %s44, 0
      %p372 = por %p370, %p371
      %s373 = ssub.s32 %s45, %s57
      %s374 = ssub.s32 %s46, %s53
      %s375 = sor.u32 %s373, %s374
      %p376 = scmp.eq.s32.totalorder %s375, 0
      %s378 = sadd.s32 %s377, 1
      %s379 = scalar_select %p376, %s377, %s378
      %p382 = pneg %p376
      %p383 = scmp.eq.s32.totalorder %s38, 3
      %p384 = por %p382, %p383
      %p385 = scmp.ne.s32.totalorder %s377, %s380
      %p386 = scmp.eq.s32.totalorder %s38, 0
      %p387 = por %p385, %p386
      %p388 = scmp.ne.s32.totalorder %s377, %s380
      %p389 = scmp.eq.s32.totalorder %s43, 3
      %p390 = por %p388, %p389
      %p391 = scmp.ne.s32.totalorder %s380, %s381
      %p392 = scmp.eq.s32.totalorder %s43, 0
      %p393 = por %p391, %p392
      %p394 = scmp.ne.s32.totalorder %s380, %s381
      %p395 = scmp.eq.s32.totalorder %s44, 3
      %p396 = por %p394, %p395
      %p398 = scmp.ne.s32.totalorder %s381, %s397
      %p399 = scmp.eq.s32.totalorder %s44, 0
      %p400 = por %p398, %p399
      %p401 = scmp.le.s32.totalorder 1, %s38
      %p402 = scmp.lt.s32.totalorder %s38, 5
      %p403 = pnand %p401, %p402
      %p404 = pneg %p403
      // Predicated region
      $region9: #{mamba_model_forward.3} parent=5 // pred_check
        _
      $region10: #{mamba_model_forward.3} parent=5 // pred_check_branch
        %406 = sbr.rel (%p403) target = $region12
      $region11: #{mamba_model_forward.3} parent=5 // pred_region
        %s407 = ssub.s32 %s38, 1
        // Predicated region
        $region13: #{mamba_model_forward.3} parent=11 // pred_check
          %p408 = pneg %p127
        $region14: #{mamba_model_forward.3} parent=11 // pred_check_branch
          %410 = sbr.rel (%p408) target = $region16
        $region15: #{mamba_model_forward.3} parent=11 // pred_region
          %s412 = ssub.s32 16, 16
          %413 = vsyncadd [#allocation13], %s412
          %s415 = sshll.u32 [#allocation14], 4
          %s416 = int_to_ptr.vmem [resolvable:$true] %s415
          %418 = dma.hbm_to_vmem [thread:$0]  %s2, 16, %s416, [#allocation13]
        $region16: #{mamba_model_forward.3} parent=11 // pred_fallthru
          _
        // Predicated region
        $region17: #{mamba_model_forward.3} parent=11 // pred_check
          %p419 = pneg %p148
        $region18: #{mamba_model_forward.3} parent=11 // pred_check_branch
          %421 = sbr.rel (%p419) target = $region20
        $region19: #{mamba_model_forward.3} parent=11 // pred_region
          %s423 = ssub.s32 256, 256
          %424 = vsyncadd [#allocation16], %s423
          %s425 = sshll.u32 [#allocation15], 4
          %s426 = int_to_ptr.vmem [resolvable:$true] %s425
          %431 = dma.hbm_to_vmem [thread:$0]  %s3, 256, %s426, [#allocation16], 64, 64, 4
        $region20: #{mamba_model_forward.3} parent=11 // pred_fallthru
          _
        // Predicated region
        $region21: #{mamba_model_forward.3} parent=11 // pred_check
          %p432 = pneg %p169
        $region22: #{mamba_model_forward.3} parent=11 // pred_check_branch
          %434 = sbr.rel (%p432) target = $region24
        $region23: #{mamba_model_forward.3} parent=11 // pred_region
          %s436 = ssub.s32 256, 256
          %437 = vsyncadd [#allocation16], %s436
          %s438 = sshll.u32 [#allocation17], 4
          %s439 = int_to_ptr.vmem [resolvable:$true] %s438
          %444 = dma.hbm_to_vmem [thread:$0]  %s4, 256, %s439, [#allocation16], 64, 64, 4
        $region24: #{mamba_model_forward.3} parent=11 // pred_fallthru
          _
        // Predicated region
        $region25: #{mamba_model_forward.3} parent=11 // pred_check
          %p445 = pneg %p190
        $region26: #{mamba_model_forward.3} parent=11 // pred_check_branch
          %447 = sbr.rel (%p445) target = $region28
        $region27: #{mamba_model_forward.3} parent=11 // pred_region
          %s449 = ssub.s32 64, 64
          %450 = vsyncadd [#allocation19], %s449
          %s452 = sshll.u32 [#allocation18], 4
          %s453 = int_to_ptr.vmem [resolvable:$true] %s452
          %455 = dma.hbm_to_vmem [thread:$0]  %s5, 64, %s453, [#allocation19]
        $region28: #{mamba_model_forward.3} parent=11 // pred_fallthru
          _
        // Predicated region
        $region29: #{mamba_model_forward.3} parent=11 // pred_check
          %p456 = pneg %p211
        $region30: #{mamba_model_forward.3} parent=11 // pred_check_branch
          %458 = sbr.rel (%p456) target = $region32
        $region31: #{mamba_model_forward.3} parent=11 // pred_region
          %s460 = ssub.s32 16, 16
          %461 = vsyncadd [#allocation19], %s460
          %s463 = sshll.u32 [#allocation20], 4
          %s464 = int_to_ptr.vmem [resolvable:$true] %s463
          %466 = dma.hbm_to_vmem [thread:$0]  %s6, 16, %s464, [#allocation19]
        $region32: #{mamba_model_forward.3} parent=11 // pred_fallthru
          _
        // Predicated region
        $region33: #{mamba_model_forward.3} parent=11 // pred_check
          %p467 = pneg %p232
        $region34: #{mamba_model_forward.3} parent=11 // pred_check_branch
          %469 = sbr.rel (%p467) target = $region36
        $region35: #{mamba_model_forward.3} parent=11 // pred_region
          %s471 = ssub.s32 512, 512
          %472 = vsyncadd [#allocation22], %s471
          %s473 = sshll.u32 [#allocation21], 4
          %s474 = int_to_ptr.vmem [resolvable:$true] %s473
          %479 = dma.hbm_to_vmem [thread:$0]  %s7, 512, %s474, [#allocation22], 64, 64, 4
        $region36: #{mamba_model_forward.3} parent=11 // pred_fallthru
          _
        // Predicated region
        $region37: #{mamba_model_forward.3} parent=11 // pred_check
          %p480 = pneg %p253
        $region38: #{mamba_model_forward.3} parent=11 // pred_check_branch
          %482 = sbr.rel (%p480) target = $region40
        $region39: #{mamba_model_forward.3} parent=11 // pred_region
          %s484 = ssub.s32 16, 16
          %485 = vsyncadd [#allocation22], %s484
          %s487 = sshll.u32 [#allocation23], 4
          %s488 = int_to_ptr.vmem [resolvable:$true] %s487
          %490 = dma.hbm_to_vmem [thread:$0]  %s8, 16, %s488, [#allocation22]
        $region40: #{mamba_model_forward.3} parent=11 // pred_fallthru
          _
        // Predicated region
        $region41: #{mamba_model_forward.3} parent=11 // pred_check
          %p491 = pneg %p274
        $region42: #{mamba_model_forward.3} parent=11 // pred_check_branch
          %493 = sbr.rel (%p491) target = $region44
        $region43: #{mamba_model_forward.3} parent=11 // pred_region
          %s495 = ssub.s32 16, 16
          %496 = vsyncadd [#allocation25], %s495
          %s498 = sshll.u32 [#allocation24], 4
          %s499 = int_to_ptr.vmem [resolvable:$true] %s498
          %501 = dma.hbm_to_vmem [thread:$0]  %s9, 16, %s499, [#allocation25]
        $region44: #{mamba_model_forward.3} parent=11 // pred_fallthru
          _
        // Predicated region
        $region45: #{mamba_model_forward.3} parent=11 // pred_check
          %p502 = pneg %p295
        $region46: #{mamba_model_forward.3} parent=11 // pred_check_branch
          %504 = sbr.rel (%p502) target = $region48
        $region47: #{mamba_model_forward.3} parent=11 // pred_region
          %s506 = ssub.s32 256, 256
          %507 = vsyncadd [#allocation25], %s506
          %s508 = sshll.u32 [#allocation26], 4
          %s509 = int_to_ptr.vmem [resolvable:$true] %s508
          %514 = dma.hbm_to_vmem [thread:$0]  %s10, 256, %s509, [#allocation25], 128, 128, 8
        $region48: #{mamba_model_forward.3} parent=11 // pred_fallthru
          _
        // Predicated region
        $region49: #{mamba_model_forward.3} parent=11 // pred_check
          %p515 = pneg %p316
        $region50: #{mamba_model_forward.3} parent=11 // pred_check_branch
          %517 = sbr.rel (%p515) target = $region52
        $region51: #{mamba_model_forward.3} parent=11 // pred_region
          %s519 = ssub.s32 16, 16
          %520 = vsyncadd [#allocation28], %s519
          %s522 = sshll.u32 [#allocation27], 4
          %s523 = int_to_ptr.vmem [resolvable:$true] %s522
          %525 = dma.hbm_to_vmem [thread:$0]  %s11, 16, %s523, [#allocation28]
        $region52: #{mamba_model_forward.3} parent=11 // pred_fallthru
          _
        // Predicated region
        $region53: #{mamba_model_forward.3} parent=11 // pred_check
          %p526 = pneg %p337
        $region54: #{mamba_model_forward.3} parent=11 // pred_check_branch
          %528 = sbr.rel (%p526) target = $region56
        $region55: #{mamba_model_forward.3} parent=11 // pred_region
          %s530 = ssub.s32 512, 512
          %531 = vsyncadd [#allocation28], %s530
          %s532 = sshll.u32 [#allocation29], 4
          %s533 = int_to_ptr.vmem [resolvable:$true] %s532
          %538 = dma.hbm_to_vmem [thread:$0]  %s12, 512, %s533, [#allocation28], 64, 64, 4
        $region56: #{mamba_model_forward.3} parent=11 // pred_fallthru
          _
      $region12: #{mamba_model_forward.3} parent=5 // pred_fallthru
        _
      %p539 = scmp.lt.s32.totalorder %s38, 4
      // Predicated region
      $region57: #{mamba_model_forward.3} parent=5 // pred_check
        %p540 = pneg %p539
      $region58: #{mamba_model_forward.3} parent=5 // pred_check_branch
        %542 = sbr.rel (%p540) target = $region60
      $region59: #{mamba_model_forward.3} parent=5 // pred_region
        // Predicated region
        $region61: #{mamba_model_forward.3} parent=59 // pred_check
          %p543 = pneg %p72
        $region62: #{mamba_model_forward.3} parent=59 // pred_check_branch
          %545 = sbr.rel (%p543) target = $region64
        $region63: #{mamba_model_forward.3} parent=59 // pred_region
          %s546 = sand.u32 %s62, 1
          %s547 = scalar_lea.sflag [#allocation10], %s546
          %s548 = sand.u32 %s62, 1
          %s549 = smul.addr %s548, 64
          %s550 = scalar_lea.vmem [#allocation9], %s549
          %s551 = smul.u32 8, %s46
          %s553 = ssub.s32 1024, 1024
          %554 = vsyncadd %s547, %s553
          %s555 = smul.addr %s45, 16
          %s556 = sadd.s32 %s551, %s555
          %s557 = smul.addr %s556, 128
          %s558 = scalar_lea.hbm %s0, %s557
          %s559 = sshll.u32 %s550, 4
          %s560 = int_to_ptr.vmem [resolvable:$true] %s559
          %565 = dma.hbm_to_vmem [thread:$0]  %s558, 1024, %s560, %s547, 128, 128, 8
        $region64: #{mamba_model_forward.3} parent=59 // pred_fallthru
          _
        // Predicated region
        $region65: #{mamba_model_forward.3} parent=59 // pred_check
          %p566 = pneg %p100
        $region66: #{mamba_model_forward.3} parent=59 // pred_check_branch
          %568 = sbr.rel (%p566) target = $region68
        $region67: #{mamba_model_forward.3} parent=59 // pred_region
          %s569 = sand.u32 %s38, 1
          %s570 = scalar_lea.sflag [#allocation13], %s569
          %s571 = sand.u32 %s90, 1
          %s572 = smul.addr %s571, 64
          %s573 = scalar_lea.vmem [#allocation12], %s572
          %s574 = smul.u32 8, %s46
          %s576 = ssub.s32 1024, 1024
          %577 = vsyncadd %s570, %s576
          %s578 = smul.addr %s45, 16
          %s579 = sadd.s32 %s574, %s578
          %s580 = smul.addr %s579, 128
          %s581 = scalar_lea.hbm %s1, %s580
          %s582 = sshll.u32 %s573, 4
          %s583 = int_to_ptr.vmem [resolvable:$true] %s582
          %588 = dma.hbm_to_vmem [thread:$0]  %s581, 1024, %s583, %s570, 128, 128, 8
        $region68: #{mamba_model_forward.3} parent=59 // pred_fallthru
          _
      $region60: #{mamba_model_forward.3} parent=5 // pred_fallthru
        _
      %p589 = scmp.le.s32.totalorder 1, %s38
      %p590 = scmp.lt.s32.totalorder %s38, 5
      %p591 = pnand %p589, %p590
      %p592 = pneg %p591
      // Predicated region
      $region69: #{mamba_model_forward.3} parent=5 // pred_check
        _
      $region70: #{mamba_model_forward.3} parent=5 // pred_check_branch
        %594 = sbr.rel (%p591) target = $region72
      $region71: #{mamba_model_forward.3} parent=5 // pred_region
        %s595 = ssub.s32 %s38, 1
        %s596 = sand.u32 %s65, 1
        %s597 = scalar_lea.sflag [#allocation10], %s596
        %s598 = sand.u32 %s65, 1
        %s599 = smul.addr %s598, 64
        %s600 = scalar_lea.vmem [#allocation9], %s599
        // Predicated region
        $region73: #{mamba_model_forward.3} parent=71 // pred_check
          %p601 = pneg %p78
        $region74: #{mamba_model_forward.3} parent=71 // pred_check_branch
          %603 = sbr.rel (%p601) target = $region76
        $region75: #{mamba_model_forward.3} parent=71 // pred_region
          %604 = dma.done %s597, 1024
        $region76: #{mamba_model_forward.3} parent=71 // pred_fallthru
          _
        %s605 = sand.u32 %s43, 1
        %s606 = scalar_lea.sflag [#allocation13], %s605
        %s607 = sand.u32 %s93, 1
        %s608 = smul.addr %s607, 64
        %s609 = scalar_lea.vmem [#allocation12], %s608
        // Predicated region
        $region77: #{mamba_model_forward.3} parent=71 // pred_check
          %p610 = pneg %p106
        $region78: #{mamba_model_forward.3} parent=71 // pred_check_branch
          %612 = sbr.rel (%p610) target = $region80
        $region79: #{mamba_model_forward.3} parent=71 // pred_region
          %613 = dma.done %s606, 1024
        $region80: #{mamba_model_forward.3} parent=71 // pred_fallthru
          _
        // Predicated region
        $region81: #{mamba_model_forward.3} parent=71 // pred_check
          %p614 = pneg %p127
        $region82: #{mamba_model_forward.3} parent=71 // pred_check_branch
          %616 = sbr.rel (%p614) target = $region84
        $region83: #{mamba_model_forward.3} parent=71 // pred_region
          %617 = dma.done [#allocation13], 16
        $region84: #{mamba_model_forward.3} parent=71 // pred_fallthru
          _
        // Predicated region
        $region85: #{mamba_model_forward.3} parent=71 // pred_check
          %p618 = pneg %p148
        $region86: #{mamba_model_forward.3} parent=71 // pred_check_branch
          %620 = sbr.rel (%p618) target = $region88
        $region87: #{mamba_model_forward.3} parent=71 // pred_region
          %621 = dma.done [#allocation16], 256
        $region88: #{mamba_model_forward.3} parent=71 // pred_fallthru
          _
        // Predicated region
        $region89: #{mamba_model_forward.3} parent=71 // pred_check
          %p622 = pneg %p169
        $region90: #{mamba_model_forward.3} parent=71 // pred_check_branch
          %624 = sbr.rel (%p622) target = $region92
        $region91: #{mamba_model_forward.3} parent=71 // pred_region
          %625 = dma.done [#allocation16], 256
        $region92: #{mamba_model_forward.3} parent=71 // pred_fallthru
          _
        // Predicated region
        $region93: #{mamba_model_forward.3} parent=71 // pred_check
          %p626 = pneg %p190
        $region94: #{mamba_model_forward.3} parent=71 // pred_check_branch
          %628 = sbr.rel (%p626) target = $region96
        $region95: #{mamba_model_forward.3} parent=71 // pred_region
          %629 = dma.done [#allocation19], 64
        $region96: #{mamba_model_forward.3} parent=71 // pred_fallthru
          _
        // Predicated region
        $region97: #{mamba_model_forward.3} parent=71 // pred_check
          %p630 = pneg %p211
        $region98: #{mamba_model_forward.3} parent=71 // pred_check_branch
          %632 = sbr.rel (%p630) target = $region100
        $region99: #{mamba_model_forward.3} parent=71 // pred_region
          %633 = dma.done [#allocation19], 16
        $region100: #{mamba_model_forward.3} parent=71 // pred_fallthru
          _
        // Predicated region
        $region101: #{mamba_model_forward.3} parent=71 // pred_check
          %p634 = pneg %p232
        $region102: #{mamba_model_forward.3} parent=71 // pred_check_branch
          %636 = sbr.rel (%p634) target = $region104
        $region103: #{mamba_model_forward.3} parent=71 // pred_region
          %637 = dma.done [#allocation22], 512
        $region104: #{mamba_model_forward.3} parent=71 // pred_fallthru
          _
        // Predicated region
        $region105: #{mamba_model_forward.3} parent=71 // pred_check
          %p638 = pneg %p253
        $region106: #{mamba_model_forward.3} parent=71 // pred_check_branch
          %640 = sbr.rel (%p638) target = $region108
        $region107: #{mamba_model_forward.3} parent=71 // pred_region
          %641 = dma.done [#allocation22], 16
        $region108: #{mamba_model_forward.3} parent=71 // pred_fallthru
          _
        // Predicated region
        $region109: #{mamba_model_forward.3} parent=71 // pred_check
          %p642 = pneg %p274
        $region110: #{mamba_model_forward.3} parent=71 // pred_check_branch
          %644 = sbr.rel (%p642) target = $region112
        $region111: #{mamba_model_forward.3} parent=71 // pred_region
          %645 = dma.done [#allocation25], 16
        $region112: #{mamba_model_forward.3} parent=71 // pred_fallthru
          _
        // Predicated region
        $region113: #{mamba_model_forward.3} parent=71 // pred_check
          %p646 = pneg %p295
        $region114: #{mamba_model_forward.3} parent=71 // pred_check_branch
          %648 = sbr.rel (%p646) target = $region116
        $region115: #{mamba_model_forward.3} parent=71 // pred_region
          %649 = dma.done [#allocation25], 256
        $region116: #{mamba_model_forward.3} parent=71 // pred_fallthru
          _
        // Predicated region
        $region117: #{mamba_model_forward.3} parent=71 // pred_check
          %p650 = pneg %p316
        $region118: #{mamba_model_forward.3} parent=71 // pred_check_branch
          %652 = sbr.rel (%p650) target = $region120
        $region119: #{mamba_model_forward.3} parent=71 // pred_region
          %653 = dma.done [#allocation28], 16
        $region120: #{mamba_model_forward.3} parent=71 // pred_fallthru
          _
        // Predicated region
        $region121: #{mamba_model_forward.3} parent=71 // pred_check
          %p654 = pneg %p337
        $region122: #{mamba_model_forward.3} parent=71 // pred_check_branch
          %656 = sbr.rel (%p654) target = $region124
        $region123: #{mamba_model_forward.3} parent=71 // pred_region
          %657 = dma.done [#allocation28], 512
        $region124: #{mamba_model_forward.3} parent=71 // pred_fallthru
          _
        %s658 = sand.u32 %s65, 1
        %s659 = scalar_lea.sflag [#allocation10], %s658
        %s660 = sand.u32 %s65, 1
        %s661 = smul.addr %s660, 64
        %s662 = scalar_lea.vmem [#allocation9], %s661
        %p663 = pneg %p78
        %p664 = pneg %p75
        %s665 = sand.u32 %s43, 1
        %s666 = scalar_lea.sflag [#allocation13], %s665
        %s667 = sand.u32 %s93, 1
        %s668 = smul.addr %s667, 64
        %s669 = scalar_lea.vmem [#allocation12], %s668
        %p670 = pneg %p106
        %p671 = pneg %p103
        %p672 = pneg %p127
        %p673 = pneg %p124
        %p674 = pneg %p148
        %p675 = pneg %p145
        %p676 = pneg %p169
        %p677 = pneg %p166
        %p678 = pneg %p190
        %p679 = pneg %p187
        %p680 = pneg %p211
        %p681 = pneg %p208
        %p682 = pneg %p232
        %p683 = pneg %p229
        %p684 = pneg %p253
        %p685 = pneg %p250
        %p686 = pneg %p274
        %p687 = pneg %p271
        %p688 = pneg %p295
        %p689 = pneg %p292
        %p690 = pneg %p316
        %p691 = pneg %p313
        %p692 = pneg %p337
        %p693 = pneg %p334
        %p694 = pneg %p365
        %p695 = pneg %p362
        %s696 = sand.u32 %s352, 1
        %s697 = scalar_lea.sflag [#allocation11], %s696
        %s698 = sand.u32 %s352, 1
        %s699 = smul.addr %s698, 64
        %s700 = scalar_lea.vmem [#allocation30], %s699
        %p701 = pneg %p393
        %p702 = pneg %p390
        %s703 = sand.u32 %s380, 1
        %s704 = scalar_lea.sflag [#allocation32], %s703
        %s705 = sand.u32 %s380, 1
        %s706 = smul.addr %s705, 64
        %s707 = scalar_lea.vmem [#allocation31], %s706
        %s708 = smul.u32 8, %s48
        %s709 = smul.u32 8, %s48
        %s710 = smul.u32 8, %s48
        %s711 = smul.u32 8, %s48
        %p713 = scmp.eq.s32.totalorder %s48, 0
        // Predicated region
        $region125: #{mamba_model_forward.3} parent=71 // pred_check
          %p714 = pneg %p713
        $region126: #{mamba_model_forward.3} parent=71 // pred_check_branch
          %716 = sbr.rel (%p714) target = $region128
        $region127: #{mamba_model_forward.3} parent=71 // pred_region
          %vm717 = vcmask 523264
          %718 = vst.msk [vmem:[#allocation2] sm:$0xff] %vm717, 0.0
          %719 = vst.msk [vmem:[#allocation2 + $0x8] sm:$0xff] %vm717, 0.0
          %720 = vst.msk [vmem:[#allocation3] sm:$0xff] %vm717, 0.0
        $region128: #{mamba_model_forward.3} parent=71 // pred_fallthru
          _
        %v721 = vld [vmem:[%s600] sm:$0xff]
        %v722 = vld [vmem:[%s600 + $0x8] sm:$0xff]
        %v723 = vld [vmem:[%s600 + $0x10] sm:$0xff]
        %v724 = vld [vmem:[%s600 + $0x18] sm:$0xff]
        %v725 = vld [vmem:[%s600 + $0x20] sm:$0xff]
        %v726 = vld [vmem:[%s600 + $0x28] sm:$0xff]
        %v727 = vld [vmem:[%s600 + $0x30] sm:$0xff]
        %v728 = vld [vmem:[%s600 + $0x38] sm:$0xff]
        %v729 = vld [vmem:[%s609] sm:$0xff]
        %v730 = vld [vmem:[%s609 + $0x8] sm:$0xff]
        %v731 = vld [vmem:[%s609 + $0x10] sm:$0xff]
        %v732 = vld [vmem:[%s609 + $0x18] sm:$0xff]
        %v733 = vld [vmem:[%s609 + $0x20] sm:$0xff]
        %v734 = vld [vmem:[%s609 + $0x28] sm:$0xff]
        %v735 = vld [vmem:[%s609 + $0x30] sm:$0xff]
        %v736 = vld [vmem:[%s609 + $0x38] sm:$0xff]
        %v737 = vadd.f32 %v721, %v729
        %v738 = vadd.f32 %v722, %v730
        %v739 = vadd.f32 %v723, %v731
        %v740 = vadd.f32 %v724, %v732
        %v741 = vadd.f32 %v725, %v733
        %v742 = vadd.f32 %v726, %v734
        %v743 = vadd.f32 %v727, %v735
        %v744 = vadd.f32 %v728, %v736
        %vm745 = vcmask 261120
        %746 = vst.msk [vmem:[%s707] sm:$0xff] %vm745, %v737
        %747 = vst.msk [vmem:[%s707 + $0x8] sm:$0xff] %vm745, %v738
        %748 = vst.msk [vmem:[%s707 + $0x10] sm:$0xff] %vm745, %v739
        %749 = vst.msk [vmem:[%s707 + $0x18] sm:$0xff] %vm745, %v740
        %750 = vst.msk [vmem:[%s707 + $0x20] sm:$0xff] %vm745, %v741
        %751 = vst.msk [vmem:[%s707 + $0x28] sm:$0xff] %vm745, %v742
        %752 = vst.msk [vmem:[%s707 + $0x30] sm:$0xff] %vm745, %v743
        %753 = vst.msk [vmem:[%s707 + $0x38] sm:$0xff] %vm745, %v744
        %v754 = vmul.f32 %v737, %v737
        %v755 = vmul.f32 %v738, %v738
        %v756 = vmul.f32 %v739, %v739
        %v757 = vmul.f32 %v740, %v740
        %v758 = vmul.f32 %v741, %v741
        %v759 = vmul.f32 %v742, %v742
        %v760 = vmul.f32 %v743, %v743
        %v761 = vmul.f32 %v744, %v744
        %v762 = vsel %vm745, %v754, 0.0
        %763 = vadd.xlane.f32.xlu0 %v762
        %v764 = vpop.xlane.xlu0 %763
        %v765 = vsel %vm745, %v755, 0.0
        %766 = vadd.xlane.f32.xlu0 %v765
        %v767 = vpop.xlane.xlu0 %766
        %v768 = vsel %vm745, %v756, 0.0
        %769 = vadd.xlane.f32.xlu0 %v768
        %v770 = vpop.xlane.xlu0 %769
        %v771 = vsel %vm745, %v757, 0.0
        %772 = vadd.xlane.f32.xlu0 %v771
        %v773 = vpop.xlane.xlu0 %772
        %v774 = vsel %vm745, %v758, 0.0
        %775 = vadd.xlane.f32.xlu0 %v774
        %v776 = vpop.xlane.xlu0 %775
        %v777 = vsel %vm745, %v759, 0.0
        %778 = vadd.xlane.f32.xlu0 %v777
        %v779 = vpop.xlane.xlu0 %778
        %v780 = vsel %vm745, %v760, 0.0
        %781 = vadd.xlane.f32.xlu0 %v780
        %v782 = vpop.xlane.xlu0 %781
        %v783 = vsel %vm745, %v761, 0.0
        %784 = vadd.xlane.f32.xlu0 %v783
        %v785 = vpop.xlane.xlu0 %784
        %v786 = vrcp.pop 32.0
        %v787 = vmul.f32 %v764, %v786
        %v788 = vmul.f32 %v767, %v786
        %v789 = vmul.f32 %v770, %v786
        %v790 = vmul.f32 %v773, %v786
        %v791 = vmul.f32 %v776, %v786
        %v792 = vmul.f32 %v779, %v786
        %v793 = vmul.f32 %v782, %v786
        %v794 = vmul.f32 %v785, %v786
        %v795 = vadd.f32 %v787, 1e-05
        %v796 = vadd.f32 %v788, 1e-05
        %v797 = vadd.f32 %v789, 1e-05
        %v798 = vadd.f32 %v790, 1e-05
        %v799 = vadd.f32 %v791, 1e-05
        %v800 = vadd.f32 %v792, 1e-05
        %v801 = vadd.f32 %v793, 1e-05
        %v802 = vadd.f32 %v794, 1e-05
        %v803 = vrsqrt.pop %v795
        %v804 = vrsqrt.pop %v796
        %v805 = vrsqrt.pop %v797
        %v806 = vrsqrt.pop %v798
        %v807 = vrsqrt.pop %v799
        %v808 = vrsqrt.pop %v800
        %v809 = vrsqrt.pop %v801
        %v810 = vrsqrt.pop %v802
        %v811 = vmul.f32 %v737, %v803
        %v812 = vmul.f32 %v738, %v804
        %v813 = vmul.f32 %v739, %v805
        %v814 = vmul.f32 %v740, %v806
        %v815 = vmul.f32 %v741, %v807
        %v816 = vmul.f32 %v742, %v808
        %v817 = vmul.f32 %v743, %v809
        %v818 = vmul.f32 %v744, %v810
        %v819 = vld [vmem:[#allocation14] sm:$0x1]
        %v821 = vlaneseq
        %v822 = vshrl.u32 %v821, 7
        %v823 = vsub.s32 0, %v822
        %v824 = vrot.slane %v819, %v823
        %v826 = vmul.f32 %v811, %v824
        %v827 = vmul.f32 %v812, %v824
        %v828 = vmul.f32 %v813, %v824
        %v829 = vmul.f32 %v814, %v824
        %v830 = vmul.f32 %v815, %v824
        %v831 = vmul.f32 %v816, %v824
        %v832 = vmul.f32 %v817, %v824
        %v833 = vmul.f32 %v818, %v824
        %v834 = vpack.c.bf16 %v827, %v826
        %v835 = vpack.c.bf16 %v829, %v828
        %v836 = vpack.c.bf16 %v831, %v830
        %v837 = vpack.c.bf16 %v833, %v832
        %v838 = vld [vmem:[#allocation15] sm:$0xf]
        %v839 = vld [vmem:[#allocation15 + $0x4] sm:$0xf]
        %v840 = vld [vmem:[#allocation15 + $0x8] sm:$0xf]
        %v841 = vld [vmem:[#allocation15 + $0xc] sm:$0xf]
        %v846 = vunpack.c.l.b16 %v838
        %v847 = vunpack.c.l.b16 %v839
        %v848 = vunpack.c.l.b16 %v840
        %v849 = vunpack.c.l.b16 %v841
        %v850 = vpack.c.b16 %v847, %v846
        %v851 = vpack.c.b16 %v849, %v848
        %v855 = vsel %vm745, %v834, 0
        %v858 = vsel %vm745, %v835, 0
        %v861 = vsel %vm745, %v836, 0
        %v864 = vsel %vm745, %v837, 0
        %866 = vmatprep.subr.bf16.mxu0 0
        %867 = vmatpush1.bf16.msra.mxu0 %v850
        %868 = vmatprep.subr.bf16.mxu0 0
        %869 = vmatpush1.bf16.msra.mxu0 %v851
        %870 = vmatprep.subr.bf16.mxu0 0
        %871 = vmatpush1.bf16.msra.mxu0 0
        %872 = vmatprep.subr.bf16.mxu0 0
        %873 = vmatpush1.bf16.msra.mxu0 0
        %874 = vmatprep.subr.bf16.mxu0 0
        %875 = vmatpush1.bf16.msra.mxu0 0
        %876 = vmatprep.subr.bf16.mxu0 0
        %877 = vmatpush1.bf16.msra.mxu0 0
        %878 = vmatprep.subr.bf16.mxu0 0
        %879 = vmatpush1.bf16.msra.mxu0 0
        %880 = vmatprep.subr.bf16.mxu0 0
        %881 = vmatpush1.bf16.msra.mxu0 0
        %882 = vmatprep.subr.bf16.mxu0 0
        %883 = vmatpush1.bf16.msra.mxu0 0
        %884 = vmatprep.subr.bf16.mxu0 0
        %885 = vmatpush1.bf16.msra.mxu0 0
        %886 = vmatprep.subr.bf16.mxu0 0
        %887 = vmatpush1.bf16.msra.mxu0 0
        %888 = vmatprep.subr.bf16.mxu0 0
        %889 = vmatpush1.bf16.msra.mxu0 0
        %890 = vmatprep.subr.bf16.mxu0 0
        %891 = vmatpush1.bf16.msra.mxu0 0
        %892 = vmatprep.subr.bf16.mxu0 0
        %893 = vmatpush1.bf16.msra.mxu0 0
        %894 = vmatprep.subr.bf16.mxu0 0
        %895 = vmatpush1.bf16.msra.mxu0 0
        %896 = vmatprep.subr.bf16.mxu0 0
        %897 = vmatpush1.bf16.msra.mxu0 0
        %898 = vmatprep.mubr.bf16.mxu0 0
        %899 = vmatmul.mubr.bf16.gmra.mrb[0].mxu0 %v855
        %v900 = vpop.f32.mrb[0].mxu0
        %v901 = vadd.f32 0.0, %v900
        %v902 = vpop.f32.mrb[0].mxu0
        %v903 = vpop.f32.mrb[0].mxu0
        %v904 = vadd.f32 0.0, %v903
        %v905 = vpop.f32.mrb[0].mxu0
        %906 = vmatprep.mubr.bf16.mxu0 0
        %907 = vmatmul.mubr.bf16.gmra.mrb[0].mxu0 %v858
        %v908 = vpop.f32.mrb[0].mxu0
        %v909 = vadd.f32 0.0, %v908
        %v910 = vpop.f32.mrb[0].mxu0
        %v911 = vpop.f32.mrb[0].mxu0
        %v912 = vadd.f32 0.0, %v911
        %v913 = vpop.f32.mrb[0].mxu0
        %914 = vmatprep.mubr.bf16.mxu0 0
        %915 = vmatmul.mubr.bf16.gmra.mrb[0].mxu0 %v861
        %v916 = vpop.f32.mrb[0].mxu0
        %v917 = vadd.f32 0.0, %v916
        %v918 = vpop.f32.mrb[0].mxu0
        %v919 = vpop.f32.mrb[0].mxu0
        %v920 = vadd.f32 0.0, %v919
        %v921 = vpop.f32.mrb[0].mxu0
        %922 = vmatprep.mubr.bf16.mxu0 0
        %923 = vmatmul.mubr.bf16.gmra.mrb[0].mxu0 %v864
        %v924 = vpop.f32.mrb[0].mxu0
        %v925 = vadd.f32 0.0, %v924
        %v926 = vpop.f32.mrb[0].mxu0
        %v927 = vpop.f32.mrb[0].mxu0
        %v928 = vadd.f32 0.0, %v927
        %v929 = vpop.f32.mrb[0].mxu0
        %930 = vdwg.mxu0
        %v931 = vld [vmem:[#allocation17] sm:$0xf]
        %v932 = vld [vmem:[#allocation17 + $0x4] sm:$0xf]
        %v933 = vld [vmem:[#allocation17 + $0x8] sm:$0xf]
        %v934 = vld [vmem:[#allocation17 + $0xc] sm:$0xf]
        %v939 = vunpack.c.l.b16 %v931
        %v940 = vunpack.c.l.b16 %v932
        %v941 = vunpack.c.l.b16 %v933
        %v942 = vunpack.c.l.b16 %v934
        %v943 = vpack.c.b16 %v940, %v939
        %v944 = vpack.c.b16 %v942, %v941
        %947 = vmatprep.subr.bf16.mxu0 0
        %948 = vmatpush1.bf16.msra.mxu0 %v943
        %949 = vmatprep.subr.bf16.mxu0 0
        %950 = vmatpush1.bf16.msra.mxu0 %v944
        %951 = vmatprep.subr.bf16.mxu0 0
        %952 = vmatpush1.bf16.msra.mxu0 0
        %953 = vmatprep.subr.bf16.mxu0 0
        %954 = vmatpush1.bf16.msra.mxu0 0
        %955 = vmatprep.subr.bf16.mxu0 0
        %956 = vmatpush1.bf16.msra.mxu0 0
        %957 = vmatprep.subr.bf16.mxu0 0
        %958 = vmatpush1.bf16.msra.mxu0 0
        %959 = vmatprep.subr.bf16.mxu0 0
        %960 = vmatpush1.bf16.msra.mxu0 0
        %961 = vmatprep.subr.bf16.mxu0 0
        %962 = vmatpush1.bf16.msra.mxu0 0
        %963 = vmatprep.subr.bf16.mxu0 0
        %964 = vmatpush1.bf16.msra.mxu0 0
        %965 = vmatprep.subr.bf16.mxu0 0
        %966 = vmatpush1.bf16.msra.mxu0 0
        %967 = vmatprep.subr.bf16.mxu0 0
        %968 = vmatpush1.bf16.msra.mxu0 0
        %969 = vmatprep.subr.bf16.mxu0 0
        %970 = vmatpush1.bf16.msra.mxu0 0
        %971 = vmatprep.subr.bf16.mxu0 0
        %972 = vmatpush1.bf16.msra.mxu0 0
        %973 = vmatprep.subr.bf16.mxu0 0
        %974 = vmatpush1.bf16.msra.mxu0 0
        %975 = vmatprep.subr.bf16.mxu0 0
        %976 = vmatpush1.bf16.msra.mxu0 0
        %977 = vmatprep.subr.bf16.mxu0 0
        %978 = vmatpush1.bf16.msra.mxu0 0
        %979 = vmatprep.mubr.bf16.mxu0 0
        %980 = vmatmul.mubr.bf16.gmra.mrb[0].mxu0 %v855
        %v981 = vpop.f32.mrb[0].mxu0
        %v982 = vadd.f32 0.0, %v981
        %v983 = vpop.f32.mrb[0].mxu0
        %v984 = vpop.f32.mrb[0].mxu0
        %v985 = vadd.f32 0.0, %v984
        %v986 = vpop.f32.mrb[0].mxu0
        %987 = vmatprep.mubr.bf16.mxu0 0
        %988 = vmatmul.mubr.bf16.gmra.mrb[0].mxu0 %v858
        %v989 = vpop.f32.mrb[0].mxu0
        %v990 = vadd.f32 0.0, %v989
        %v991 = vpop.f32.mrb[0].mxu0
        %v992 = vpop.f32.mrb[0].mxu0
        %v993 = vadd.f32 0.0, %v992
        %v994 = vpop.f32.mrb[0].mxu0
        %995 = vmatprep.mubr.bf16.mxu0 0
        %996 = vmatmul.mubr.bf16.gmra.mrb[0].mxu0 %v861
        %v997 = vpop.f32.mrb[0].mxu0
        %v998 = vadd.f32 0.0, %v997
        %v999 = vpop.f32.mrb[0].mxu0
        %v1000 = vpop.f32.mrb[0].mxu0
        %v1001 = vadd.f32 0.0, %v1000
        %v1002 = vpop.f32.mrb[0].mxu0
        %1003 = vmatprep.mubr.bf16.mxu0 0
        %1004 = vmatmul.mubr.bf16.gmra.mrb[0].mxu0 %v864
        %v1005 = vpop.f32.mrb[0].mxu0
        %v1006 = vadd.f32 0.0, %v1005
        %v1007 = vpop.f32.mrb[0].mxu0
        %v1008 = vpop.f32.mrb[0].mxu0
        %v1009 = vadd.f32 0.0, %v1008
        %v1010 = vpop.f32.mrb[0].mxu0
        %1011 = vdwg.mxu0
        %v1012 = vld [vmem:[#allocation18] sm:$0xf]
        %v1013 = vld [vmem:[#allocation3] sm:$0xff]
        %vm1014 = vcmask 523264
        %1015 = vst.msk [vmem:[#allocation3] sm:$0xff] %vm1014, %v928
        %v1016 = vlaneseq
        %v1017 = vshrl.u32 %v1016, 7
        %v1018 = vsub.s32 3, %v1017
        %v1019 = vrot.slane %v1012, %v1018
        %v1020 = vmul.f32 %v901, %v1019
        %v1021 = vmul.f32 %v904, %v1019
        %v1022 = vmul.f32 %v909, %v1019
        %v1023 = vmul.f32 %v912, %v1019
        %v1024 = vmul.f32 %v917, %v1019
        %v1025 = vmul.f32 %v920, %v1019
        %v1026 = vmul.f32 %v925, %v1019
        %v1027 = vmul.f32 %v928, %v1019
        %v1028 = vld [vmem:[#allocation20] sm:$0x1]
        %v1030 = vlaneseq
        %v1031 = vshrl.u32 %v1030, 7
        %v1032 = vsub.s32 0, %v1031
        %v1033 = vrot.slane %v1028, %v1032
        %v1035 = vadd.f32 %v1020, %v1033
        %v1036 = vadd.f32 %v1021, %v1033
        %v1037 = vadd.f32 %v1022, %v1033
        %v1038 = vadd.f32 %v1023, %v1033
        %v1039 = vadd.f32 %v1024, %v1033
        %v1040 = vadd.f32 %v1025, %v1033
        %v1041 = vadd.f32 %v1026, %v1033
        %v1042 = vadd.f32 %v1027, %v1033
        %v1043 = vlaneseq
        %v1044 = vshrl.u32 %v1043, 7
        %v1045 = vsub.s32 2, %v1044
        %v1046 = vrot.slane %v1012, %v1045
        %v1047 = vmul.f32 %v1013, %v1046
        %v1048 = vmul.f32 %v901, %v1046
        %v1049 = vmul.f32 %v904, %v1046
        %v1050 = vmul.f32 %v909, %v1046
        %v1051 = vmul.f32 %v912, %v1046
        %v1052 = vmul.f32 %v917, %v1046
        %v1053 = vmul.f32 %v920, %v1046
        %v1054 = vmul.f32 %v925, %v1046
        %v1055 = vmul.f32 %v928, %v1046
        %vm1065 = vcmask 1040384
        %v1066 = vrot.slane %v1047, 7
        %v1067 = vrot.slane %v1048, 7
        %v1068 = vsel %vm1065, %v1066, %v1067
        %v1069 = vrot.slane %v1049, 7
        %v1070 = vsel %vm1065, %v1067, %v1069
        %v1071 = vrot.slane %v1050, 7
        %v1072 = vsel %vm1065, %v1069, %v1071
        %v1073 = vrot.slane %v1051, 7
        %v1074 = vsel %vm1065, %v1071, %v1073
        %v1075 = vrot.slane %v1052, 7
        %v1076 = vsel %vm1065, %v1073, %v1075
        %v1077 = vrot.slane %v1053, 7
        %v1078 = vsel %vm1065, %v1075, %v1077
        %v1079 = vrot.slane %v1054, 7
        %v1080 = vsel %vm1065, %v1077, %v1079
        %v1081 = vrot.slane %v1055, 7
        %v1082 = vsel %vm1065, %v1079, %v1081
        %v1091 = vadd.f32 %v1035, %v1068
        %v1092 = vadd.f32 %v1036, %v1070
        %v1093 = vadd.f32 %v1037, %v1072
        %v1094 = vadd.f32 %v1038, %v1074
        %v1095 = vadd.f32 %v1039, %v1076
        %v1096 = vadd.f32 %v1040, %v1078
        %v1097 = vadd.f32 %v1041, %v1080
        %v1098 = vadd.f32 %v1042, %v1082
        %v1099 = vlaneseq
        %v1100 = vshrl.u32 %v1099, 7
        %v1101 = vsub.s32 1, %v1100
        %v1102 = vrot.slane %v1012, %v1101
        %v1103 = vmul.f32 %v1013, %v1102
        %v1104 = vmul.f32 %v901, %v1102
        %v1105 = vmul.f32 %v904, %v1102
        %v1106 = vmul.f32 %v909, %v1102
        %v1107 = vmul.f32 %v912, %v1102
        %v1108 = vmul.f32 %v917, %v1102
        %v1109 = vmul.f32 %v920, %v1102
        %v1110 = vmul.f32 %v925, %v1102
        %v1111 = vmul.f32 %v928, %v1102
        %vm1121 = vcmask 1041408
        %v1122 = vrot.slane %v1103, 6
        %v1123 = vrot.slane %v1104, 6
        %v1124 = vsel %vm1121, %v1122, %v1123
        %v1125 = vrot.slane %v1105, 6
        %v1126 = vsel %vm1121, %v1123, %v1125
        %v1127 = vrot.slane %v1106, 6
        %v1128 = vsel %vm1121, %v1125, %v1127
        %v1129 = vrot.slane %v1107, 6
        %v1130 = vsel %vm1121, %v1127, %v1129
        %v1131 = vrot.slane %v1108, 6
        %v1132 = vsel %vm1121, %v1129, %v1131
        %v1133 = vrot.slane %v1109, 6
        %v1134 = vsel %vm1121, %v1131, %v1133
        %v1135 = vrot.slane %v1110, 6
        %v1136 = vsel %vm1121, %v1133, %v1135
        %v1137 = vrot.slane %v1111, 6
        %v1138 = vsel %vm1121, %v1135, %v1137
        %v1147 = vadd.f32 %v1091, %v1124
        %v1148 = vadd.f32 %v1092, %v1126
        %v1149 = vadd.f32 %v1093, %v1128
        %v1150 = vadd.f32 %v1094, %v1130
        %v1151 = vadd.f32 %v1095, %v1132
        %v1152 = vadd.f32 %v1096, %v1134
        %v1153 = vadd.f32 %v1097, %v1136
        %v1154 = vadd.f32 %v1098, %v1138
        %v1155 = vlaneseq
        %v1156 = vshrl.u32 %v1155, 7
        %v1157 = vsub.s32 0, %v1156
        %v1158 = vrot.slane %v1012, %v1157
        %v1159 = vmul.f32 %v1013, %v1158
        %v1160 = vmul.f32 %v901, %v1158
        %v1161 = vmul.f32 %v904, %v1158
        %v1162 = vmul.f32 %v909, %v1158
        %v1163 = vmul.f32 %v912, %v1158
        %v1164 = vmul.f32 %v917, %v1158
        %v1165 = vmul.f32 %v920, %v1158
        %v1166 = vmul.f32 %v925, %v1158
        %v1167 = vmul.f32 %v928, %v1158
        %vm1177 = vcmask 1042432
        %v1178 = vrot.slane %v1159, 5
        %v1179 = vrot.slane %v1160, 5
        %v1180 = vsel %vm1177, %v1178, %v1179
        %v1181 = vrot.slane %v1161, 5
        %v1182 = vsel %vm1177, %v1179, %v1181
        %v1183 = vrot.slane %v1162, 5
        %v1184 = vsel %vm1177, %v1181, %v1183
        %v1185 = vrot.slane %v1163, 5
        %v1186 = vsel %vm1177, %v1183, %v1185
        %v1187 = vrot.slane %v1164, 5
        %v1188 = vsel %vm1177, %v1185, %v1187
        %v1189 = vrot.slane %v1165, 5
        %v1190 = vsel %vm1177, %v1187, %v1189
        %v1191 = vrot.slane %v1166, 5
        %v1192 = vsel %vm1177, %v1189, %v1191
        %v1193 = vrot.slane %v1167, 5
        %v1194 = vsel %vm1177, %v1191, %v1193
        %v1203 = vadd.f32 %v1147, %v1180
        %v1204 = vadd.f32 %v1148, %v1182
        %v1205 = vadd.f32 %v1149, %v1184
        %v1206 = vadd.f32 %v1150, %v1186
        %v1207 = vadd.f32 %v1151, %v1188
        %v1208 = vadd.f32 %v1152, %v1190
        %v1209 = vadd.f32 %v1153, %v1192
        %v1210 = vadd.f32 %v1154, %v1194
        %v1211 = vsub.f32 0.0, %v1203
        %v1212 = vsub.f32 0.0, %v1204
        %v1213 = vsub.f32 0.0, %v1205
        %v1214 = vsub.f32 0.0, %v1206
        %v1215 = vsub.f32 0.0, %v1207
        %v1216 = vsub.f32 0.0, %v1208
        %v1217 = vsub.f32 0.0, %v1209
        %v1218 = vsub.f32 0.0, %v1210
        %v1219 = vmul.f32 %v1211, 1.442695
        %v1220 = vpow.pop %v1219
        %v1221 = vmul.f32 %v1212, 1.442695
        %v1222 = vpow.pop %v1221
        %v1223 = vmul.f32 %v1213, 1.442695
        %v1224 = vpow.pop %v1223
        %v1225 = vmul.f32 %v1214, 1.442695
        %v1226 = vpow.pop %v1225
        %v1227 = vmul.f32 %v1215, 1.442695
        %v1228 = vpow.pop %v1227
        %v1229 = vmul.f32 %v1216, 1.442695
        %v1230 = vpow.pop %v1229
        %v1231 = vmul.f32 %v1217, 1.442695
        %v1232 = vpow.pop %v1231
        %v1233 = vmul.f32 %v1218, 1.442695
        %v1234 = vpow.pop %v1233
        %v1235 = vadd.f32 %v1220, 1.0
        %v1236 = vadd.f32 %v1222, 1.0
        %v1237 = vadd.f32 %v1224, 1.0
        %v1238 = vadd.f32 %v1226, 1.0
        %v1239 = vadd.f32 %v1228, 1.0
        %v1240 = vadd.f32 %v1230, 1.0
        %v1241 = vadd.f32 %v1232, 1.0
        %v1242 = vadd.f32 %v1234, 1.0
        %v1243 = vrcp.pop %v1235
        %v1244 = vrcp.pop %v1236
        %v1245 = vrcp.pop %v1237
        %v1246 = vrcp.pop %v1238
        %v1247 = vrcp.pop %v1239
        %v1248 = vrcp.pop %v1240
        %v1249 = vrcp.pop %v1241
        %v1250 = vrcp.pop %v1242
        %v1251 = vmul.f32 %v1203, %v1243
        %v1252 = vmul.f32 %v1204, %v1244
        %v1253 = vmul.f32 %v1205, %v1245
        %v1254 = vmul.f32 %v1206, %v1246
        %v1255 = vmul.f32 %v1207, %v1247
        %v1256 = vmul.f32 %v1208, %v1248
        %v1257 = vmul.f32 %v1209, %v1249
        %v1258 = vmul.f32 %v1210, %v1250
        %v1259 = vpack.c.bf16 %v1252, %v1251
        %v1260 = vpack.c.bf16 %v1254, %v1253
        %v1261 = vpack.c.bf16 %v1256, %v1255
        %v1262 = vpack.c.bf16 %v1258, %v1257
        %v1263 = vld [vmem:[#allocation21] sm:$0xf]
        %v1264 = vld [vmem:[#allocation21 + $0x4] sm:$0xf]
        %v1265 = vld [vmem:[#allocation21 + $0x8] sm:$0xf]
        %v1266 = vld [vmem:[#allocation21 + $0xc] sm:$0xf]
        %v1267 = vld [vmem:[#allocation21 + $0x10] sm:$0xf]
        %v1268 = vld [vmem:[#allocation21 + $0x14] sm:$0xf]
        %v1269 = vld [vmem:[#allocation21 + $0x18] sm:$0xf]
        %v1270 = vld [vmem:[#allocation21 + $0x1c] sm:$0xf]
        %v1279 = vunpack.c.l.b16 %v1263
        %v1280 = vunpack.c.l.b16 %v1264
        %v1281 = vunpack.c.l.b16 %v1265
        %v1282 = vunpack.c.l.b16 %v1266
        %v1283 = vunpack.c.l.b16 %v1267
        %v1284 = vunpack.c.l.b16 %v1268
        %v1285 = vunpack.c.l.b16 %v1269
        %v1286 = vunpack.c.l.b16 %v1270
        %v1287 = vpack.c.b16 %v1280, %v1279
        %v1288 = vpack.c.b16 %v1282, %v1281
        %v1289 = vpack.c.b16 %v1284, %v1283
        %v1290 = vpack.c.b16 %v1286, %v1285
        %v1296 = vsel %vm1014, %v1259, 0
        %v1299 = vsel %vm1014, %v1260, 0
        %v1302 = vsel %vm1014, %v1261, 0
        %v1305 = vsel %vm1014, %v1262, 0
        %1307 = vmatprep.subr.bf16.mxu0 0
        %1308 = vmatpush1.bf16.msra.mxu0 %v1287
        %1309 = vmatprep.subr.bf16.mxu0 0
        %1310 = vmatpush1.bf16.msra.mxu0 %v1288
        %1311 = vmatprep.subr.bf16.mxu0 0
        %1312 = vmatpush1.bf16.msra.mxu0 %v1289
        %1313 = vmatprep.subr.bf16.mxu0 0
        %1314 = vmatpush1.bf16.msra.mxu0 %v1290
        %1315 = vmatprep.subr.bf16.mxu0 0
        %1316 = vmatpush1.bf16.msra.mxu0 0
        %1317 = vmatprep.subr.bf16.mxu0 0
        %1318 = vmatpush1.bf16.msra.mxu0 0
        %1319 = vmatprep.subr.bf16.mxu0 0
        %1320 = vmatpush1.bf16.msra.mxu0 0
        %1321 = vmatprep.subr.bf16.mxu0 0
        %1322 = vmatpush1.bf16.msra.mxu0 0
        %1323 = vmatprep.subr.bf16.mxu0 0
        %1324 = vmatpush1.bf16.msra.mxu0 0
        %1325 = vmatprep.subr.bf16.mxu0 0
        %1326 = vmatpush1.bf16.msra.mxu0 0
        %1327 = vmatprep.subr.bf16.mxu0 0
        %1328 = vmatpush1.bf16.msra.mxu0 0
        %1329 = vmatprep.subr.bf16.mxu0 0
        %1330 = vmatpush1.bf16.msra.mxu0 0
        %1331 = vmatprep.subr.bf16.mxu0 0
        %1332 = vmatpush1.bf16.msra.mxu0 0
        %1333 = vmatprep.subr.bf16.mxu0 0
        %1334 = vmatpush1.bf16.msra.mxu0 0
        %1335 = vmatprep.subr.bf16.mxu0 0
        %1336 = vmatpush1.bf16.msra.mxu0 0
        %1337 = vmatprep.subr.bf16.mxu0 0
        %1338 = vmatpush1.bf16.msra.mxu0 0
        %1339 = vmatprep.mubr.bf16.mxu0 0
        %1340 = vmatmul.mubr.bf16.gmra.mrb[0].mxu0 %v1296
        %v1341 = vpop.f32.mrb[0].mxu0
        %v1342 = vadd.f32 0.0, %v1341
        %v1343 = vpop.f32.mrb[0].mxu0
        %v1344 = vpop.f32.mrb[0].mxu0
        %v1345 = vadd.f32 0.0, %v1344
        %v1346 = vpop.f32.mrb[0].mxu0
        %1347 = vmatprep.mubr.bf16.mxu0 0
        %1348 = vmatmul.mubr.bf16.gmra.mrb[0].mxu0 %v1299
        %v1349 = vpop.f32.mrb[0].mxu0
        %v1350 = vadd.f32 0.0, %v1349
        %v1351 = vpop.f32.mrb[0].mxu0
        %v1352 = vpop.f32.mrb[0].mxu0
        %v1353 = vadd.f32 0.0, %v1352
        %v1354 = vpop.f32.mrb[0].mxu0
        %1355 = vmatprep.mubr.bf16.mxu0 0
        %1356 = vmatmul.mubr.bf16.gmra.mrb[0].mxu0 %v1302
        %v1357 = vpop.f32.mrb[0].mxu0
        %v1358 = vadd.f32 0.0, %v1357
        %v1359 = vpop.f32.mrb[0].mxu0
        %v1360 = vpop.f32.mrb[0].mxu0
        %v1361 = vadd.f32 0.0, %v1360
        %v1362 = vpop.f32.mrb[0].mxu0
        %1363 = vmatprep.mubr.bf16.mxu0 0
        %1364 = vmatmul.mubr.bf16.gmra.mrb[0].mxu0 %v1305
        %v1365 = vpop.f32.mrb[0].mxu0
        %v1366 = vadd.f32 0.0, %v1365
        %v1367 = vpop.f32.mrb[0].mxu0
        %v1368 = vpop.f32.mrb[0].mxu0
        %v1369 = vadd.f32 0.0, %v1368
        %v1370 = vpop.f32.mrb[0].mxu0
        %1371 = vdwg.mxu0
        %v1372 = vpack.c.bf16 %v1345, %v1342
        %v1373 = vpack.c.bf16 %v1353, %v1350
        %v1374 = vpack.c.bf16 %v1361, %v1358
        %v1375 = vpack.c.bf16 %v1369, %v1366
        %v1376 = vld [vmem:[#allocation23] sm:$0x1]
        %v1377 = vld [vmem:[#allocation24] sm:$0x1]
        %v1379 = vlaneseq
        %v1380 = vshrl.u32 %v1379, 7
        %v1381 = vsub.s32 0, %v1380
        %v1382 = vrot.slane %v1377, %v1381
        %vm1384 = vcmask 15360
        %v1386 = vsel %vm1384, %v1372, 0
        %v1389 = vsel %vm1384, %v1373, 0
        %v1392 = vsel %vm1384, %v1374, 0
        %v1395 = vsel %vm1384, %v1375, 0
        %v1398 = vsel %vm1065, %v1376, 0
        %1400 = vmatprep.subr.bf16.mxu0 0
        %1401 = vmatpush1.bf16.msra.mxu0 %v1398
        %1402 = vmatprep.subr.bf16.mxu0 0
        %1403 = vmatpush1.bf16.msra.mxu0 0
        %1404 = vmatprep.subr.bf16.mxu0 0
        %1405 = vmatpush1.bf16.msra.mxu0 0
        %1406 = vmatprep.subr.bf16.mxu0 0
        %1407 = vmatpush1.bf16.msra.mxu0 0
        %1408 = vmatprep.subr.bf16.mxu0 0
        %1409 = vmatpush1.bf16.msra.mxu0 0
        %1410 = vmatprep.subr.bf16.mxu0 0
        %1411 = vmatpush1.bf16.msra.mxu0 0
        %1412 = vmatprep.subr.bf16.mxu0 0
        %1413 = vmatpush1.bf16.msra.mxu0 0
        %1414 = vmatprep.subr.bf16.mxu0 0
        %1415 = vmatpush1.bf16.msra.mxu0 0
        %1416 = vmatprep.subr.bf16.mxu0 0
        %1417 = vmatpush1.bf16.msra.mxu0 0
        %1418 = vmatprep.subr.bf16.mxu0 0
        %1419 = vmatpush1.bf16.msra.mxu0 0
        %1420 = vmatprep.subr.bf16.mxu0 0
        %1421 = vmatpush1.bf16.msra.mxu0 0
        %1422 = vmatprep.subr.bf16.mxu0 0
        %1423 = vmatpush1.bf16.msra.mxu0 0
        %1424 = vmatprep.subr.bf16.mxu0 0
        %1425 = vmatpush1.bf16.msra.mxu0 0
        %1426 = vmatprep.subr.bf16.mxu0 0
        %1427 = vmatpush1.bf16.msra.mxu0 0
        %1428 = vmatprep.subr.bf16.mxu0 0
        %1429 = vmatpush1.bf16.msra.mxu0 0
        %1430 = vmatprep.subr.bf16.mxu0 0
        %1431 = vmatpush1.bf16.msra.mxu0 0
        %1432 = vmatprep.mubr.bf16.mxu0 0
        %1433 = vmatmul.mubr.bf16.gmra.mrb[0].mxu0 %v1386
        %v1434 = vpop.f32.mrb[0].mxu0
        %v1435 = vadd.f32 %v1382, %v1434
        %v1436 = vpop.f32.mrb[0].mxu0
        %v1437 = vpop.f32.mrb[0].mxu0
        %v1438 = vadd.f32 %v1382, %v1437
        %v1439 = vpop.f32.mrb[0].mxu0
        %1440 = vmatprep.mubr.bf16.mxu0 0
        %1441 = vmatmul.mubr.bf16.gmra.mrb[0].mxu0 %v1389
        %v1442 = vpop.f32.mrb[0].mxu0
        %v1443 = vadd.f32 %v1382, %v1442
        %v1444 = vpop.f32.mrb[0].mxu0
        %v1445 = vpop.f32.mrb[0].mxu0
        %v1446 = vadd.f32 %v1382, %v1445
        %v1447 = vpop.f32.mrb[0].mxu0
        %1448 = vmatprep.mubr.bf16.mxu0 0
        %1449 = vmatmul.mubr.bf16.gmra.mrb[0].mxu0 %v1392
        %v1450 = vpop.f32.mrb[0].mxu0
        %v1451 = vadd.f32 %v1382, %v1450
        %v1452 = vpop.f32.mrb[0].mxu0
        %v1453 = vpop.f32.mrb[0].mxu0
        %v1454 = vadd.f32 %v1382, %v1453
        %v1455 = vpop.f32.mrb[0].mxu0
        %1456 = vmatprep.mubr.bf16.mxu0 0
        %1457 = vmatmul.mubr.bf16.gmra.mrb[0].mxu0 %v1395
        %v1458 = vpop.f32.mrb[0].mxu0
        %v1459 = vadd.f32 %v1382, %v1458
        %v1460 = vpop.f32.mrb[0].mxu0
        %v1461 = vpop.f32.mrb[0].mxu0
        %v1462 = vadd.f32 %v1382, %v1461
        %v1463 = vpop.f32.mrb[0].mxu0
        %1464 = vdwg.mxu0
        %vm1465 = vcmp.gt.f32.partialorder %v1435, 20.0
        %vm1466 = vcmp.gt.f32.partialorder %v1438, 20.0
        %vm1467 = vcmp.gt.f32.partialorder %v1443, 20.0
        %vm1468 = vcmp.gt.f32.partialorder %v1446, 20.0
        %vm1469 = vcmp.gt.f32.partialorder %v1451, 20.0
        %vm1470 = vcmp.gt.f32.partialorder %v1454, 20.0
        %vm1471 = vcmp.gt.f32.partialorder %v1459, 20.0
        %vm1472 = vcmp.gt.f32.partialorder %v1462, 20.0
        %v1473 = vmin.f32 %v1435, 20.0
        %v1474 = vmin.f32 %v1438, 20.0
        %v1475 = vmin.f32 %v1443, 20.0
        %v1476 = vmin.f32 %v1446, 20.0
        %v1477 = vmin.f32 %v1451, 20.0
        %v1478 = vmin.f32 %v1454, 20.0
        %v1479 = vmin.f32 %v1459, 20.0
        %v1480 = vmin.f32 %v1462, 20.0
        %v1481 = vmul.f32 %v1473, 1.442695
        %v1482 = vpow.pop %v1481
        %v1483 = vmul.f32 %v1474, 1.442695
        %v1484 = vpow.pop %v1483
        %v1485 = vmul.f32 %v1475, 1.442695
        %v1486 = vpow.pop %v1485
        %v1487 = vmul.f32 %v1476, 1.442695
        %v1488 = vpow.pop %v1487
        %v1489 = vmul.f32 %v1477, 1.442695
        %v1490 = vpow.pop %v1489
        %v1491 = vmul.f32 %v1478, 1.442695
        %v1492 = vpow.pop %v1491
        %v1493 = vmul.f32 %v1479, 1.442695
        %v1494 = vpow.pop %v1493
        %v1495 = vmul.f32 %v1480, 1.442695
        %v1496 = vpow.pop %v1495
        %v1497 = vadd.f32 %v1482, 1.0
        %v1498 = vlog2.pop %v1497
        %v1499 = vmul.f32 %v1498, 0.6931472
        %v1500 = vmul.f32 -0.5, %v1482
        %v1501 = vadd.f32 %v1500, 1.0
        %v1502 = vmul.f32 %v1501, %v1482
        %v1503 = vand.u32 2147483647, %v1482
        %vm1504 = vcmp.lt.f32.partialorder %v1503, 0.0004427343
        %v1505 = vsel %vm1504, %v1502, %v1499
        %v1506 = vadd.f32 %v1484, 1.0
        %v1507 = vlog2.pop %v1506
        %v1508 = vmul.f32 %v1507, 0.6931472
        %v1509 = vmul.f32 -0.5, %v1484
        %v1510 = vadd.f32 %v1509, 1.0
        %v1511 = vmul.f32 %v1510, %v1484
        %v1512 = vand.u32 2147483647, %v1484
        %vm1513 = vcmp.lt.f32.partialorder %v1512, 0.0004427343
        %v1514 = vsel %vm1513, %v1511, %v1508
        %v1515 = vadd.f32 %v1486, 1.0
        %v1516 = vlog2.pop %v1515
        %v1517 = vmul.f32 %v1516, 0.6931472
        %v1518 = vmul.f32 -0.5, %v1486
        %v1519 = vadd.f32 %v1518, 1.0
        %v1520 = vmul.f32 %v1519, %v1486
        %v1521 = vand.u32 2147483647, %v1486
        %vm1522 = vcmp.lt.f32.partialorder %v1521, 0.0004427343
        %v1523 = vsel %vm1522, %v1520, %v1517
        %v1524 = vadd.f32 %v1488, 1.0
        %v1525 = vlog2.pop %v1524
        %v1526 = vmul.f32 %v1525, 0.6931472
        %v1527 = vmul.f32 -0.5, %v1488
        %v1528 = vadd.f32 %v1527, 1.0
        %v1529 = vmul.f32 %v1528, %v1488
        %v1530 = vand.u32 2147483647, %v1488
        %vm1531 = vcmp.lt.f32.partialorder %v1530, 0.0004427343
        %v1532 = vsel %vm1531, %v1529, %v1526
        %v1533 = vadd.f32 %v1490, 1.0
        %v1534 = vlog2.pop %v1533
        %v1535 = vmul.f32 %v1534, 0.6931472
        %v1536 = vmul.f32 -0.5, %v1490
        %v1537 = vadd.f32 %v1536, 1.0
        %v1538 = vmul.f32 %v1537, %v1490
        %v1539 = vand.u32 2147483647, %v1490
        %vm1540 = vcmp.lt.f32.partialorder %v1539, 0.0004427343
        %v1541 = vsel %vm1540, %v1538, %v1535
        %v1542 = vadd.f32 %v1492, 1.0
        %v1543 = vlog2.pop %v1542
        %v1544 = vmul.f32 %v1543, 0.6931472
        %v1545 = vmul.f32 -0.5, %v1492
        %v1546 = vadd.f32 %v1545, 1.0
        %v1547 = vmul.f32 %v1546, %v1492
        %v1548 = vand.u32 2147483647, %v1492
        %vm1549 = vcmp.lt.f32.partialorder %v1548, 0.0004427343
        %v1550 = vsel %vm1549, %v1547, %v1544
        %v1551 = vadd.f32 %v1494, 1.0
        %v1552 = vlog2.pop %v1551
        %v1553 = vmul.f32 %v1552, 0.6931472
        %v1554 = vmul.f32 -0.5, %v1494
        %v1555 = vadd.f32 %v1554, 1.0
        %v1556 = vmul.f32 %v1555, %v1494
        %v1557 = vand.u32 2147483647, %v1494
        %vm1558 = vcmp.lt.f32.partialorder %v1557, 0.0004427343
        %v1559 = vsel %vm1558, %v1556, %v1553
        %v1560 = vadd.f32 %v1496, 1.0
        %v1561 = vlog2.pop %v1560
        %v1562 = vmul.f32 %v1561, 0.6931472
        %v1563 = vmul.f32 -0.5, %v1496
        %v1564 = vadd.f32 %v1563, 1.0
        %v1565 = vmul.f32 %v1564, %v1496
        %v1566 = vand.u32 2147483647, %v1496
        %vm1567 = vcmp.lt.f32.partialorder %v1566, 0.0004427343
        %v1568 = vsel %vm1567, %v1565, %v1562
        %v1569 = vsel %vm1465, %v1435, %v1505
        %v1570 = vsel %vm1466, %v1438, %v1514
        %v1571 = vsel %vm1467, %v1443, %v1523
        %v1572 = vsel %vm1468, %v1446, %v1532
        %v1573 = vsel %vm1469, %v1451, %v1541
        %v1574 = vsel %vm1470, %v1454, %v1550
        %v1575 = vsel %vm1471, %v1459, %v1559
        %v1576 = vsel %vm1472, %v1462, %v1568
        %1577 = vst.msk [vmem:[#allocation4] sm:$0xff] %vm1014, %v1569
        %1578 = vst.msk [vmem:[#allocation4 + $0x8] sm:$0xff] %vm1014, %v1570
        %1579 = vst.msk [vmem:[#allocation4 + $0x10] sm:$0xff] %vm1014, %v1571
        %1580 = vst.msk [vmem:[#allocation4 + $0x18] sm:$0xff] %vm1014, %v1572
        %1581 = vst.msk [vmem:[#allocation4 + $0x20] sm:$0xff] %vm1014, %v1573
        %1582 = vst.msk [vmem:[#allocation4 + $0x28] sm:$0xff] %vm1014, %v1574
        %1583 = vst.msk [vmem:[#allocation4 + $0x30] sm:$0xff] %vm1014, %v1575
        %1584 = vst.msk [vmem:[#allocation4 + $0x38] sm:$0xff] %vm1014, %v1576
        %v1585 = vmul.f32 %v1569, %v1251
        %v1586 = vmul.f32 %v1570, %v1252
        %v1587 = vmul.f32 %v1571, %v1253
        %v1588 = vmul.f32 %v1572, %v1254
        %v1589 = vmul.f32 %v1573, %v1255
        %v1590 = vmul.f32 %v1574, %v1256
        %v1591 = vmul.f32 %v1575, %v1257
        %v1592 = vmul.f32 %v1576, %v1258
        %1593 = vst.msk [vmem:[#allocation5] sm:$0xff] %vm1014, %v1585
        %1594 = vst.msk [vmem:[#allocation5 + $0x8] sm:$0xff] %vm1014, %v1586
        %1595 = vst.msk [vmem:[#allocation5 + $0x10] sm:$0xff] %vm1014, %v1587
        %1596 = vst.msk [vmem:[#allocation5 + $0x18] sm:$0xff] %vm1014, %v1588
        %1597 = vst.msk [vmem:[#allocation5 + $0x20] sm:$0xff] %vm1014, %v1589
        %1598 = vst.msk [vmem:[#allocation5 + $0x28] sm:$0xff] %vm1014, %v1590
        %1599 = vst.msk [vmem:[#allocation5 + $0x30] sm:$0xff] %vm1014, %v1591
        %1600 = vst.msk [vmem:[#allocation5 + $0x38] sm:$0xff] %vm1014, %v1592
        %1609 = vrot.lane.b32.xlu0 %v1342, 126
        %v1610 = vpop.permute.xlu0 %1609
        %1611 = vrot.lane.b32.xlu0 %v1345, 126
        %v1612 = vpop.permute.xlu0 %1611
        %1613 = vrot.lane.b32.xlu0 %v1350, 126
        %v1614 = vpop.permute.xlu0 %1613
        %1615 = vrot.lane.b32.xlu0 %v1353, 126
        %v1616 = vpop.permute.xlu0 %1615
        %1617 = vrot.lane.b32.xlu0 %v1358, 126
        %v1618 = vpop.permute.xlu0 %1617
        %1619 = vrot.lane.b32.xlu0 %v1361, 126
        %v1620 = vpop.permute.xlu0 %1619
        %1621 = vrot.lane.b32.xlu0 %v1366, 126
        %v1622 = vpop.permute.xlu0 %1621
        %1623 = vrot.lane.b32.xlu0 %v1369, 126
        %v1624 = vpop.permute.xlu0 %1623
        %vm1633 = vcmask 130048
        %1634 = vst.msk [vmem:[#allocation6] sm:$0xff] %vm1633, %v1610
        %1635 = vst.msk [vmem:[#allocation6 + $0x8] sm:$0xff] %vm1633, %v1612
        %1636 = vst.msk [vmem:[#allocation6 + $0x10] sm:$0xff] %vm1633, %v1614
        %1637 = vst.msk [vmem:[#allocation6 + $0x18] sm:$0xff] %vm1633, %v1616
        %1638 = vst.msk [vmem:[#allocation6 + $0x20] sm:$0xff] %vm1633, %v1618
        %1639 = vst.msk [vmem:[#allocation6 + $0x28] sm:$0xff] %vm1633, %v1620
        %1640 = vst.msk [vmem:[#allocation6 + $0x30] sm:$0xff] %vm1633, %v1622
        %1641 = vst.msk [vmem:[#allocation6 + $0x38] sm:$0xff] %vm1633, %v1624
        %1642 = vrot.lane.b32.xlu0 %v1342, 110
        %v1643 = vpop.permute.xlu0 %1642
        %1644 = vrot.lane.b32.xlu0 %v1345, 110
        %v1645 = vpop.permute.xlu0 %1644
        %1646 = vrot.lane.b32.xlu0 %v1350, 110
        %v1647 = vpop.permute.xlu0 %1646
        %1648 = vrot.lane.b32.xlu0 %v1353, 110
        %v1649 = vpop.permute.xlu0 %1648
        %1650 = vrot.lane.b32.xlu0 %v1358, 110
        %v1651 = vpop.permute.xlu0 %1650
        %1652 = vrot.lane.b32.xlu0 %v1361, 110
        %v1653 = vpop.permute.xlu0 %1652
        %1654 = vrot.lane.b32.xlu0 %v1366, 110
        %v1655 = vpop.permute.xlu0 %1654
        %1656 = vrot.lane.b32.xlu0 %v1369, 110
        %v1657 = vpop.permute.xlu0 %1656
        %1666 = vst.msk [vmem:[#allocation7] sm:$0xff] %vm1633, %v1643
        %1667 = vst.msk [vmem:[#allocation7 + $0x8] sm:$0xff] %vm1633, %v1645
        %1668 = vst.msk [vmem:[#allocation7 + $0x10] sm:$0xff] %vm1633, %v1647
        %1669 = vst.msk [vmem:[#allocation7 + $0x18] sm:$0xff] %vm1633, %v1649
        %1670 = vst.msk [vmem:[#allocation7 + $0x20] sm:$0xff] %vm1633, %v1651
        %1671 = vst.msk [vmem:[#allocation7 + $0x28] sm:$0xff] %vm1633, %v1653
        %1672 = vst.msk [vmem:[#allocation7 + $0x30] sm:$0xff] %vm1633, %v1655
        %1673 = vst.msk [vmem:[#allocation7 + $0x38] sm:$0xff] %vm1633, %v1657
        %v1674 = vld [vmem:[#allocation26] sm:$0xff]
        %v1675 = vld [vmem:[#allocation26 + $0x8] sm:$0xff]
        %v1676 = vld [vmem:[#allocation2] sm:$0xff]
        %v1677 = vld [vmem:[#allocation2 + $0x8] sm:$0xff]
        loop: start=0, step=1, limit=8
        $region129: #{mamba_model_forward.3} parent=71 // loop_pre_header
          _
        $region130: #{mamba_model_forward.3} parent=71 // loop_header
          %s1679 = sphi 0, %s1683
          %p1680 = scmp.ge.s32.totalorder %s1679, 8
          %v1684 = vphi %v1676, %v2106
          %v1685 = vphi %v1677, %v2107
        $region131: #{mamba_model_forward.3} parent=71 // loop_header_branch
          %1682 = sbr.rel (%p1680) target = $region135
        $region132: #{mamba_model_forward.3} parent=71 // loop_body
          %s1686 = smul.u32 %s1679, 8
          %s1687 = scalar_lea.vmem [#allocation4], %s1686
          %v1688 = vld [vmem:[%s1687] sm:$0xff]
          %s1689 = scalar_lea.vmem [#allocation5], %s1686
          %v1690 = vld [vmem:[%s1689] sm:$0xff]
          %s1691 = scalar_lea.vmem [#allocation6], %s1686
          %v1692 = vld [vmem:[%s1691] sm:$0xff]
          %v1693 = vlaneseq
          %v1694 = vshrl.u32 %v1693, 7
          %v1695 = vsub.s32 0, %v1694
          %v1696 = vrot.slane %v1692, %v1695
          %1698 = vbcast.lane.b32.xlu0 %v1696, 256
          %v1699 = vpop.permute.xlu0 %1698
          %s1701 = sor.u32 256, 8
          %1702 = vbcast.lane.b32.xlu0 %v1696, %s1701
          %v1703 = vpop.permute.xlu0 %1702
          %v1704 = vlaneseq
          %v1705 = vshrl.u32 %v1704, 7
          %v1706 = vsub.s32 1, %v1705
          %v1707 = vrot.slane %v1692, %v1706
          %1709 = vbcast.lane.b32.xlu0 %v1707, 256
          %v1710 = vpop.permute.xlu0 %1709
          %s1712 = sor.u32 256, 8
          %1713 = vbcast.lane.b32.xlu0 %v1707, %s1712
          %v1714 = vpop.permute.xlu0 %1713
          %v1715 = vlaneseq
          %v1716 = vshrl.u32 %v1715, 7
          %v1717 = vsub.s32 2, %v1716
          %v1718 = vrot.slane %v1692, %v1717
          %1720 = vbcast.lane.b32.xlu0 %v1718, 256
          %v1721 = vpop.permute.xlu0 %1720
          %s1723 = sor.u32 256, 8
          %1724 = vbcast.lane.b32.xlu0 %v1718, %s1723
          %v1725 = vpop.permute.xlu0 %1724
          %v1726 = vlaneseq
          %v1727 = vshrl.u32 %v1726, 7
          %v1728 = vsub.s32 3, %v1727
          %v1729 = vrot.slane %v1692, %v1728
          %1731 = vbcast.lane.b32.xlu0 %v1729, 256
          %v1732 = vpop.permute.xlu0 %1731
          %s1734 = sor.u32 256, 8
          %1735 = vbcast.lane.b32.xlu0 %v1729, %s1734
          %v1736 = vpop.permute.xlu0 %1735
          %v1737 = vlaneseq
          %v1738 = vshrl.u32 %v1737, 7
          %v1739 = vsub.s32 4, %v1738
          %v1740 = vrot.slane %v1692, %v1739
          %1742 = vbcast.lane.b32.xlu0 %v1740, 256
          %v1743 = vpop.permute.xlu0 %1742
          %s1745 = sor.u32 256, 8
          %1746 = vbcast.lane.b32.xlu0 %v1740, %s1745
          %v1747 = vpop.permute.xlu0 %1746
          %v1748 = vlaneseq
          %v1749 = vshrl.u32 %v1748, 7
          %v1750 = vsub.s32 5, %v1749
          %v1751 = vrot.slane %v1692, %v1750
          %1753 = vbcast.lane.b32.xlu0 %v1751, 256
          %v1754 = vpop.permute.xlu0 %1753
          %s1756 = sor.u32 256, 8
          %1757 = vbcast.lane.b32.xlu0 %v1751, %s1756
          %v1758 = vpop.permute.xlu0 %1757
          %v1759 = vlaneseq
          %v1760 = vshrl.u32 %v1759, 7
          %v1761 = vsub.s32 6, %v1760
          %v1762 = vrot.slane %v1692, %v1761
          %1764 = vbcast.lane.b32.xlu0 %v1762, 256
          %v1765 = vpop.permute.xlu0 %1764
          %s1767 = sor.u32 256, 8
          %1768 = vbcast.lane.b32.xlu0 %v1762, %s1767
          %v1769 = vpop.permute.xlu0 %1768
          %v1770 = vlaneseq
          %v1771 = vshrl.u32 %v1770, 7
          %v1772 = vsub.s32 7, %v1771
          %v1773 = vrot.slane %v1692, %v1772
          %1775 = vbcast.lane.b32.xlu0 %v1773, 256
          %v1776 = vpop.permute.xlu0 %1775
          %s1778 = sor.u32 256, 8
          %1779 = vbcast.lane.b32.xlu0 %v1773, %s1778
          %v1780 = vpop.permute.xlu0 %1779
          %s1781 = scalar_lea.vmem [#allocation7], %s1686
          %v1782 = vld [vmem:[%s1781] sm:$0xff]
          %v1783 = vlaneseq
          %v1784 = vshrl.u32 %v1783, 7
          %v1785 = vsub.s32 0, %v1784
          %v1786 = vrot.slane %v1782, %v1785
          %1788 = vbcast.lane.b32.xlu0 %v1786, 256
          %v1789 = vpop.permute.xlu0 %1788
          %s1791 = sor.u32 256, 8
          %1792 = vbcast.lane.b32.xlu0 %v1786, %s1791
          %v1793 = vpop.permute.xlu0 %1792
          %v1794 = vlaneseq
          %v1795 = vshrl.u32 %v1794, 7
          %v1796 = vsub.s32 1, %v1795
          %v1797 = vrot.slane %v1782, %v1796
          %1799 = vbcast.lane.b32.xlu0 %v1797, 256
          %v1800 = vpop.permute.xlu0 %1799
          %s1802 = sor.u32 256, 8
          %1803 = vbcast.lane.b32.xlu0 %v1797, %s1802
          %v1804 = vpop.permute.xlu0 %1803
          %v1805 = vlaneseq
          %v1806 = vshrl.u32 %v1805, 7
          %v1807 = vsub.s32 2, %v1806
          %v1808 = vrot.slane %v1782, %v1807
          %1810 = vbcast.lane.b32.xlu0 %v1808, 256
          %v1811 = vpop.permute.xlu0 %1810
          %s1813 = sor.u32 256, 8
          %1814 = vbcast.lane.b32.xlu0 %v1808, %s1813
          %v1815 = vpop.permute.xlu0 %1814
          %v1816 = vlaneseq
          %v1817 = vshrl.u32 %v1816, 7
          %v1818 = vsub.s32 3, %v1817
          %v1819 = vrot.slane %v1782, %v1818
          %1821 = vbcast.lane.b32.xlu0 %v1819, 256
          %v1822 = vpop.permute.xlu0 %1821
          %s1824 = sor.u32 256, 8
          %1825 = vbcast.lane.b32.xlu0 %v1819, %s1824
          %v1826 = vpop.permute.xlu0 %1825
          %v1827 = vlaneseq
          %v1828 = vshrl.u32 %v1827, 7
          %v1829 = vsub.s32 4, %v1828
          %v1830 = vrot.slane %v1782, %v1829
          %1832 = vbcast.lane.b32.xlu0 %v1830, 256
          %v1833 = vpop.permute.xlu0 %1832
          %s1835 = sor.u32 256, 8
          %1836 = vbcast.lane.b32.xlu0 %v1830, %s1835
          %v1837 = vpop.permute.xlu0 %1836
          %v1838 = vlaneseq
          %v1839 = vshrl.u32 %v1838, 7
          %v1840 = vsub.s32 5, %v1839
          %v1841 = vrot.slane %v1782, %v1840
          %1843 = vbcast.lane.b32.xlu0 %v1841, 256
          %v1844 = vpop.permute.xlu0 %1843
          %s1846 = sor.u32 256, 8
          %1847 = vbcast.lane.b32.xlu0 %v1841, %s1846
          %v1848 = vpop.permute.xlu0 %1847
          %v1849 = vlaneseq
          %v1850 = vshrl.u32 %v1849, 7
          %v1851 = vsub.s32 6, %v1850
          %v1852 = vrot.slane %v1782, %v1851
          %1854 = vbcast.lane.b32.xlu0 %v1852, 256
          %v1855 = vpop.permute.xlu0 %1854
          %s1857 = sor.u32 256, 8
          %1858 = vbcast.lane.b32.xlu0 %v1852, %s1857
          %v1859 = vpop.permute.xlu0 %1858
          %v1860 = vlaneseq
          %v1861 = vshrl.u32 %v1860, 7
          %v1862 = vsub.s32 7, %v1861
          %v1863 = vrot.slane %v1782, %v1862
          %1865 = vbcast.lane.b32.xlu0 %v1863, 256
          %v1866 = vpop.permute.xlu0 %1865
          %s1868 = sor.u32 256, 8
          %1869 = vbcast.lane.b32.xlu0 %v1863, %s1868
          %v1870 = vpop.permute.xlu0 %1869
          %v1871 = vlaneseq
          %v1872 = vshrl.u32 %v1871, 7
          %v1873 = vsub.s32 0, %v1872
          %v1874 = vrot.slane %v1688, %v1873
          %v1875 = vmul.f32 %v1874, %v1674
          %v1876 = vmul.f32 %v1874, %v1675
          %v1877 = vmul.f32 %v1875, 1.442695
          %v1878 = vpow.pop %v1877
          %v1879 = vmul.f32 %v1876, 1.442695
          %v1880 = vpow.pop %v1879
          %v1881 = vmul.f32 %v1878, %v1684
          %v1882 = vmul.f32 %v1880, %v1685
          %v1883 = vlaneseq
          %v1884 = vshrl.u32 %v1883, 7
          %v1885 = vsub.s32 0, %v1884
          %v1886 = vrot.slane %v1690, %v1885
          %v1887 = vmul.f32 %v1699, %v1886
          %v1888 = vmul.f32 %v1703, %v1886
          %v1889 = vadd.f32 %v1881, %v1887
          %v1890 = vadd.f32 %v1882, %v1888
          %v1891 = vmul.f32 %v1789, %v1889
          %v1892 = vmul.f32 %v1793, %v1890
          %v1893 = vsel %vm1014, %v1891, 0.0
          %v1894 = vsel %vm1014, %v1892, 0.0
          %v1895 = vadd.f32 %v1893, %v1894
          %v1896 = vrot.slane %v1895, 4
          %v1897 = vadd.f32 %v1895, %v1896
          %v1898 = vrot.slane %v1897, 2
          %v1899 = vadd.f32 %v1897, %v1898
          %v1900 = vrot.slane %v1899, 1
          %v1901 = vadd.f32 %v1899, %v1900
          %v1902 = vlaneseq
          %v1903 = vshrl.u32 %v1902, 7
          %v1904 = vsub.s32 1, %v1903
          %v1905 = vrot.slane %v1688, %v1904
          %v1906 = vmul.f32 %v1905, %v1674
          %v1907 = vmul.f32 %v1905, %v1675
          %v1908 = vmul.f32 %v1906, 1.442695
          %v1909 = vpow.pop %v1908
          %v1910 = vmul.f32 %v1907, 1.442695
          %v1911 = vpow.pop %v1910
          %v1912 = vmul.f32 %v1909, %v1889
          %v1913 = vmul.f32 %v1911, %v1890
          %v1914 = vlaneseq
          %v1915 = vshrl.u32 %v1914, 7
          %v1916 = vsub.s32 1, %v1915
          %v1917 = vrot.slane %v1690, %v1916
          %v1918 = vmul.f32 %v1710, %v1917
          %v1919 = vmul.f32 %v1714, %v1917
          %v1920 = vadd.f32 %v1912, %v1918
          %v1921 = vadd.f32 %v1913, %v1919
          %v1922 = vmul.f32 %v1800, %v1920
          %v1923 = vmul.f32 %v1804, %v1921
          %v1924 = vsel %vm1014, %v1922, 0.0
          %v1925 = vsel %vm1014, %v1923, 0.0
          %v1926 = vadd.f32 %v1924, %v1925
          %v1927 = vrot.slane %v1926, 4
          %v1928 = vadd.f32 %v1926, %v1927
          %v1929 = vrot.slane %v1928, 2
          %v1930 = vadd.f32 %v1928, %v1929
          %v1931 = vrot.slane %v1930, 1
          %v1932 = vadd.f32 %v1930, %v1931
          %v1933 = vlaneseq
          %v1934 = vshrl.u32 %v1933, 7
          %v1935 = vsub.s32 2, %v1934
          %v1936 = vrot.slane %v1688, %v1935
          %v1937 = vmul.f32 %v1936, %v1674
          %v1938 = vmul.f32 %v1936, %v1675
          %v1939 = vmul.f32 %v1937, 1.442695
          %v1940 = vpow.pop %v1939
          %v1941 = vmul.f32 %v1938, 1.442695
          %v1942 = vpow.pop %v1941
          %v1943 = vmul.f32 %v1940, %v1920
          %v1944 = vmul.f32 %v1942, %v1921
          %v1945 = vlaneseq
          %v1946 = vshrl.u32 %v1945, 7
          %v1947 = vsub.s32 2, %v1946
          %v1948 = vrot.slane %v1690, %v1947
          %v1949 = vmul.f32 %v1721, %v1948
          %v1950 = vmul.f32 %v1725, %v1948
          %v1951 = vadd.f32 %v1943, %v1949
          %v1952 = vadd.f32 %v1944, %v1950
          %v1953 = vmul.f32 %v1811, %v1951
          %v1954 = vmul.f32 %v1815, %v1952
          %v1955 = vsel %vm1014, %v1953, 0.0
          %v1956 = vsel %vm1014, %v1954, 0.0
          %v1957 = vadd.f32 %v1955, %v1956
          %v1958 = vrot.slane %v1957, 4
          %v1959 = vadd.f32 %v1957, %v1958
          %v1960 = vrot.slane %v1959, 2
          %v1961 = vadd.f32 %v1959, %v1960
          %v1962 = vrot.slane %v1961, 1
          %v1963 = vadd.f32 %v1961, %v1962
          %v1964 = vlaneseq
          %v1965 = vshrl.u32 %v1964, 7
          %v1966 = vsub.s32 3, %v1965
          %v1967 = vrot.slane %v1688, %v1966
          %v1968 = vmul.f32 %v1967, %v1674
          %v1969 = vmul.f32 %v1967, %v1675
          %v1970 = vmul.f32 %v1968, 1.442695
          %v1971 = vpow.pop %v1970
          %v1972 = vmul.f32 %v1969, 1.442695
          %v1973 = vpow.pop %v1972
          %v1974 = vmul.f32 %v1971, %v1951
          %v1975 = vmul.f32 %v1973, %v1952
          %v1976 = vlaneseq
          %v1977 = vshrl.u32 %v1976, 7
          %v1978 = vsub.s32 3, %v1977
          %v1979 = vrot.slane %v1690, %v1978
          %v1980 = vmul.f32 %v1732, %v1979
          %v1981 = vmul.f32 %v1736, %v1979
          %v1982 = vadd.f32 %v1974, %v1980
          %v1983 = vadd.f32 %v1975, %v1981
          %v1984 = vmul.f32 %v1822, %v1982
          %v1985 = vmul.f32 %v1826, %v1983
          %v1986 = vsel %vm1014, %v1984, 0.0
          %v1987 = vsel %vm1014, %v1985, 0.0
          %v1988 = vadd.f32 %v1986, %v1987
          %v1989 = vrot.slane %v1988, 4
          %v1990 = vadd.f32 %v1988, %v1989
          %v1991 = vrot.slane %v1990, 2
          %v1992 = vadd.f32 %v1990, %v1991
          %v1993 = vrot.slane %v1992, 1
          %v1994 = vadd.f32 %v1992, %v1993
          %v1995 = vlaneseq
          %v1996 = vshrl.u32 %v1995, 7
          %v1997 = vsub.s32 4, %v1996
          %v1998 = vrot.slane %v1688, %v1997
          %v1999 = vmul.f32 %v1998, %v1674
          %v2000 = vmul.f32 %v1998, %v1675
          %v2001 = vmul.f32 %v1999, 1.442695
          %v2002 = vpow.pop %v2001
          %v2003 = vmul.f32 %v2000, 1.442695
          %v2004 = vpow.pop %v2003
          %v2005 = vmul.f32 %v2002, %v1982
          %v2006 = vmul.f32 %v2004, %v1983
          %v2007 = vlaneseq
          %v2008 = vshrl.u32 %v2007, 7
          %v2009 = vsub.s32 4, %v2008
          %v2010 = vrot.slane %v1690, %v2009
          %v2011 = vmul.f32 %v1743, %v2010
          %v2012 = vmul.f32 %v1747, %v2010
          %v2013 = vadd.f32 %v2005, %v2011
          %v2014 = vadd.f32 %v2006, %v2012
          %v2015 = vmul.f32 %v1833, %v2013
          %v2016 = vmul.f32 %v1837, %v2014
          %v2017 = vsel %vm1014, %v2015, 0.0
          %v2018 = vsel %vm1014, %v2016, 0.0
          %v2019 = vadd.f32 %v2017, %v2018
          %v2020 = vrot.slane %v2019, 4
          %v2021 = vadd.f32 %v2019, %v2020
          %v2022 = vrot.slane %v2021, 2
          %v2023 = vadd.f32 %v2021, %v2022
          %v2024 = vrot.slane %v2023, 1
          %v2025 = vadd.f32 %v2023, %v2024
          %v2026 = vlaneseq
          %v2027 = vshrl.u32 %v2026, 7
          %v2028 = vsub.s32 5, %v2027
          %v2029 = vrot.slane %v1688, %v2028
          %v2030 = vmul.f32 %v2029, %v1674
          %v2031 = vmul.f32 %v2029, %v1675
          %v2032 = vmul.f32 %v2030, 1.442695
          %v2033 = vpow.pop %v2032
          %v2034 = vmul.f32 %v2031, 1.442695
          %v2035 = vpow.pop %v2034
          %v2036 = vmul.f32 %v2033, %v2013
          %v2037 = vmul.f32 %v2035, %v2014
          %v2038 = vlaneseq
          %v2039 = vshrl.u32 %v2038, 7
          %v2040 = vsub.s32 5, %v2039
          %v2041 = vrot.slane %v1690, %v2040
          %v2042 = vmul.f32 %v1754, %v2041
          %v2043 = vmul.f32 %v1758, %v2041
          %v2044 = vadd.f32 %v2036, %v2042
          %v2045 = vadd.f32 %v2037, %v2043
          %v2046 = vmul.f32 %v1844, %v2044
          %v2047 = vmul.f32 %v1848, %v2045
          %v2048 = vsel %vm1014, %v2046, 0.0
          %v2049 = vsel %vm1014, %v2047, 0.0
          %v2050 = vadd.f32 %v2048, %v2049
          %v2051 = vrot.slane %v2050, 4
          %v2052 = vadd.f32 %v2050, %v2051
          %v2053 = vrot.slane %v2052, 2
          %v2054 = vadd.f32 %v2052, %v2053
          %v2055 = vrot.slane %v2054, 1
          %v2056 = vadd.f32 %v2054, %v2055
          %v2057 = vlaneseq
          %v2058 = vshrl.u32 %v2057, 7
          %v2059 = vsub.s32 6, %v2058
          %v2060 = vrot.slane %v1688, %v2059
          %v2061 = vmul.f32 %v2060, %v1674
          %v2062 = vmul.f32 %v2060, %v1675
          %v2063 = vmul.f32 %v2061, 1.442695
          %v2064 = vpow.pop %v2063
          %v2065 = vmul.f32 %v2062, 1.442695
          %v2066 = vpow.pop %v2065
          %v2067 = vmul.f32 %v2064, %v2044
          %v2068 = vmul.f32 %v2066, %v2045
          %v2069 = vlaneseq
          %v2070 = vshrl.u32 %v2069, 7
          %v2071 = vsub.s32 6, %v2070
          %v2072 = vrot.slane %v1690, %v2071
          %v2073 = vmul.f32 %v1765, %v2072
          %v2074 = vmul.f32 %v1769, %v2072
          %v2075 = vadd.f32 %v2067, %v2073
          %v2076 = vadd.f32 %v2068, %v2074
          %v2077 = vmul.f32 %v1855, %v2075
          %v2078 = vmul.f32 %v1859, %v2076
          %v2079 = vsel %vm1014, %v2077, 0.0
          %v2080 = vsel %vm1014, %v2078, 0.0
          %v2081 = vadd.f32 %v2079, %v2080
          %v2082 = vrot.slane %v2081, 4
          %v2083 = vadd.f32 %v2081, %v2082
          %v2084 = vrot.slane %v2083, 2
          %v2085 = vadd.f32 %v2083, %v2084
          %v2086 = vrot.slane %v2085, 1
          %v2087 = vadd.f32 %v2085, %v2086
          %v2088 = vlaneseq
          %v2089 = vshrl.u32 %v2088, 7
          %v2090 = vsub.s32 7, %v2089
          %v2091 = vrot.slane %v1688, %v2090
          %v2092 = vmul.f32 %v2091, %v1674
          %v2093 = vmul.f32 %v2091, %v1675
          %v2094 = vmul.f32 %v2092, 1.442695
          %v2095 = vpow.pop %v2094
          %v2096 = vmul.f32 %v2093, 1.442695
          %v2097 = vpow.pop %v2096
          %v2098 = vmul.f32 %v2095, %v2075
          %v2099 = vmul.f32 %v2097, %v2076
          %v2100 = vlaneseq
          %v2101 = vshrl.u32 %v2100, 7
          %v2102 = vsub.s32 7, %v2101
          %v2103 = vrot.slane %v1690, %v2102
          %v2104 = vmul.f32 %v1776, %v2103
          %v2105 = vmul.f32 %v1780, %v2103
          %v2106 = vadd.f32 %v2098, %v2104
          %v2107 = vadd.f32 %v2099, %v2105
          %v2108 = vmul.f32 %v1866, %v2106
          %v2109 = vmul.f32 %v1870, %v2107
          %v2110 = vsel %vm1014, %v2108, 0.0
          %v2111 = vsel %vm1014, %v2109, 0.0
          %v2112 = vadd.f32 %v2110, %v2111
          %v2113 = vrot.slane %v2112, 4
          %v2114 = vadd.f32 %v2112, %v2113
          %v2115 = vrot.slane %v2114, 2
          %v2116 = vadd.f32 %v2114, %v2115
          %v2117 = vrot.slane %v2116, 1
          %v2118 = vadd.f32 %v2116, %v2117
          %v2119 = vsel %vm1065, %v1901, %v1932
          %v2120 = vsel %vm1121, %v2119, %v1963
          %v2121 = vsel %vm1177, %v2120, %v1994
          %vm2122 = vcmask 1043456
          %v2123 = vsel %vm2122, %v2121, %v2025
          %vm2124 = vcmask 1044480
          %v2125 = vsel %vm2124, %v2123, %v2056
          %vm2126 = vcmask 1045504
          %v2127 = vsel %vm2126, %v2125, %v2087
          %vm2128 = vcmask 1046528
          %v2129 = vsel %vm2128, %v2127, %v2118
          %s2130 = scalar_lea.vmem [#allocation8], %s1686
          %2131 = vst.msk [vmem:[%s2130] sm:$0xff] %vm1014, %v2129
        $region133: #{mamba_model_forward.3} parent=71 // loop_footer
          %s1683 = sadd.s32 1, %s1679
        $region134: #{mamba_model_forward.3} parent=71 // loop_footer_branch
          %1678 = sbr.rel target = $region130
        $region135: #{mamba_model_forward.3} parent=71 // loop_exit
          _
        %2132 = vst.msk [vmem:[#allocation2] sm:$0xff] %vm1014, %v1684
        %2133 = vst.msk [vmem:[#allocation2 + $0x8] sm:$0xff] %vm1014, %v1685
        %v2134 = vld [vmem:[#allocation8] sm:$0xff]
        %v2135 = vld [vmem:[#allocation8 + $0x8] sm:$0xff]
        %v2136 = vld [vmem:[#allocation8 + $0x10] sm:$0xff]
        %v2137 = vld [vmem:[#allocation8 + $0x18] sm:$0xff]
        %v2138 = vld [vmem:[#allocation8 + $0x20] sm:$0xff]
        %v2139 = vld [vmem:[#allocation8 + $0x28] sm:$0xff]
        %v2140 = vld [vmem:[#allocation8 + $0x30] sm:$0xff]
        %v2141 = vld [vmem:[#allocation8 + $0x38] sm:$0xff]
        %v2142 = vld [vmem:[#allocation27] sm:$0x1]
        %v2144 = vlaneseq
        %v2145 = vshrl.u32 %v2144, 7
        %v2146 = vsub.s32 0, %v2145
        %v2147 = vrot.slane %v2142, %v2146
        %v2149 = vmul.f32 %v1251, %v2147
        %v2150 = vmul.f32 %v1252, %v2147
        %v2151 = vmul.f32 %v1253, %v2147
        %v2152 = vmul.f32 %v1254, %v2147
        %v2153 = vmul.f32 %v1255, %v2147
        %v2154 = vmul.f32 %v1256, %v2147
        %v2155 = vmul.f32 %v1257, %v2147
        %v2156 = vmul.f32 %v1258, %v2147
        %v2157 = vadd.f32 %v2134, %v2149
        %v2158 = vadd.f32 %v2135, %v2150
        %v2159 = vadd.f32 %v2136, %v2151
        %v2160 = vadd.f32 %v2137, %v2152
        %v2161 = vadd.f32 %v2138, %v2153
        %v2162 = vadd.f32 %v2139, %v2154
        %v2163 = vadd.f32 %v2140, %v2155
        %v2164 = vadd.f32 %v2141, %v2156
        %v2165 = vsub.f32 0.0, %v982
        %v2166 = vsub.f32 0.0, %v985
        %v2167 = vsub.f32 0.0, %v990
        %v2168 = vsub.f32 0.0, %v993
        %v2169 = vsub.f32 0.0, %v998
        %v2170 = vsub.f32 0.0, %v1001
        %v2171 = vsub.f32 0.0, %v1006
        %v2172 = vsub.f32 0.0, %v1009
        %v2173 = vmul.f32 %v2165, 1.442695
        %v2174 = vpow.pop %v2173
        %v2175 = vmul.f32 %v2166, 1.442695
        %v2176 = vpow.pop %v2175
        %v2177 = vmul.f32 %v2167, 1.442695
        %v2178 = vpow.pop %v2177
        %v2179 = vmul.f32 %v2168, 1.442695
        %v2180 = vpow.pop %v2179
        %v2181 = vmul.f32 %v2169, 1.442695
        %v2182 = vpow.pop %v2181
        %v2183 = vmul.f32 %v2170, 1.442695
        %v2184 = vpow.pop %v2183
        %v2185 = vmul.f32 %v2171, 1.442695
        %v2186 = vpow.pop %v2185
        %v2187 = vmul.f32 %v2172, 1.442695
        %v2188 = vpow.pop %v2187
        %v2189 = vadd.f32 %v2174, 1.0
        %v2190 = vadd.f32 %v2176, 1.0
        %v2191 = vadd.f32 %v2178, 1.0
        %v2192 = vadd.f32 %v2180, 1.0
        %v2193 = vadd.f32 %v2182, 1.0
        %v2194 = vadd.f32 %v2184, 1.0
        %v2195 = vadd.f32 %v2186, 1.0
        %v2196 = vadd.f32 %v2188, 1.0
        %v2197 = vrcp.pop %v2189
        %v2198 = vrcp.pop %v2190
        %v2199 = vrcp.pop %v2191
        %v2200 = vrcp.pop %v2192
        %v2201 = vrcp.pop %v2193
        %v2202 = vrcp.pop %v2194
        %v2203 = vrcp.pop %v2195
        %v2204 = vrcp.pop %v2196
        %v2205 = vmul.f32 %v982, %v2197
        %v2206 = vmul.f32 %v985, %v2198
        %v2207 = vmul.f32 %v990, %v2199
        %v2208 = vmul.f32 %v993, %v2200
        %v2209 = vmul.f32 %v998, %v2201
        %v2210 = vmul.f32 %v1001, %v2202
        %v2211 = vmul.f32 %v1006, %v2203
        %v2212 = vmul.f32 %v1009, %v2204
        %v2213 = vmul.f32 %v2157, %v2205
        %v2214 = vmul.f32 %v2158, %v2206
        %v2215 = vmul.f32 %v2159, %v2207
        %v2216 = vmul.f32 %v2160, %v2208
        %v2217 = vmul.f32 %v2161, %v2209
        %v2218 = vmul.f32 %v2162, %v2210
        %v2219 = vmul.f32 %v2163, %v2211
        %v2220 = vmul.f32 %v2164, %v2212
        %v2221 = vpack.c.bf16 %v2214, %v2213
        %v2222 = vpack.c.bf16 %v2216, %v2215
        %v2223 = vpack.c.bf16 %v2218, %v2217
        %v2224 = vpack.c.bf16 %v2220, %v2219
        %v2225 = vld [vmem:[#allocation29] sm:$0xf]
        %v2226 = vld [vmem:[#allocation29 + $0x4] sm:$0xf]
        %v2227 = vld [vmem:[#allocation29 + $0x8] sm:$0xf]
        %v2228 = vld [vmem:[#allocation29 + $0xc] sm:$0xf]
        %v2229 = vld [vmem:[#allocation29 + $0x10] sm:$0xf]
        %v2230 = vld [vmem:[#allocation29 + $0x14] sm:$0xf]
        %v2231 = vld [vmem:[#allocation29 + $0x18] sm:$0xf]
        %v2232 = vld [vmem:[#allocation29 + $0x1c] sm:$0xf]
        %v2241 = vunpack.c.l.b16 %v2225
        %v2242 = vunpack.c.l.b16 %v2226
        %v2243 = vunpack.c.l.b16 %v2227
        %v2244 = vunpack.c.l.b16 %v2228
        %v2245 = vunpack.c.l.b16 %v2229
        %v2246 = vunpack.c.l.b16 %v2230
        %v2247 = vunpack.c.l.b16 %v2231
        %v2248 = vunpack.c.l.b16 %v2232
        %v2249 = vpack.c.b16 %v2242, %v2241
        %v2250 = vpack.c.b16 %v2244, %v2243
        %v2251 = vpack.c.b16 %v2246, %v2245
        %v2252 = vpack.c.b16 %v2248, %v2247
        %v2258 = vsel %vm1014, %v2221, 0
        %v2261 = vsel %vm1014, %v2222, 0
        %v2264 = vsel %vm1014, %v2223, 0
        %v2267 = vsel %vm1014, %v2224, 0
        %2269 = vmatprep.subr.bf16.mxu0 0
        %2270 = vmatpush1.bf16.msra.mxu0 %v2249
        %2271 = vmatprep.subr.bf16.mxu0 0
        %2272 = vmatpush1.bf16.msra.mxu0 %v2250
        %2273 = vmatprep.subr.bf16.mxu0 0
        %2274 = vmatpush1.bf16.msra.mxu0 %v2251
        %2275 = vmatprep.subr.bf16.mxu0 0
        %2276 = vmatpush1.bf16.msra.mxu0 %v2252
        %2277 = vmatprep.subr.bf16.mxu0 0
        %2278 = vmatpush1.bf16.msra.mxu0 0
        %2279 = vmatprep.subr.bf16.mxu0 0
        %2280 = vmatpush1.bf16.msra.mxu0 0
        %2281 = vmatprep.subr.bf16.mxu0 0
        %2282 = vmatpush1.bf16.msra.mxu0 0
        %2283 = vmatprep.subr.bf16.mxu0 0
        %2284 = vmatpush1.bf16.msra.mxu0 0
        %2285 = vmatprep.subr.bf16.mxu0 0
        %2286 = vmatpush1.bf16.msra.mxu0 0
        %2287 = vmatprep.subr.bf16.mxu0 0
        %2288 = vmatpush1.bf16.msra.mxu0 0
        %2289 = vmatprep.subr.bf16.mxu0 0
        %2290 = vmatpush1.bf16.msra.mxu0 0
        %2291 = vmatprep.subr.bf16.mxu0 0
        %2292 = vmatpush1.bf16.msra.mxu0 0
        %2293 = vmatprep.subr.bf16.mxu0 0
        %2294 = vmatpush1.bf16.msra.mxu0 0
        %2295 = vmatprep.subr.bf16.mxu0 0
        %2296 = vmatpush1.bf16.msra.mxu0 0
        %2297 = vmatprep.subr.bf16.mxu0 0
        %2298 = vmatpush1.bf16.msra.mxu0 0
        %2299 = vmatprep.subr.bf16.mxu0 0
        %2300 = vmatpush1.bf16.msra.mxu0 0
        %2301 = vmatprep.mubr.bf16.mxu0 0
        %2302 = vmatmul.mubr.bf16.gmra.mrb[0].mxu0 %v2258
        %v2303 = vpop.f32.mrb[0].mxu0
        %v2304 = vadd.f32 0.0, %v2303
        %v2305 = vpop.f32.mrb[0].mxu0
        %v2306 = vpop.f32.mrb[0].mxu0
        %v2307 = vadd.f32 0.0, %v2306
        %v2308 = vpop.f32.mrb[0].mxu0
        %2309 = vmatprep.mubr.bf16.mxu0 0
        %2310 = vmatmul.mubr.bf16.gmra.mrb[0].mxu0 %v2261
        %v2311 = vpop.f32.mrb[0].mxu0
        %v2312 = vadd.f32 0.0, %v2311
        %v2313 = vpop.f32.mrb[0].mxu0
        %v2314 = vpop.f32.mrb[0].mxu0
        %v2315 = vadd.f32 0.0, %v2314
        %v2316 = vpop.f32.mrb[0].mxu0
        %2317 = vmatprep.mubr.bf16.mxu0 0
        %2318 = vmatmul.mubr.bf16.gmra.mrb[0].mxu0 %v2264
        %v2319 = vpop.f32.mrb[0].mxu0
        %v2320 = vadd.f32 0.0, %v2319
        %v2321 = vpop.f32.mrb[0].mxu0
        %v2322 = vpop.f32.mrb[0].mxu0
        %v2323 = vadd.f32 0.0, %v2322
        %v2324 = vpop.f32.mrb[0].mxu0
        %2325 = vmatprep.mubr.bf16.mxu0 0
        %2326 = vmatmul.mubr.bf16.gmra.mrb[0].mxu0 %v2267
        %v2327 = vpop.f32.mrb[0].mxu0
        %v2328 = vadd.f32 0.0, %v2327
        %v2329 = vpop.f32.mrb[0].mxu0
        %v2330 = vpop.f32.mrb[0].mxu0
        %v2331 = vadd.f32 0.0, %v2330
        %v2332 = vpop.f32.mrb[0].mxu0
        %2333 = vdwg.mxu0
        %2334 = vst.msk [vmem:[%s700] sm:$0xff] %vm745, %v2304
        %2335 = vst.msk [vmem:[%s700 + $0x8] sm:$0xff] %vm745, %v2307
        %2336 = vst.msk [vmem:[%s700 + $0x10] sm:$0xff] %vm745, %v2312
        %2337 = vst.msk [vmem:[%s700 + $0x18] sm:$0xff] %vm745, %v2315
        %2338 = vst.msk [vmem:[%s700 + $0x20] sm:$0xff] %vm745, %v2320
        %2339 = vst.msk [vmem:[%s700 + $0x28] sm:$0xff] %vm745, %v2323
        %2340 = vst.msk [vmem:[%s700 + $0x30] sm:$0xff] %vm745, %v2328
        %2341 = vst.msk [vmem:[%s700 + $0x38] sm:$0xff] %vm745, %v2331
        %s2342 = sand.u32 %s352, 1
        %s2343 = scalar_lea.sflag [#allocation11], %s2342
        %s2344 = sand.u32 %s352, 1
        %s2345 = smul.addr %s2344, 64
        %s2346 = scalar_lea.vmem [#allocation30], %s2345
        %s2347 = sand.u32 %s380, 1
        %s2348 = scalar_lea.sflag [#allocation32], %s2347
        %s2349 = sand.u32 %s380, 1
        %s2350 = smul.addr %s2349, 64
        %s2351 = scalar_lea.vmem [#allocation31], %s2350
        // Predicated region
        $region136: #{mamba_model_forward.3} parent=71 // pred_check
          %p2352 = pneg %p362
        $region137: #{mamba_model_forward.3} parent=71 // pred_check_branch
          %2354 = sbr.rel (%p2352) target = $region139
        $region138: #{mamba_model_forward.3} parent=71 // pred_region
          %s2355 = smul.u32 8, %s48
          %s2357 = ssub.s32 1024, 1024
          %2358 = vsyncadd %s2343, %s2357
          %s2359 = smul.addr %s47, 16
          %s2360 = sadd.s32 %s2355, %s2359
          %s2361 = smul.addr %s2360, 128
          %s2362 = scalar_lea.hbm %s13, %s2361
          %s2363 = sshll.u32 %s2346, 4
          %s2364 = int_to_ptr.vmem [resolvable:$true] %s2363
          %2369 = dma.vmem_to_hbm [thread:$0]  %s2364, 1024, %s2362, %s2343, 128, 128, 8
        $region139: #{mamba_model_forward.3} parent=71 // pred_fallthru
          _
        // Predicated region
        $region140: #{mamba_model_forward.3} parent=71 // pred_check
          %p2370 = pneg %p390
        $region141: #{mamba_model_forward.3} parent=71 // pred_check_branch
          %2372 = sbr.rel (%p2370) target = $region143
        $region142: #{mamba_model_forward.3} parent=71 // pred_region
          %s2373 = smul.u32 8, %s48
          %s2375 = ssub.s32 1024, 1024
          %2376 = vsyncadd %s2348, %s2375
          %s2377 = smul.addr %s47, 16
          %s2378 = sadd.s32 %s2373, %s2377
          %s2379 = smul.addr %s2378, 128
          %s2380 = scalar_lea.hbm %s14, %s2379
          %s2381 = sshll.u32 %s2351, 4
          %s2382 = int_to_ptr.vmem [resolvable:$true] %s2381
          %2387 = dma.vmem_to_hbm [thread:$0]  %s2382, 1024, %s2380, %s2348, 128, 128, 8
        $region143: #{mamba_model_forward.3} parent=71 // pred_fallthru
          _
      $region72: #{mamba_model_forward.3} parent=5 // pred_fallthru
        _
      %p2388 = scmp.le.s32.totalorder 2, %s38
      // Predicated region
      $region144: #{mamba_model_forward.3} parent=5 // pred_check
        %p2389 = pneg %p2388
      $region145: #{mamba_model_forward.3} parent=5 // pred_check_branch
        %2391 = sbr.rel (%p2389) target = $region147
      $region146: #{mamba_model_forward.3} parent=5 // pred_region
        %s2392 = ssub.s32 %s38, 2
        // Predicated region
        $region148: #{mamba_model_forward.3} parent=146 // pred_check
          %p2393 = pneg %p368
        $region149: #{mamba_model_forward.3} parent=146 // pred_check_branch
          %2395 = sbr.rel (%p2393) target = $region151
        $region150: #{mamba_model_forward.3} parent=146 // pred_region
          %s2396 = sand.u32 %s353, 1
          %s2397 = scalar_lea.sflag [#allocation11], %s2396
          %s2398 = sand.u32 %s353, 1
          %s2399 = smul.addr %s2398, 64
          %s2400 = scalar_lea.vmem [#allocation30], %s2399
          %2401 = dma.done %s2397, 1024
        $region151: #{mamba_model_forward.3} parent=146 // pred_fallthru
          _
        // Predicated region
        $region152: #{mamba_model_forward.3} parent=146 // pred_check
          %p2402 = pneg %p396
        $region153: #{mamba_model_forward.3} parent=146 // pred_check_branch
          %2404 = sbr.rel (%p2402) target = $region155
        $region154: #{mamba_model_forward.3} parent=146 // pred_region
          %s2405 = sand.u32 %s381, 1
          %s2406 = scalar_lea.sflag [#allocation32], %s2405
          %s2407 = sand.u32 %s381, 1
          %s2408 = smul.addr %s2407, 64
          %s2409 = scalar_lea.vmem [#allocation31], %s2408
          %2410 = dma.done %s2406, 1024
        $region155: #{mamba_model_forward.3} parent=146 // pred_fallthru
          _
      $region147: #{mamba_model_forward.3} parent=5 // pred_fallthru
        _
    $region6: #{mamba_model_forward.3} parent=1 // loop_footer
      %s42 = sadd.s32 1, %s38
    $region7: #{mamba_model_forward.3} parent=1 // loop_footer_branch
      %37 = sbr.rel target = $region3
    $region8: #{mamba_model_forward.3} parent=1 // loop_exit
      _
    %2411 = vsyncpa [#allocation10], 1
    %s2412 = scalar_lea.sflag [#allocation10], 1
    %2413 = vsyncpa %s2412, 1
    %2414 = vsyncpa [#allocation13], 1
    %s2415 = scalar_lea.sflag [#allocation13], 1
    %2416 = vsyncpa %s2415, 1
    %2417 = vsyncpa [#allocation16], 1
    %2418 = vsyncpa [#allocation19], 1
    %2419 = vsyncpa [#allocation22], 1
    %2420 = vsyncpa [#allocation25], 1
    %2421 = vsyncpa [#allocation28], 1
    %2422 = vsyncpa [#allocation11], 1
    %s2423 = scalar_lea.sflag [#allocation11], 1
    %2424 = vsyncpa %s2423, 1
    %2425 = vsyncpa [#allocation32], 1
    %s2426 = scalar_lea.sflag [#allocation32], 1
    %2427 = vsyncpa %s2426, 1

</llo_original>
